<compile_context>
chip_gen: v7x
topology: tpu7x:2x2x1
jax: 0.10.0
libtpu: 0.0.40
codegen_flags: <defaults>
</compile_context>

<pallas_src>
import jax
import jax.numpy as jnp
from jax.experimental import pallas as pl
from jax.experimental.pallas import tpu as pltpu


def attn_sent_rnn_kernel(
    # inputs (one batch tile of Bt rows)
    x_ref,        # (T, Bt, I)   mxu_dtype (bf16 by default)
    h0_ref,       # (2, Bt, H)   f32
    wih_ref,      # (I, 6H)      mxu_dtype   columns [fwd r|z|n , bwd r|z|n]
    bih_ref,      # (1, 6H)      f32
    whh_ref,      # (2H, 3H)     f32         rows [:H]=fwd, [H:]=bwd
    bhh_ref,      # (2, 3H)      f32
    wsent_ref,    # (2H, 2H)     mxu_dtype
    bsent_ref,    # (1, 2H)      f32
    wproj_ref,    # (1, 2H)      f32
    w1_ref,       # (2H, hidden) f32
    b1_ref,       # (1, hidden)  f32
    w2_ref,       # (hidden, C)  f32
    b2_ref,       # (1, C)       f32
    # outputs
    final_ref,    # (Bt, C)
    state_ref,    # (2, Bt, H)
    out1_ref,     # (Bt, hidden)
    # scratch
    gi_sc,        # (2, T*Bt, 3H) f32  gate pre-activations per direction      [R4]
    out_sc,       # (T*Bt, 2H)    f32  GRU outputs, [:, :H]=fwd, [:, H:]=bwd   [R5]
):
    T, Bt, I = x_ref.shape
    H = h0_ref.shape[2]
    G = 3 * H

    # ---- (1) input projection: ALL timesteps & BOTH directions, one bf16 MXU matmul [R6]
    x2 = x_ref[...].reshape(T * Bt, I)                 # free: merges T into sublane-aligned rows
    gi = jnp.dot(x2, wih_ref[...], preferred_element_type=jnp.float32) + bih_ref[...]
    # Hoisted one-time split into per-direction slabs so the per-step reads below are
    # lane-aligned row blocks (no per-step lane shifting on the critical path).       [R4]
    gi_sc[0] = gi[:, :G]
    gi_sc[1] = gi[:, G:]

    whh_all = whh_ref[...]
    whh_f, whh_b = whh_all[:H, :], whh_all[H:, :]      # (H, 3H) each, sublane-aligned slices
    bhh_all = bhh_ref[...]
    bhh_f, bhh_b = bhh_all[0:1, :], bhh_all[1:2, :]    # (1, 3H) each

    def gru_gate(gi_t, gh_t, h):
        # PyTorch GRU cell, gate order (r, z, n); bhh sits inside gh_t so r*(Wh h + b_hn) holds.
        r = jax.nn.sigmoid(gi_t[:, :H] + gh_t[:, :H])
        z = jax.nn.sigmoid(gi_t[:, H:2 * H] + gh_t[:, H:2 * H])
        n = jnp.tanh(gi_t[:, 2 * H:] + r * gh_t[:, 2 * H:])
        return (1.0 - z) * n + z * h

    hf = h0_ref[0]                                     # (Bt, H)
    hb = h0_ref[1]                                     # (Bt, H)

    # ---- (2) fused fwd/bwd recurrence, statically unrolled (T small & static) [R3][R11]
    #      Only hf/hb stay live as values; every step's outputs go to the 2H-wide scratch.
    for t in range(T):
        tb = T - 1 - t
        gh_f = jnp.dot(hf, whh_f, preferred_element_type=jnp.float32) + bhh_f   # f32 recurrence
        gh_b = jnp.dot(hb, whh_b, preferred_element_type=jnp.float32) + bhh_b
        hf = gru_gate(gi_sc[0, t * Bt:(t + 1) * Bt, :], gh_f, hf)
        hb = gru_gate(gi_sc[1, tb * Bt:(tb + 1) * Bt, :], gh_b, hb)
        out_sc[t * Bt:(t + 1) * Bt, :H] = hf                                     # [R5]
        out_sc[tb * Bt:(tb + 1) * Bt, H:] = hb

    state_ref[0] = hf
    state_ref[1] = hb

    # ---- (3) attention logits: ONE matmul with the whole W_sent (bf16 operands) [R5][R6]
    out_all = out_sc[...]                                                        # (T*Bt, 2H) f32
    sq = jnp.tanh(
        jnp.dot(out_all.astype(wsent_ref.dtype), wsent_ref[...],
                preferred_element_type=jnp.float32) + bsent_ref[...])            # (T*Bt, 2H)
    lvec = jnp.sum(sq * wproj_ref[...], axis=-1, keepdims=True)                  # (T*Bt, 1)

    # ---- (4) softmax over time on the free (T, Bt, 1) view (major-axis reductions,
    #          no scatter loop, no relayout)                                     [R1][R7]
    att = lvec.reshape(T, Bt, 1)
    att = att - jnp.max(att, axis=0, keepdims=True)
    e = jnp.exp(att)
    a = e * pl.reciprocal(jnp.sum(e, axis=0, keepdims=True), approx=True)        # (T, Bt, 1)

    # ---- (5) attention-weighted sum: one broadcast-multiply + major-axis reduce over
    #          the scratch (single pass, no per-t lane extracts, no value lists) [R2][R3]
    sv = jnp.sum(out_all.reshape(T, Bt, 2 * H) * a, axis=0)                      # (Bt, 2H)

    # ---- (6) linear1 -> output1, linear2 -> final softmax (dim 1)              [R5][R7]
    out1 = jnp.dot(sv, w1_ref[...], preferred_element_type=jnp.float32) + b1_ref[...]
    out1_ref[...] = out1
    logits2 = jnp.dot(out1, w2_ref[...], preferred_element_type=jnp.float32) + b2_ref[...]
    e2 = jnp.exp(logits2 - jnp.max(logits2, axis=1, keepdims=True))
    final_ref[...] = e2 * pl.reciprocal(jnp.sum(e2, axis=1, keepdims=True), approx=True)


def forward(x, h0, p, *, batch_tile=16, mxu_dtype=jnp.bfloat16):
    """Wrapper: pad batch to a multiple of the batch tile, pack params (plain JAX glue),
    launch the kernel over a 1-D 'parallel' grid of batch tiles.   batch_tile must be a
    multiple of 16 (bf16 sublane packing; 8 would suffice for pure f32)."""
    T, B, I = x.shape
    H = h0.shape[2]
    hidden_dim = p["w1"].shape[0]
    n_classes = p["w2"].shape[0]

    Bt = batch_tile
    Bp = ((B + Bt - 1) // Bt) * Bt
    if Bp != B:
        x = jnp.pad(x, ((0, 0), (0, Bp - B), (0, 0)))
        h0 = jnp.pad(h0, ((0, 0), (0, Bp - B), (0, 0)))

    # --- parameter packing (plain JAX glue outside the kernel) ---
    x = x.astype(mxu_dtype)                                               # [R6] halves x DMA bytes
    h0 = h0.astype(jnp.float32)
    wih = jnp.concatenate([p["wih_f"].T, p["wih_b"].T], axis=1).astype(mxu_dtype)   # (I, 6H)
    bih = jnp.concatenate([p["bih_f"], p["bih_b"]])[None, :].astype(jnp.float32)    # (1, 6H)
    whh = jnp.concatenate([p["whh_f"].T, p["whh_b"].T], axis=0)                     # (2H, 3H) f32
    bhh = jnp.stack([p["bhh_f"], p["bhh_b"]], axis=0)                               # (2, 3H)
    wsent = p["w_sent"].astype(mxu_dtype)                                           # (2H, 2H)
    bsent = p["b_sent"][:, 0][None, :]                                              # (1, 2H)
    wproj = p["w_proj"][:, 0][None, :]                                              # (1, 2H)
    w1 = p["w1"].T                                                                  # (2H, hidden)
    b1 = p["b1"][None, :]
    w2 = p["w2"].T                                                                  # (hidden, C)
    b2 = p["b2"][None, :]

    inputs = (x, h0, wih, bih, whh, bhh, wsent, bsent, wproj, w1, b1, w2, b2)

    def replicated(arr):                      # whole (small) array resident every grid step
        nd = arr.ndim
        return pl.BlockSpec(arr.shape, lambda i: (0,) * nd)

    in_specs = [
        pl.BlockSpec((T, Bt, I), lambda i: (0, i, 0)),       # x  : batch-tiled   [R9]
        pl.BlockSpec((2, Bt, H), lambda i: (0, i, 0)),       # h0 : batch-tiled
    ] + [replicated(a) for a in inputs[2:]]

    out_specs = (
        pl.BlockSpec((Bt, n_classes), lambda i: (i, 0)),
        pl.BlockSpec((2, Bt, H), lambda i: (0, i, 0)),
        pl.BlockSpec((Bt, hidden_dim), lambda i: (i, 0)),
    )
    out_shape = (
        jax.ShapeDtypeStruct((Bp, n_classes), jnp.float32),
        jax.ShapeDtypeStruct((2, Bp, H), jnp.float32),
        jax.ShapeDtypeStruct((Bp, hidden_dim), jnp.float32),
    )
    scratch_shapes = [
        pltpu.VMEM((2, T * Bt, 3 * H), jnp.float32),   # gi per direction          [R4]
        pltpu.VMEM((T * Bt, 2 * H), jnp.float32),      # GRU outputs [fwd | bwd]   [R5]
    ]

    # --- explicit VMEM budget for the per-TC working set (portable to v7x 64 MiB) [R10]
    f32b = 4
    mxub = jnp.dtype(mxu_dtype).itemsize
    tile_io = (T * Bt * I * mxub + 2 * Bt * H * f32b
               + Bt * (n_classes + 2 * H + hidden_dim) * f32b)
    params_b = sum(int(a.size) * a.dtype.itemsize for a in inputs[2:])
    scratch_b = (2 * T * Bt * 3 * H + T * Bt * 2 * H) * f32b
    live_b = T * Bt * 6 * H * f32b                      # gi value before the hoisted split
    est = 2 * tile_io + params_b + scratch_b + live_b   # x2 for double-buffered tiles
    vmem_limit = int(min(max(4 * est, 16 * 2 ** 20), 56 * 2 ** 20))

    fn = pl.pallas_call(
        attn_sent_rnn_kernel,
        out_shape=out_shape,
        grid_spec=pltpu.PrefetchScalarGridSpec(
            num_scalar_prefetch=0,
            grid=(Bp // Bt,),
            in_specs=in_specs,
            out_specs=out_specs,
            scratch_shapes=scratch_shapes,
        ),
        compiler_params=pltpu.CompilerParams(
            dimension_semantics=("parallel",),           # independent batch tiles  [R9]
            vmem_limit_bytes=vmem_limit,                 #                           [R10]
        ),
    )
    final, state, out1 = fn(*inputs)
    return final[:B], state[:, :B], out1[:B]


def reference_forward(x, h0, p):
    """Pure-JAX (f32) reference mirroring the PyTorch forward exactly."""
    T, B, _ = x.shape
    H = p["whh_f"].shape[1]

    def gru_step(x_t, h, wih, whh, bih, bhh):
        gi = x_t @ wih.T + bih
        gh = h @ whh.T + bhh
        r = jax.nn.sigmoid(gi[:, :H] + gh[:, :H])
        z = jax.nn.sigmoid(gi[:, H:2 * H] + gh[:, H:2 * H])
        n = jnp.tanh(gi[:, 2 * H:] + r * gh[:, 2 * H:])
        return (1.0 - z) * n + z * h

    hf, hb = h0[0], h0[1]
    outf, outb = [], [None] * T
    for t in range(T):
        hf = gru_step(x[t], hf, p["wih_f"], p["whh_f"], p["bih_f"], p["bhh_f"])
        outf.append(hf)
    for t in range(T - 1, -1, -1):
        hb = gru_step(x[t], hb, p["wih_b"], p["whh_b"], p["bih_b"], p["bhh_b"])
        outb[t] = hb
    out = jnp.stack([jnp.concatenate([outf[t], outb[t]], -1) for t in range(T)], 0)
    squish = jnp.tanh(out @ p["w_sent"] + p["b_sent"][:, 0][None, None, :])
    attn = (squish @ p["w_proj"])[..., 0]                    # (T, B)
    attn = jax.nn.softmax(attn, axis=0)
    sv = jnp.sum(attn[:, :, None] * out, axis=0)             # (B, 2H)
    out1 = sv @ p["w1"].T + p["b1"]
    out2 = out1 @ p["w2"].T + p["b2"]
    return jax.nn.softmax(out2, axis=1), jnp.stack([hf, hb], 0), out1


if __name__ == "__main__":
    # small shapes consistent with the module
    T, B = 8, 4
    word_gru_hidden = 16
    sent_gru_hidden = 16
    hidden_dim = 5
    n_classes = 3
    I = 2 * word_gru_hidden        # bidirectional word-level input
    H = sent_gru_hidden

    key = jax.random.PRNGKey(0)
    ks = jax.random.split(key, 16)
    u = lambda k, shape, lim: jax.random.uniform(k, shape, jnp.float32, -lim, lim)
    k_gru = 1.0 / float(H) ** 0.5
    k_l1 = 1.0 / float(2 * H) ** 0.5
    k_l2 = 1.0 / float(hidden_dim) ** 0.5

    params = dict(
        wih_f=u(ks[0], (3 * H, I), k_gru), whh_f=u(ks[1], (3 * H, H), k_gru),
        bih_f=u(ks[2], (3 * H,), k_gru), bhh_f=u(ks[3], (3 * H,), k_gru),
        wih_b=u(ks[4], (3 * H, I), k_gru), whh_b=u(ks[5], (3 * H, H), k_gru),
        bih_b=u(ks[6], (3 * H,), k_gru), bhh_b=u(ks[7], (3 * H,), k_gru),
        w_sent=u(ks[8], (2 * H, 2 * H), 0.1),
        b_sent=u(ks[9], (2 * H, 1), 0.1),
        w_proj=u(ks[10], (2 * H, 1), 0.1),
        w1=u(ks[11], (hidden_dim, 2 * H), k_l1), b1=u(ks[12], (hidden_dim,), k_l1),
        w2=u(ks[13], (n_classes, hidden_dim), k_l2), b2=u(ks[14], (n_classes,), k_l2),
    )
    # TODO(synk): sent_gru.flatten_parameters() is a CUDA memory-layout hint; no-op here.

    x = jax.random.normal(ks[15], (T, B, I), jnp.float32)    # word_attention_vectors
    h0 = jnp.zeros((2, B, H), jnp.float32)                   # init_hidden(batch_size)

    rf, rs, r1 = reference_forward(x, h0, params)

    # (a) f32 MXU operands: structural check (only the approx reciprocals differ from ref).
    f32_res = jax.block_until_ready(forward(x, h0, params, mxu_dtype=jnp.float32))
    for got, want, name in zip(f32_res, (rf, rs, r1), ("final", "state", "output1")):
        assert jnp.allclose(got, want, atol=5e-3, rtol=5e-3), f"f32 {name} mismatch"

    # (b) default bf16 MXU operands (per perf review): slightly looser tolerance vs the
    #     pure-f32 reference (bf16 operand rounding + approx reciprocal).
    final, state, out1 = jax.block_until_ready(forward(x, h0, params))
    for got, want, name in zip((final, state, out1), (rf, rs, r1),
                               ("final", "state", "output1")):
        assert jnp.allclose(got, want, atol=1e-2, rtol=1e-2), f"bf16 {name} mismatch"

    print("KERNEL_OK")
</pallas_src>

<mosaic_0001>
module attributes {stable_mosaic.version = 11 : i64} {
  func.func @attn_sent_rnn_kernel(%arg0: i32, %arg1: memref<8x16x32xf32, #tpu.memory_space<vmem>>, %arg2: memref<2x16x16xf32, #tpu.memory_space<vmem>>, %arg3: memref<32x96xf32, #tpu.memory_space<vmem>>, %arg4: memref<1x96xf32, #tpu.memory_space<vmem>>, %arg5: memref<32x48xf32, #tpu.memory_space<vmem>>, %arg6: memref<2x48xf32, #tpu.memory_space<vmem>>, %arg7: memref<32x32xf32, #tpu.memory_space<vmem>>, %arg8: memref<1x32xf32, #tpu.memory_space<vmem>>, %arg9: memref<1x32xf32, #tpu.memory_space<vmem>>, %arg10: memref<32x5xf32, #tpu.memory_space<vmem>>, %arg11: memref<1x5xf32, #tpu.memory_space<vmem>>, %arg12: memref<5x3xf32, #tpu.memory_space<vmem>>, %arg13: memref<1x3xf32, #tpu.memory_space<vmem>>, %arg14: memref<16x3xf32, #tpu.memory_space<vmem>>, %arg15: memref<2x16x16xf32, #tpu.memory_space<vmem>>, %arg16: memref<16x5xf32, #tpu.memory_space<vmem>>, %arg17: memref<2x128x48xf32, #tpu.memory_space<vmem>>, %arg18: memref<128x32xf32, #tpu.memory_space<vmem>>) attributes {dimension_semantics = [#tpu.dimension_semantics<parallel>], iteration_bounds = array<i64: 1>, scalar_prefetch = 0 : i64, scratch_operands = 2 : i64, tpu.core_type = #tpu.core_type<tc>, window_params = [{transform_indices = @transform_0, window_bounds = array<i64: 8, 16, 32>}, {transform_indices = @transform_1, window_bounds = array<i64: 2, 16, 16>}, {pipeline_mode = #tpu.pipeline_mode<synchronous>, transform_indices = @transform_2, window_bounds = array<i64: 32, 96>}, {pipeline_mode = #tpu.pipeline_mode<synchronous>, transform_indices = @transform_3, window_bounds = array<i64: 1, 96>}, {pipeline_mode = #tpu.pipeline_mode<synchronous>, transform_indices = @transform_4, window_bounds = array<i64: 32, 48>}, {pipeline_mode = #tpu.pipeline_mode<synchronous>, transform_indices = @transform_5, window_bounds = array<i64: 2, 48>}, {pipeline_mode = #tpu.pipeline_mode<synchronous>, transform_indices = @transform_6, window_bounds = array<i64: 32, 32>}, {pipeline_mode = #tpu.pipeline_mode<synchronous>, transform_indices = @transform_7, window_bounds = array<i64: 1, 32>}, {pipeline_mode = #tpu.pipeline_mode<synchronous>, transform_indices = @transform_8, window_bounds = array<i64: 1, 32>}, {pipeline_mode = #tpu.pipeline_mode<synchronous>, transform_indices = @transform_9, window_bounds = array<i64: 32, 5>}, {pipeline_mode = #tpu.pipeline_mode<synchronous>, transform_indices = @transform_10, window_bounds = array<i64: 1, 5>}, {pipeline_mode = #tpu.pipeline_mode<synchronous>, transform_indices = @transform_11, window_bounds = array<i64: 5, 3>}, {pipeline_mode = #tpu.pipeline_mode<synchronous>, transform_indices = @transform_12, window_bounds = array<i64: 1, 3>}, {transform_indices = @transform_13, window_bounds = array<i64: 16, 3>}, {transform_indices = @transform_14, window_bounds = array<i64: 2, 16, 16>}, {transform_indices = @transform_15, window_bounds = array<i64: 16, 5>}]} {
    %c0 = arith.constant 0 : index
    %c0_0 = arith.constant 0 : index
    %c0_1 = arith.constant 0 : index
    %0 = vector.load %arg1[%c0, %c0_0, %c0_1] : memref<8x16x32xf32, #tpu.memory_space<vmem>>, vector<8x16x32xf32>
    %1 = vector.shape_cast %0 : vector<8x16x32xf32> to vector<128x32xf32>
    %c0_2 = arith.constant 0 : index
    %c0_3 = arith.constant 0 : index
    %2 = vector.load %arg3[%c0_2, %c0_3] : memref<32x96xf32, #tpu.memory_space<vmem>>, vector<32x96xf32>
    %cst = arith.constant dense<0.000000e+00> : vector<128x96xf32>
    %3 = tpu.matmul %1, %2, %cst {dimension_numbers = #tpu.dot_dimension_numbers<[1], [0], [0], [1], [0, 0, 1, 1], [], []>} : vector<128x32xf32>, vector<32x96xf32>, vector<128x96xf32> -> vector<128x96xf32>
    %c0_4 = arith.constant 0 : index
    %c0_5 = arith.constant 0 : index
    %4 = vector.load %arg4[%c0_4, %c0_5] : memref<1x96xf32, #tpu.memory_space<vmem>>, vector<1x96xf32>
    %5 = vector.broadcast %4 : vector<1x96xf32> to vector<128x96xf32>
    %6 = arith.addf %3, %5 : vector<128x96xf32>
    %7 = vector.extract_strided_slice %6 {offsets = [0, 0], sizes = [128, 48], strides = [1, 1]} : vector<128x96xf32> to vector<128x48xf32>
    %c0_6 = arith.constant 0 : index
    %c0_7 = arith.constant 0 : index
    %c0_8 = arith.constant 0 : index
    %8 = vector.load %arg17[%c0_6, %c0_7, %c0_8] : memref<2x128x48xf32, #tpu.memory_space<vmem>>, vector<1x128x48xf32>
    %9 = vector.shape_cast %8 : vector<1x128x48xf32> to vector<128x48xf32>
    %10 = vector.shape_cast %7 : vector<128x48xf32> to vector<1x128x48xf32>
    tpu.vector_store %arg17[%c0_6, %c0_7, %c0_8], %10 {strides = array<i32>} : memref<2x128x48xf32, #tpu.memory_space<vmem>>, vector<1x128x48xf32>,
    %11 = vector.extract_strided_slice %6 {offsets = [0, 48], sizes = [128, 48], strides = [1, 1]} : vector<128x96xf32> to vector<128x48xf32>
    %c1 = arith.constant 1 : index
    %c0_9 = arith.constant 0 : index
    %c0_10 = arith.constant 0 : index
    %12 = vector.load %arg17[%c1, %c0_9, %c0_10] : memref<2x128x48xf32, #tpu.memory_space<vmem>>, vector<1x128x48xf32>
    %13 = vector.shape_cast %12 : vector<1x128x48xf32> to vector<128x48xf32>
    %14 = vector.shape_cast %11 : vector<128x48xf32> to vector<1x128x48xf32>
    tpu.vector_store %arg17[%c1, %c0_9, %c0_10], %14 {strides = array<i32>} : memref<2x128x48xf32, #tpu.memory_space<vmem>>, vector<1x128x48xf32>,
    %c0_11 = arith.constant 0 : index
    %c0_12 = arith.constant 0 : index
    %15 = vector.load %arg5[%c0_11, %c0_12] : memref<32x48xf32, #tpu.memory_space<vmem>>, vector<32x48xf32>
    %16 = vector.extract_strided_slice %15 {offsets = [0, 0], sizes = [16, 48], strides = [1, 1]} : vector<32x48xf32> to vector<16x48xf32>
    %17 = vector.extract_strided_slice %15 {offsets = [16, 0], sizes = [16, 48], strides = [1, 1]} : vector<32x48xf32> to vector<16x48xf32>
    %c0_13 = arith.constant 0 : index
    %c0_14 = arith.constant 0 : index
    %18 = vector.load %arg6[%c0_13, %c0_14] : memref<2x48xf32, #tpu.memory_space<vmem>>, vector<2x48xf32>
    %19 = vector.extract_strided_slice %18 {offsets = [0, 0], sizes = [1, 48], strides = [1, 1]} : vector<2x48xf32> to vector<1x48xf32>
    %20 = vector.extract_strided_slice %18 {offsets = [1, 0], sizes = [1, 48], strides = [1, 1]} : vector<2x48xf32> to vector<1x48xf32>
    %c0_15 = arith.constant 0 : index
    %c0_16 = arith.constant 0 : index
    %c0_17 = arith.constant 0 : index
    %21 = vector.load %arg2[%c0_15, %c0_16, %c0_17] : memref<2x16x16xf32, #tpu.memory_space<vmem>>, vector<1x16x16xf32>
    %22 = vector.shape_cast %21 : vector<1x16x16xf32> to vector<16x16xf32>
    %c1_18 = arith.constant 1 : index
    %c0_19 = arith.constant 0 : index
    %c0_20 = arith.constant 0 : index
    %23 = vector.load %arg2[%c1_18, %c0_19, %c0_20] : memref<2x16x16xf32, #tpu.memory_space<vmem>>, vector<1x16x16xf32>
    %24 = vector.shape_cast %23 : vector<1x16x16xf32> to vector<16x16xf32>
    %cst_21 = arith.constant dense<0.000000e+00> : vector<16x48xf32>
    %25 = tpu.matmul %22, %16, %cst_21 {dimension_numbers = #tpu.dot_dimension_numbers<[1], [0], [0], [1], [0, 0, 1, 1], [], []>} : vector<16x16xf32>, vector<16x48xf32>, vector<16x48xf32> -> vector<16x48xf32>
    %26 = vector.broadcast %19 : vector<1x48xf32> to vector<16x48xf32>
    %27 = arith.addf %25, %26 : vector<16x48xf32>
    %cst_22 = arith.constant dense<0.000000e+00> : vector<16x48xf32>
    %28 = tpu.matmul %24, %17, %cst_22 {dimension_numbers = #tpu.dot_dimension_numbers<[1], [0], [0], [1], [0, 0, 1, 1], [], []>} : vector<16x16xf32>, vector<16x48xf32>, vector<16x48xf32> -> vector<16x48xf32>
    %29 = vector.broadcast %20 : vector<1x48xf32> to vector<16x48xf32>
    %30 = arith.addf %28, %29 : vector<16x48xf32>
    %c0_23 = arith.constant 0 : index
    %c0_24 = arith.constant 0 : index
    %c0_25 = arith.constant 0 : index
    %31 = vector.load %arg17[%c0_23, %c0_24, %c0_25] : memref<2x128x48xf32, #tpu.memory_space<vmem>>, vector<1x16x48xf32>
    %32 = vector.shape_cast %31 : vector<1x16x48xf32> to vector<16x48xf32>
    %33 = vector.extract_strided_slice %32 {offsets = [0, 0], sizes = [16, 16], strides = [1, 1]} : vector<16x48xf32> to vector<16x16xf32>
    %34 = vector.extract_strided_slice %27 {offsets = [0, 0], sizes = [16, 16], strides = [1, 1]} : vector<16x48xf32> to vector<16x16xf32>
    %35 = arith.addf %33, %34 : vector<16x16xf32>
    %36 = arith.negf %35 : vector<16x16xf32>
    %37 = math.exp %36 : vector<16x16xf32>
    %cst_26 = arith.constant 1.000000e+00 : f32
    %38 = vector.broadcast %cst_26 : f32 to vector<16x16xf32>
    %39 = arith.addf %38, %37 : vector<16x16xf32>
    %40 = arith.divf %38, %39 : vector<16x16xf32>
    %41 = vector.extract_strided_slice %32 {offsets = [0, 16], sizes = [16, 16], strides = [1, 1]} : vector<16x48xf32> to vector<16x16xf32>
    %42 = vector.extract_strided_slice %27 {offsets = [0, 16], sizes = [16, 16], strides = [1, 1]} : vector<16x48xf32> to vector<16x16xf32>
    %43 = arith.addf %41, %42 : vector<16x16xf32>
    %44 = arith.negf %43 : vector<16x16xf32>
    %45 = math.exp %44 : vector<16x16xf32>
    %cst_27 = arith.constant 1.000000e+00 : f32
    %46 = vector.broadcast %cst_27 : f32 to vector<16x16xf32>
    %47 = arith.addf %46, %45 : vector<16x16xf32>
    %48 = arith.divf %46, %47 : vector<16x16xf32>
    %49 = vector.extract_strided_slice %32 {offsets = [0, 32], sizes = [16, 16], strides = [1, 1]} : vector<16x48xf32> to vector<16x16xf32>
    %50 = vector.extract_strided_slice %27 {offsets = [0, 32], sizes = [16, 16], strides = [1, 1]} : vector<16x48xf32> to vector<16x16xf32>
    %51 = arith.mulf %40, %50 : vector<16x16xf32>
    %52 = arith.addf %49, %51 : vector<16x16xf32>
    %53 = math.tanh %52 : vector<16x16xf32>
    %cst_28 = arith.constant 1.000000e+00 : f32
    %54 = vector.broadcast %cst_28 : f32 to vector<16x16xf32>
    %55 = arith.subf %54, %48 : vector<16x16xf32>
    %56 = arith.mulf %55, %53 : vector<16x16xf32>
    %57 = arith.mulf %48, %22 : vector<16x16xf32>
    %58 = arith.addf %56, %57 : vector<16x16xf32>
    %c1_29 = arith.constant 1 : index
    %c112 = arith.constant 112 : index
    %c0_30 = arith.constant 0 : index
    %59 = vector.load %arg17[%c1_29, %c112, %c0_30] : memref<2x128x48xf32, #tpu.memory_space<vmem>>, vector<1x16x48xf32>
    %60 = vector.shape_cast %59 : vector<1x16x48xf32> to vector<16x48xf32>
    %61 = vector.extract_strided_slice %60 {offsets = [0, 0], sizes = [16, 16], strides = [1, 1]} : vector<16x48xf32> to vector<16x16xf32>
    %62 = vector.extract_strided_slice %30 {offsets = [0, 0], sizes = [16, 16], strides = [1, 1]} : vector<16x48xf32> to vector<16x16xf32>
    %63 = arith.addf %61, %62 : vector<16x16xf32>
    %64 = arith.negf %63 : vector<16x16xf32>
    %65 = math.exp %64 : vector<16x16xf32>
    %cst_31 = arith.constant 1.000000e+00 : f32
    %66 = vector.broadcast %cst_31 : f32 to vector<16x16xf32>
    %67 = arith.addf %66, %65 : vector<16x16xf32>
    %68 = arith.divf %66, %67 : vector<16x16xf32>
    %69 = vector.extract_strided_slice %60 {offsets = [0, 16], sizes = [16, 16], strides = [1, 1]} : vector<16x48xf32> to vector<16x16xf32>
    %70 = vector.extract_strided_slice %30 {offsets = [0, 16], sizes = [16, 16], strides = [1, 1]} : vector<16x48xf32> to vector<16x16xf32>
    %71 = arith.addf %69, %70 : vector<16x16xf32>
    %72 = arith.negf %71 : vector<16x16xf32>
    %73 = math.exp %72 : vector<16x16xf32>
    %cst_32 = arith.constant 1.000000e+00 : f32
    %74 = vector.broadcast %cst_32 : f32 to vector<16x16xf32>
    %75 = arith.addf %74, %73 : vector<16x16xf32>
    %76 = arith.divf %74, %75 : vector<16x16xf32>
    %77 = vector.extract_strided_slice %60 {offsets = [0, 32], sizes = [16, 16], strides = [1, 1]} : vector<16x48xf32> to vector<16x16xf32>
    %78 = vector.extract_strided_slice %30 {offsets = [0, 32], sizes = [16, 16], strides = [1, 1]} : vector<16x48xf32> to vector<16x16xf32>
    %79 = arith.mulf %68, %78 : vector<16x16xf32>
    %80 = arith.addf %77, %79 : vector<16x16xf32>
    %81 = math.tanh %80 : vector<16x16xf32>
    %cst_33 = arith.constant 1.000000e+00 : f32
    %82 = vector.broadcast %cst_33 : f32 to vector<16x16xf32>
    %83 = arith.subf %82, %76 : vector<16x16xf32>
    %84 = arith.mulf %83, %81 : vector<16x16xf32>
    %85 = arith.mulf %76, %24 : vector<16x16xf32>
    %86 = arith.addf %84, %85 : vector<16x16xf32>
    %c0_34 = arith.constant 0 : index
    %c0_35 = arith.constant 0 : index
    %87 = vector.load %arg18[%c0_34, %c0_35] : memref<128x32xf32, #tpu.memory_space<vmem>>, vector<16x16xf32>
    tpu.vector_store %arg18[%c0_34, %c0_35], %58 {strides = array<i32>} : memref<128x32xf32, #tpu.memory_space<vmem>>, vector<16x16xf32>,
    %c112_36 = arith.constant 112 : index
    %c16 = arith.constant 16 : index
    %88 = vector.load %arg18[%c112_36, %c16] : memref<128x32xf32, #tpu.memory_space<vmem>>, vector<16x16xf32>
    tpu.vector_store %arg18[%c112_36, %c16], %86 {strides = array<i32>} : memref<128x32xf32, #tpu.memory_space<vmem>>, vector<16x16xf32>,
    %cst_37 = arith.constant dense<0.000000e+00> : vector<16x48xf32>
    %89 = tpu.matmul %58, %16, %cst_37 {dimension_numbers = #tpu.dot_dimension_numbers<[1], [0], [0], [1], [0, 0, 1, 1], [], []>} : vector<16x16xf32>, vector<16x48xf32>, vector<16x48xf32> -> vector<16x48xf32>
    %90 = vector.broadcast %19 : vector<1x48xf32> to vector<16x48xf32>
    %91 = arith.addf %89, %90 : vector<16x48xf32>
    %cst_38 = arith.constant dense<0.000000e+00> : vector<16x48xf32>
    %92 = tpu.matmul %86, %17, %cst_38 {dimension_numbers = #tpu.dot_dimension_numbers<[1], [0], [0], [1], [0, 0, 1, 1], [], []>} : vector<16x16xf32>, vector<16x48xf32>, vector<16x48xf32> -> vector<16x48xf32>
    %93 = vector.broadcast %20 : vector<1x48xf32> to vector<16x48xf32>
    %94 = arith.addf %92, %93 : vector<16x48xf32>
    %c0_39 = arith.constant 0 : index
    %c16_40 = arith.constant 16 : index
    %c0_41 = arith.constant 0 : index
    %95 = vector.load %arg17[%c0_39, %c16_40, %c0_41] : memref<2x128x48xf32, #tpu.memory_space<vmem>>, vector<1x16x48xf32>
    %96 = vector.shape_cast %95 : vector<1x16x48xf32> to vector<16x48xf32>
    %97 = vector.extract_strided_slice %96 {offsets = [0, 0], sizes = [16, 16], strides = [1, 1]} : vector<16x48xf32> to vector<16x16xf32>
    %98 = vector.extract_strided_slice %91 {offsets = [0, 0], sizes = [16, 16], strides = [1, 1]} : vector<16x48xf32> to vector<16x16xf32>
    %99 = arith.addf %97, %98 : vector<16x16xf32>
    %100 = arith.negf %99 : vector<16x16xf32>
    %101 = math.exp %100 : vector<16x16xf32>
    %cst_42 = arith.constant 1.000000e+00 : f32
    %102 = vector.broadcast %cst_42 : f32 to vector<16x16xf32>
    %103 = arith.addf %102, %101 : vector<16x16xf32>
    %104 = arith.divf %102, %103 : vector<16x16xf32>
    %105 = vector.extract_strided_slice %96 {offsets = [0, 16], sizes = [16, 16], strides = [1, 1]} : vector<16x48xf32> to vector<16x16xf32>
    %106 = vector.extract_strided_slice %91 {offsets = [0, 16], sizes = [16, 16], strides = [1, 1]} : vector<16x48xf32> to vector<16x16xf32>
    %107 = arith.addf %105, %106 : vector<16x16xf32>
    %108 = arith.negf %107 : vector<16x16xf32>
    %109 = math.exp %108 : vector<16x16xf32>
    %cst_43 = arith.constant 1.000000e+00 : f32
    %110 = vector.broadcast %cst_43 : f32 to vector<16x16xf32>
    %111 = arith.addf %110, %109 : vector<16x16xf32>
    %112 = arith.divf %110, %111 : vector<16x16xf32>
    %113 = vector.extract_strided_slice %96 {offsets = [0, 32], sizes = [16, 16], strides = [1, 1]} : vector<16x48xf32> to vector<16x16xf32>
    %114 = vector.extract_strided_slice %91 {offsets = [0, 32], sizes = [16, 16], strides = [1, 1]} : vector<16x48xf32> to vector<16x16xf32>
    %115 = arith.mulf %104, %114 : vector<16x16xf32>
    %116 = arith.addf %113, %115 : vector<16x16xf32>
    %117 = math.tanh %116 : vector<16x16xf32>
    %cst_44 = arith.constant 1.000000e+00 : f32
    %118 = vector.broadcast %cst_44 : f32 to vector<16x16xf32>
    %119 = arith.subf %118, %112 : vector<16x16xf32>
    %120 = arith.mulf %119, %117 : vector<16x16xf32>
    %121 = arith.mulf %112, %58 : vector<16x16xf32>
    %122 = arith.addf %120, %121 : vector<16x16xf32>
    %c1_45 = arith.constant 1 : index
    %c96 = arith.constant 96 : index
    %c0_46 = arith.constant 0 : index
    %123 = vector.load %arg17[%c1_45, %c96, %c0_46] : memref<2x128x48xf32, #tpu.memory_space<vmem>>, vector<1x16x48xf32>
    %124 = vector.shape_cast %123 : vector<1x16x48xf32> to vector<16x48xf32>
    %125 = vector.extract_strided_slice %124 {offsets = [0, 0], sizes = [16, 16], strides = [1, 1]} : vector<16x48xf32> to vector<16x16xf32>
    %126 = vector.extract_strided_slice %94 {offsets = [0, 0], sizes = [16, 16], strides = [1, 1]} : vector<16x48xf32> to vector<16x16xf32>
    %127 = arith.addf %125, %126 : vector<16x16xf32>
    %128 = arith.negf %127 : vector<16x16xf32>
    %129 = math.exp %128 : vector<16x16xf32>
    %cst_47 = arith.constant 1.000000e+00 : f32
    %130 = vector.broadcast %cst_47 : f32 to vector<16x16xf32>
    %131 = arith.addf %130, %129 : vector<16x16xf32>
    %132 = arith.divf %130, %131 : vector<16x16xf32>
    %133 = vector.extract_strided_slice %124 {offsets = [0, 16], sizes = [16, 16], strides = [1, 1]} : vector<16x48xf32> to vector<16x16xf32>
    %134 = vector.extract_strided_slice %94 {offsets = [0, 16], sizes = [16, 16], strides = [1, 1]} : vector<16x48xf32> to vector<16x16xf32>
    %135 = arith.addf %133, %134 : vector<16x16xf32>
    %136 = arith.negf %135 : vector<16x16xf32>
    %137 = math.exp %136 : vector<16x16xf32>
    %cst_48 = arith.constant 1.000000e+00 : f32
    %138 = vector.broadcast %cst_48 : f32 to vector<16x16xf32>
    %139 = arith.addf %138, %137 : vector<16x16xf32>
    %140 = arith.divf %138, %139 : vector<16x16xf32>
    %141 = vector.extract_strided_slice %124 {offsets = [0, 32], sizes = [16, 16], strides = [1, 1]} : vector<16x48xf32> to vector<16x16xf32>
    %142 = vector.extract_strided_slice %94 {offsets = [0, 32], sizes = [16, 16], strides = [1, 1]} : vector<16x48xf32> to vector<16x16xf32>
    %143 = arith.mulf %132, %142 : vector<16x16xf32>
    %144 = arith.addf %141, %143 : vector<16x16xf32>
    %145 = math.tanh %144 : vector<16x16xf32>
    %cst_49 = arith.constant 1.000000e+00 : f32
    %146 = vector.broadcast %cst_49 : f32 to vector<16x16xf32>
    %147 = arith.subf %146, %140 : vector<16x16xf32>
    %148 = arith.mulf %147, %145 : vector<16x16xf32>
    %149 = arith.mulf %140, %86 : vector<16x16xf32>
    %150 = arith.addf %148, %149 : vector<16x16xf32>
    %c16_50 = arith.constant 16 : index
    %c0_51 = arith.constant 0 : index
    %151 = vector.load %arg18[%c16_50, %c0_51] : memref<128x32xf32, #tpu.memory_space<vmem>>, vector<16x16xf32>
    tpu.vector_store %arg18[%c16_50, %c0_51], %122 {strides = array<i32>} : memref<128x32xf32, #tpu.memory_space<vmem>>, vector<16x16xf32>,
    %c96_52 = arith.constant 96 : index
    %c16_53 = arith.constant 16 : index
    %152 = vector.load %arg18[%c96_52, %c16_53] : memref<128x32xf32, #tpu.memory_space<vmem>>, vector<16x16xf32>
    tpu.vector_store %arg18[%c96_52, %c16_53], %150 {strides = array<i32>} : memref<128x32xf32, #tpu.memory_space<vmem>>, vector<16x16xf32>,
    %cst_54 = arith.constant dense<0.000000e+00> : vector<16x48xf32>
    %153 = tpu.matmul %122, %16, %cst_54 {dimension_numbers = #tpu.dot_dimension_numbers<[1], [0], [0], [1], [0, 0, 1, 1], [], []>} : vector<16x16xf32>, vector<16x48xf32>, vector<16x48xf32> -> vector<16x48xf32>
    %154 = vector.broadcast %19 : vector<1x48xf32> to vector<16x48xf32>
    %155 = arith.addf %153, %154 : vector<16x48xf32>
    %cst_55 = arith.constant dense<0.000000e+00> : vector<16x48xf32>
    %156 = tpu.matmul %150, %17, %cst_55 {dimension_numbers = #tpu.dot_dimension_numbers<[1], [0], [0], [1], [0, 0, 1, 1], [], []>} : vector<16x16xf32>, vector<16x48xf32>, vector<16x48xf32> -> vector<16x48xf32>
    %157 = vector.broadcast %20 : vector<1x48xf32> to vector<16x48xf32>
    %158 = arith.addf %156, %157 : vector<16x48xf32>
    %c0_56 = arith.constant 0 : index
    %c32 = arith.constant 32 : index
    %c0_57 = arith.constant 0 : index
    %159 = vector.load %arg17[%c0_56, %c32, %c0_57] : memref<2x128x48xf32, #tpu.memory_space<vmem>>, vector<1x16x48xf32>
    %160 = vector.shape_cast %159 : vector<1x16x48xf32> to vector<16x48xf32>
    %161 = vector.extract_strided_slice %160 {offsets = [0, 0], sizes = [16, 16], strides = [1, 1]} : vector<16x48xf32> to vector<16x16xf32>
    %162 = vector.extract_strided_slice %155 {offsets = [0, 0], sizes = [16, 16], strides = [1, 1]} : vector<16x48xf32> to vector<16x16xf32>
    %163 = arith.addf %161, %162 : vector<16x16xf32>
    %164 = arith.negf %163 : vector<16x16xf32>
    %165 = math.exp %164 : vector<16x16xf32>
    %cst_58 = arith.constant 1.000000e+00 : f32
    %166 = vector.broadcast %cst_58 : f32 to vector<16x16xf32>
    %167 = arith.addf %166, %165 : vector<16x16xf32>
    %168 = arith.divf %166, %167 : vector<16x16xf32>
    %169 = vector.extract_strided_slice %160 {offsets = [0, 16], sizes = [16, 16], strides = [1, 1]} : vector<16x48xf32> to vector<16x16xf32>
    %170 = vector.extract_strided_slice %155 {offsets = [0, 16], sizes = [16, 16], strides = [1, 1]} : vector<16x48xf32> to vector<16x16xf32>
    %171 = arith.addf %169, %170 : vector<16x16xf32>
    %172 = arith.negf %171 : vector<16x16xf32>
    %173 = math.exp %172 : vector<16x16xf32>
    %cst_59 = arith.constant 1.000000e+00 : f32
    %174 = vector.broadcast %cst_59 : f32 to vector<16x16xf32>
    %175 = arith.addf %174, %173 : vector<16x16xf32>
    %176 = arith.divf %174, %175 : vector<16x16xf32>
    %177 = vector.extract_strided_slice %160 {offsets = [0, 32], sizes = [16, 16], strides = [1, 1]} : vector<16x48xf32> to vector<16x16xf32>
    %178 = vector.extract_strided_slice %155 {offsets = [0, 32], sizes = [16, 16], strides = [1, 1]} : vector<16x48xf32> to vector<16x16xf32>
    %179 = arith.mulf %168, %178 : vector<16x16xf32>
    %180 = arith.addf %177, %179 : vector<16x16xf32>
    %181 = math.tanh %180 : vector<16x16xf32>
    %cst_60 = arith.constant 1.000000e+00 : f32
    %182 = vector.broadcast %cst_60 : f32 to vector<16x16xf32>
    %183 = arith.subf %182, %176 : vector<16x16xf32>
    %184 = arith.mulf %183, %181 : vector<16x16xf32>
    %185 = arith.mulf %176, %122 : vector<16x16xf32>
    %186 = arith.addf %184, %185 : vector<16x16xf32>
    %c1_61 = arith.constant 1 : index
    %c80 = arith.constant 80 : index
    %c0_62 = arith.constant 0 : index
    %187 = vector.load %arg17[%c1_61, %c80, %c0_62] : memref<2x128x48xf32, #tpu.memory_space<vmem>>, vector<1x16x48xf32>
    %188 = vector.shape_cast %187 : vector<1x16x48xf32> to vector<16x48xf32>
    %189 = vector.extract_strided_slice %188 {offsets = [0, 0], sizes = [16, 16], strides = [1, 1]} : vector<16x48xf32> to vector<16x16xf32>
    %190 = vector.extract_strided_slice %158 {offsets = [0, 0], sizes = [16, 16], strides = [1, 1]} : vector<16x48xf32> to vector<16x16xf32>
    %191 = arith.addf %189, %190 : vector<16x16xf32>
    %192 = arith.negf %191 : vector<16x16xf32>
    %193 = math.exp %192 : vector<16x16xf32>
    %cst_63 = arith.constant 1.000000e+00 : f32
    %194 = vector.broadcast %cst_63 : f32 to vector<16x16xf32>
    %195 = arith.addf %194, %193 : vector<16x16xf32>
    %196 = arith.divf %194, %195 : vector<16x16xf32>
    %197 = vector.extract_strided_slice %188 {offsets = [0, 16], sizes = [16, 16], strides = [1, 1]} : vector<16x48xf32> to vector<16x16xf32>
    %198 = vector.extract_strided_slice %158 {offsets = [0, 16], sizes = [16, 16], strides = [1, 1]} : vector<16x48xf32> to vector<16x16xf32>
    %199 = arith.addf %197, %198 : vector<16x16xf32>
    %200 = arith.negf %199 : vector<16x16xf32>
    %201 = math.exp %200 : vector<16x16xf32>
    %cst_64 = arith.constant 1.000000e+00 : f32
    %202 = vector.broadcast %cst_64 : f32 to vector<16x16xf32>
    %203 = arith.addf %202, %201 : vector<16x16xf32>
    %204 = arith.divf %202, %203 : vector<16x16xf32>
    %205 = vector.extract_strided_slice %188 {offsets = [0, 32], sizes = [16, 16], strides = [1, 1]} : vector<16x48xf32> to vector<16x16xf32>
    %206 = vector.extract_strided_slice %158 {offsets = [0, 32], sizes = [16, 16], strides = [1, 1]} : vector<16x48xf32> to vector<16x16xf32>
    %207 = arith.mulf %196, %206 : vector<16x16xf32>
    %208 = arith.addf %205, %207 : vector<16x16xf32>
    %209 = math.tanh %208 : vector<16x16xf32>
    %cst_65 = arith.constant 1.000000e+00 : f32
    %210 = vector.broadcast %cst_65 : f32 to vector<16x16xf32>
    %211 = arith.subf %210, %204 : vector<16x16xf32>
    %212 = arith.mulf %211, %209 : vector<16x16xf32>
    %213 = arith.mulf %204, %150 : vector<16x16xf32>
    %214 = arith.addf %212, %213 : vector<16x16xf32>
    %c32_66 = arith.constant 32 : index
    %c0_67 = arith.constant 0 : index
    %215 = vector.load %arg18[%c32_66, %c0_67] : memref<128x32xf32, #tpu.memory_space<vmem>>, vector<16x16xf32>
    tpu.vector_store %arg18[%c32_66, %c0_67], %186 {strides = array<i32>} : memref<128x32xf32, #tpu.memory_space<vmem>>, vector<16x16xf32>,
    %c80_68 = arith.constant 80 : index
    %c16_69 = arith.constant 16 : index
    %216 = vector.load %arg18[%c80_68, %c16_69] : memref<128x32xf32, #tpu.memory_space<vmem>>, vector<16x16xf32>
    tpu.vector_store %arg18[%c80_68, %c16_69], %214 {strides = array<i32>} : memref<128x32xf32, #tpu.memory_space<vmem>>, vector<16x16xf32>,
    %cst_70 = arith.constant dense<0.000000e+00> : vector<16x48xf32>
    %217 = tpu.matmul %186, %16, %cst_70 {dimension_numbers = #tpu.dot_dimension_numbers<[1], [0], [0], [1], [0, 0, 1, 1], [], []>} : vector<16x16xf32>, vector<16x48xf32>, vector<16x48xf32> -> vector<16x48xf32>
    %218 = vector.broadcast %19 : vector<1x48xf32> to vector<16x48xf32>
    %219 = arith.addf %217, %218 : vector<16x48xf32>
    %cst_71 = arith.constant dense<0.000000e+00> : vector<16x48xf32>
    %220 = tpu.matmul %214, %17, %cst_71 {dimension_numbers = #tpu.dot_dimension_numbers<[1], [0], [0], [1], [0, 0, 1, 1], [], []>} : vector<16x16xf32>, vector<16x48xf32>, vector<16x48xf32> -> vector<16x48xf32>
    %221 = vector.broadcast %20 : vector<1x48xf32> to vector<16x48xf32>
    %222 = arith.addf %220, %221 : vector<16x48xf32>
    %c0_72 = arith.constant 0 : index
    %c48 = arith.constant 48 : index
    %c0_73 = arith.constant 0 : index
    %223 = vector.load %arg17[%c0_72, %c48, %c0_73] : memref<2x128x48xf32, #tpu.memory_space<vmem>>, vector<1x16x48xf32>
    %224 = vector.shape_cast %223 : vector<1x16x48xf32> to vector<16x48xf32>
    %225 = vector.extract_strided_slice %224 {offsets = [0, 0], sizes = [16, 16], strides = [1, 1]} : vector<16x48xf32> to vector<16x16xf32>
    %226 = vector.extract_strided_slice %219 {offsets = [0, 0], sizes = [16, 16], strides = [1, 1]} : vector<16x48xf32> to vector<16x16xf32>
    %227 = arith.addf %225, %226 : vector<16x16xf32>
    %228 = arith.negf %227 : vector<16x16xf32>
    %229 = math.exp %228 : vector<16x16xf32>
    %cst_74 = arith.constant 1.000000e+00 : f32
    %230 = vector.broadcast %cst_74 : f32 to vector<16x16xf32>
    %231 = arith.addf %230, %229 : vector<16x16xf32>
    %232 = arith.divf %230, %231 : vector<16x16xf32>
    %233 = vector.extract_strided_slice %224 {offsets = [0, 16], sizes = [16, 16], strides = [1, 1]} : vector<16x48xf32> to vector<16x16xf32>
    %234 = vector.extract_strided_slice %219 {offsets = [0, 16], sizes = [16, 16], strides = [1, 1]} : vector<16x48xf32> to vector<16x16xf32>
    %235 = arith.addf %233, %234 : vector<16x16xf32>
    %236 = arith.negf %235 : vector<16x16xf32>
    %237 = math.exp %236 : vector<16x16xf32>
    %cst_75 = arith.constant 1.000000e+00 : f32
    %238 = vector.broadcast %cst_75 : f32 to vector<16x16xf32>
    %239 = arith.addf %238, %237 : vector<16x16xf32>
    %240 = arith.divf %238, %239 : vector<16x16xf32>
    %241 = vector.extract_strided_slice %224 {offsets = [0, 32], sizes = [16, 16], strides = [1, 1]} : vector<16x48xf32> to vector<16x16xf32>
    %242 = vector.extract_strided_slice %219 {offsets = [0, 32], sizes = [16, 16], strides = [1, 1]} : vector<16x48xf32> to vector<16x16xf32>
    %243 = arith.mulf %232, %242 : vector<16x16xf32>
    %244 = arith.addf %241, %243 : vector<16x16xf32>
    %245 = math.tanh %244 : vector<16x16xf32>
    %cst_76 = arith.constant 1.000000e+00 : f32
    %246 = vector.broadcast %cst_76 : f32 to vector<16x16xf32>
    %247 = arith.subf %246, %240 : vector<16x16xf32>
    %248 = arith.mulf %247, %245 : vector<16x16xf32>
    %249 = arith.mulf %240, %186 : vector<16x16xf32>
    %250 = arith.addf %248, %249 : vector<16x16xf32>
    %c1_77 = arith.constant 1 : index
    %c64 = arith.constant 64 : index
    %c0_78 = arith.constant 0 : index
    %251 = vector.load %arg17[%c1_77, %c64, %c0_78] : memref<2x128x48xf32, #tpu.memory_space<vmem>>, vector<1x16x48xf32>
    %252 = vector.shape_cast %251 : vector<1x16x48xf32> to vector<16x48xf32>
    %253 = vector.extract_strided_slice %252 {offsets = [0, 0], sizes = [16, 16], strides = [1, 1]} : vector<16x48xf32> to vector<16x16xf32>
    %254 = vector.extract_strided_slice %222 {offsets = [0, 0], sizes = [16, 16], strides = [1, 1]} : vector<16x48xf32> to vector<16x16xf32>
    %255 = arith.addf %253, %254 : vector<16x16xf32>
    %256 = arith.negf %255 : vector<16x16xf32>
    %257 = math.exp %256 : vector<16x16xf32>
    %cst_79 = arith.constant 1.000000e+00 : f32
    %258 = vector.broadcast %cst_79 : f32 to vector<16x16xf32>
    %259 = arith.addf %258, %257 : vector<16x16xf32>
    %260 = arith.divf %258, %259 : vector<16x16xf32>
    %261 = vector.extract_strided_slice %252 {offsets = [0, 16], sizes = [16, 16], strides = [1, 1]} : vector<16x48xf32> to vector<16x16xf32>
    %262 = vector.extract_strided_slice %222 {offsets = [0, 16], sizes = [16, 16], strides = [1, 1]} : vector<16x48xf32> to vector<16x16xf32>
    %263 = arith.addf %261, %262 : vector<16x16xf32>
    %264 = arith.negf %263 : vector<16x16xf32>
    %265 = math.exp %264 : vector<16x16xf32>
    %cst_80 = arith.constant 1.000000e+00 : f32
    %266 = vector.broadcast %cst_80 : f32 to vector<16x16xf32>
    %267 = arith.addf %266, %265 : vector<16x16xf32>
    %268 = arith.divf %266, %267 : vector<16x16xf32>
    %269 = vector.extract_strided_slice %252 {offsets = [0, 32], sizes = [16, 16], strides = [1, 1]} : vector<16x48xf32> to vector<16x16xf32>
    %270 = vector.extract_strided_slice %222 {offsets = [0, 32], sizes = [16, 16], strides = [1, 1]} : vector<16x48xf32> to vector<16x16xf32>
    %271 = arith.mulf %260, %270 : vector<16x16xf32>
    %272 = arith.addf %269, %271 : vector<16x16xf32>
    %273 = math.tanh %272 : vector<16x16xf32>
    %cst_81 = arith.constant 1.000000e+00 : f32
    %274 = vector.broadcast %cst_81 : f32 to vector<16x16xf32>
    %275 = arith.subf %274, %268 : vector<16x16xf32>
    %276 = arith.mulf %275, %273 : vector<16x16xf32>
    %277 = arith.mulf %268, %214 : vector<16x16xf32>
    %278 = arith.addf %276, %277 : vector<16x16xf32>
    %c48_82 = arith.constant 48 : index
    %c0_83 = arith.constant 0 : index
    %279 = vector.load %arg18[%c48_82, %c0_83] : memref<128x32xf32, #tpu.memory_space<vmem>>, vector<16x16xf32>
    tpu.vector_store %arg18[%c48_82, %c0_83], %250 {strides = array<i32>} : memref<128x32xf32, #tpu.memory_space<vmem>>, vector<16x16xf32>,
    %c64_84 = arith.constant 64 : index
    %c16_85 = arith.constant 16 : index
    %280 = vector.load %arg18[%c64_84, %c16_85] : memref<128x32xf32, #tpu.memory_space<vmem>>, vector<16x16xf32>
    tpu.vector_store %arg18[%c64_84, %c16_85], %278 {strides = array<i32>} : memref<128x32xf32, #tpu.memory_space<vmem>>, vector<16x16xf32>,
    %cst_86 = arith.constant dense<0.000000e+00> : vector<16x48xf32>
    %281 = tpu.matmul %250, %16, %cst_86 {dimension_numbers = #tpu.dot_dimension_numbers<[1], [0], [0], [1], [0, 0, 1, 1], [], []>} : vector<16x16xf32>, vector<16x48xf32>, vector<16x48xf32> -> vector<16x48xf32>
    %282 = vector.broadcast %19 : vector<1x48xf32> to vector<16x48xf32>
    %283 = arith.addf %281, %282 : vector<16x48xf32>
    %cst_87 = arith.constant dense<0.000000e+00> : vector<16x48xf32>
    %284 = tpu.matmul %278, %17, %cst_87 {dimension_numbers = #tpu.dot_dimension_numbers<[1], [0], [0], [1], [0, 0, 1, 1], [], []>} : vector<16x16xf32>, vector<16x48xf32>, vector<16x48xf32> -> vector<16x48xf32>
    %285 = vector.broadcast %20 : vector<1x48xf32> to vector<16x48xf32>
    %286 = arith.addf %284, %285 : vector<16x48xf32>
    %c0_88 = arith.constant 0 : index
    %c64_89 = arith.constant 64 : index
    %c0_90 = arith.constant 0 : index
    %287 = vector.load %arg17[%c0_88, %c64_89, %c0_90] : memref<2x128x48xf32, #tpu.memory_space<vmem>>, vector<1x16x48xf32>
    %288 = vector.shape_cast %287 : vector<1x16x48xf32> to vector<16x48xf32>
    %289 = vector.extract_strided_slice %288 {offsets = [0, 0], sizes = [16, 16], strides = [1, 1]} : vector<16x48xf32> to vector<16x16xf32>
    %290 = vector.extract_strided_slice %283 {offsets = [0, 0], sizes = [16, 16], strides = [1, 1]} : vector<16x48xf32> to vector<16x16xf32>
    %291 = arith.addf %289, %290 : vector<16x16xf32>
    %292 = arith.negf %291 : vector<16x16xf32>
    %293 = math.exp %292 : vector<16x16xf32>
    %cst_91 = arith.constant 1.000000e+00 : f32
    %294 = vector.broadcast %cst_91 : f32 to vector<16x16xf32>
    %295 = arith.addf %294, %293 : vector<16x16xf32>
    %296 = arith.divf %294, %295 : vector<16x16xf32>
    %297 = vector.extract_strided_slice %288 {offsets = [0, 16], sizes = [16, 16], strides = [1, 1]} : vector<16x48xf32> to vector<16x16xf32>
    %298 = vector.extract_strided_slice %283 {offsets = [0, 16], sizes = [16, 16], strides = [1, 1]} : vector<16x48xf32> to vector<16x16xf32>
    %299 = arith.addf %297, %298 : vector<16x16xf32>
    %300 = arith.negf %299 : vector<16x16xf32>
    %301 = math.exp %300 : vector<16x16xf32>
    %cst_92 = arith.constant 1.000000e+00 : f32
    %302 = vector.broadcast %cst_92 : f32 to vector<16x16xf32>
    %303 = arith.addf %302, %301 : vector<16x16xf32>
    %304 = arith.divf %302, %303 : vector<16x16xf32>
    %305 = vector.extract_strided_slice %288 {offsets = [0, 32], sizes = [16, 16], strides = [1, 1]} : vector<16x48xf32> to vector<16x16xf32>
    %306 = vector.extract_strided_slice %283 {offsets = [0, 32], sizes = [16, 16], strides = [1, 1]} : vector<16x48xf32> to vector<16x16xf32>
    %307 = arith.mulf %296, %306 : vector<16x16xf32>
    %308 = arith.addf %305, %307 : vector<16x16xf32>
    %309 = math.tanh %308 : vector<16x16xf32>
    %cst_93 = arith.constant 1.000000e+00 : f32
    %310 = vector.broadcast %cst_93 : f32 to vector<16x16xf32>
    %311 = arith.subf %310, %304 : vector<16x16xf32>
    %312 = arith.mulf %311, %309 : vector<16x16xf32>
    %313 = arith.mulf %304, %250 : vector<16x16xf32>
    %314 = arith.addf %312, %313 : vector<16x16xf32>
    %c1_94 = arith.constant 1 : index
    %c48_95 = arith.constant 48 : index
    %c0_96 = arith.constant 0 : index
    %315 = vector.load %arg17[%c1_94, %c48_95, %c0_96] : memref<2x128x48xf32, #tpu.memory_space<vmem>>, vector<1x16x48xf32>
    %316 = vector.shape_cast %315 : vector<1x16x48xf32> to vector<16x48xf32>
    %317 = vector.extract_strided_slice %316 {offsets = [0, 0], sizes = [16, 16], strides = [1, 1]} : vector<16x48xf32> to vector<16x16xf32>
    %318 = vector.extract_strided_slice %286 {offsets = [0, 0], sizes = [16, 16], strides = [1, 1]} : vector<16x48xf32> to vector<16x16xf32>
    %319 = arith.addf %317, %318 : vector<16x16xf32>
    %320 = arith.negf %319 : vector<16x16xf32>
    %321 = math.exp %320 : vector<16x16xf32>
    %cst_97 = arith.constant 1.000000e+00 : f32
    %322 = vector.broadcast %cst_97 : f32 to vector<16x16xf32>
    %323 = arith.addf %322, %321 : vector<16x16xf32>
    %324 = arith.divf %322, %323 : vector<16x16xf32>
    %325 = vector.extract_strided_slice %316 {offsets = [0, 16], sizes = [16, 16], strides = [1, 1]} : vector<16x48xf32> to vector<16x16xf32>
    %326 = vector.extract_strided_slice %286 {offsets = [0, 16], sizes = [16, 16], strides = [1, 1]} : vector<16x48xf32> to vector<16x16xf32>
    %327 = arith.addf %325, %326 : vector<16x16xf32>
    %328 = arith.negf %327 : vector<16x16xf32>
    %329 = math.exp %328 : vector<16x16xf32>
    %cst_98 = arith.constant 1.000000e+00 : f32
    %330 = vector.broadcast %cst_98 : f32 to vector<16x16xf32>
    %331 = arith.addf %330, %329 : vector<16x16xf32>
    %332 = arith.divf %330, %331 : vector<16x16xf32>
    %333 = vector.extract_strided_slice %316 {offsets = [0, 32], sizes = [16, 16], strides = [1, 1]} : vector<16x48xf32> to vector<16x16xf32>
    %334 = vector.extract_strided_slice %286 {offsets = [0, 32], sizes = [16, 16], strides = [1, 1]} : vector<16x48xf32> to vector<16x16xf32>
    %335 = arith.mulf %324, %334 : vector<16x16xf32>
    %336 = arith.addf %333, %335 : vector<16x16xf32>
    %337 = math.tanh %336 : vector<16x16xf32>
    %cst_99 = arith.constant 1.000000e+00 : f32
    %338 = vector.broadcast %cst_99 : f32 to vector<16x16xf32>
    %339 = arith.subf %338, %332 : vector<16x16xf32>
    %340 = arith.mulf %339, %337 : vector<16x16xf32>
    %341 = arith.mulf %332, %278 : vector<16x16xf32>
    %342 = arith.addf %340, %341 : vector<16x16xf32>
    %c64_100 = arith.constant 64 : index
    %c0_101 = arith.constant 0 : index
    %343 = vector.load %arg18[%c64_100, %c0_101] : memref<128x32xf32, #tpu.memory_space<vmem>>, vector<16x16xf32>
    tpu.vector_store %arg18[%c64_100, %c0_101], %314 {strides = array<i32>} : memref<128x32xf32, #tpu.memory_space<vmem>>, vector<16x16xf32>,
    %c48_102 = arith.constant 48 : index
    %c16_103 = arith.constant 16 : index
    %344 = vector.load %arg18[%c48_102, %c16_103] : memref<128x32xf32, #tpu.memory_space<vmem>>, vector<16x16xf32>
    tpu.vector_store %arg18[%c48_102, %c16_103], %342 {strides = array<i32>} : memref<128x32xf32, #tpu.memory_space<vmem>>, vector<16x16xf32>,
    %cst_104 = arith.constant dense<0.000000e+00> : vector<16x48xf32>
    %345 = tpu.matmul %314, %16, %cst_104 {dimension_numbers = #tpu.dot_dimension_numbers<[1], [0], [0], [1], [0, 0, 1, 1], [], []>} : vector<16x16xf32>, vector<16x48xf32>, vector<16x48xf32> -> vector<16x48xf32>
    %346 = vector.broadcast %19 : vector<1x48xf32> to vector<16x48xf32>
    %347 = arith.addf %345, %346 : vector<16x48xf32>
    %cst_105 = arith.constant dense<0.000000e+00> : vector<16x48xf32>
    %348 = tpu.matmul %342, %17, %cst_105 {dimension_numbers = #tpu.dot_dimension_numbers<[1], [0], [0], [1], [0, 0, 1, 1], [], []>} : vector<16x16xf32>, vector<16x48xf32>, vector<16x48xf32> -> vector<16x48xf32>
    %349 = vector.broadcast %20 : vector<1x48xf32> to vector<16x48xf32>
    %350 = arith.addf %348, %349 : vector<16x48xf32>
    %c0_106 = arith.constant 0 : index
    %c80_107 = arith.constant 80 : index
    %c0_108 = arith.constant 0 : index
    %351 = vector.load %arg17[%c0_106, %c80_107, %c0_108] : memref<2x128x48xf32, #tpu.memory_space<vmem>>, vector<1x16x48xf32>
    %352 = vector.shape_cast %351 : vector<1x16x48xf32> to vector<16x48xf32>
    %353 = vector.extract_strided_slice %352 {offsets = [0, 0], sizes = [16, 16], strides = [1, 1]} : vector<16x48xf32> to vector<16x16xf32>
    %354 = vector.extract_strided_slice %347 {offsets = [0, 0], sizes = [16, 16], strides = [1, 1]} : vector<16x48xf32> to vector<16x16xf32>
    %355 = arith.addf %353, %354 : vector<16x16xf32>
    %356 = arith.negf %355 : vector<16x16xf32>
    %357 = math.exp %356 : vector<16x16xf32>
    %cst_109 = arith.constant 1.000000e+00 : f32
    %358 = vector.broadcast %cst_109 : f32 to vector<16x16xf32>
    %359 = arith.addf %358, %357 : vector<16x16xf32>
    %360 = arith.divf %358, %359 : vector<16x16xf32>
    %361 = vector.extract_strided_slice %352 {offsets = [0, 16], sizes = [16, 16], strides = [1, 1]} : vector<16x48xf32> to vector<16x16xf32>
    %362 = vector.extract_strided_slice %347 {offsets = [0, 16], sizes = [16, 16], strides = [1, 1]} : vector<16x48xf32> to vector<16x16xf32>
    %363 = arith.addf %361, %362 : vector<16x16xf32>
    %364 = arith.negf %363 : vector<16x16xf32>
    %365 = math.exp %364 : vector<16x16xf32>
    %cst_110 = arith.constant 1.000000e+00 : f32
    %366 = vector.broadcast %cst_110 : f32 to vector<16x16xf32>
    %367 = arith.addf %366, %365 : vector<16x16xf32>
    %368 = arith.divf %366, %367 : vector<16x16xf32>
    %369 = vector.extract_strided_slice %352 {offsets = [0, 32], sizes = [16, 16], strides = [1, 1]} : vector<16x48xf32> to vector<16x16xf32>
    %370 = vector.extract_strided_slice %347 {offsets = [0, 32], sizes = [16, 16], strides = [1, 1]} : vector<16x48xf32> to vector<16x16xf32>
    %371 = arith.mulf %360, %370 : vector<16x16xf32>
    %372 = arith.addf %369, %371 : vector<16x16xf32>
    %373 = math.tanh %372 : vector<16x16xf32>
    %cst_111 = arith.constant 1.000000e+00 : f32
    %374 = vector.broadcast %cst_111 : f32 to vector<16x16xf32>
    %375 = arith.subf %374, %368 : vector<16x16xf32>
    %376 = arith.mulf %375, %373 : vector<16x16xf32>
    %377 = arith.mulf %368, %314 : vector<16x16xf32>
    %378 = arith.addf %376, %377 : vector<16x16xf32>
    %c1_112 = arith.constant 1 : index
    %c32_113 = arith.constant 32 : index
    %c0_114 = arith.constant 0 : index
    %379 = vector.load %arg17[%c1_112, %c32_113, %c0_114] : memref<2x128x48xf32, #tpu.memory_space<vmem>>, vector<1x16x48xf32>
    %380 = vector.shape_cast %379 : vector<1x16x48xf32> to vector<16x48xf32>
    %381 = vector.extract_strided_slice %380 {offsets = [0, 0], sizes = [16, 16], strides = [1, 1]} : vector<16x48xf32> to vector<16x16xf32>
    %382 = vector.extract_strided_slice %350 {offsets = [0, 0], sizes = [16, 16], strides = [1, 1]} : vector<16x48xf32> to vector<16x16xf32>
    %383 = arith.addf %381, %382 : vector<16x16xf32>
    %384 = arith.negf %383 : vector<16x16xf32>
    %385 = math.exp %384 : vector<16x16xf32>
    %cst_115 = arith.constant 1.000000e+00 : f32
    %386 = vector.broadcast %cst_115 : f32 to vector<16x16xf32>
    %387 = arith.addf %386, %385 : vector<16x16xf32>
    %388 = arith.divf %386, %387 : vector<16x16xf32>
    %389 = vector.extract_strided_slice %380 {offsets = [0, 16], sizes = [16, 16], strides = [1, 1]} : vector<16x48xf32> to vector<16x16xf32>
    %390 = vector.extract_strided_slice %350 {offsets = [0, 16], sizes = [16, 16], strides = [1, 1]} : vector<16x48xf32> to vector<16x16xf32>
    %391 = arith.addf %389, %390 : vector<16x16xf32>
    %392 = arith.negf %391 : vector<16x16xf32>
    %393 = math.exp %392 : vector<16x16xf32>
    %cst_116 = arith.constant 1.000000e+00 : f32
    %394 = vector.broadcast %cst_116 : f32 to vector<16x16xf32>
    %395 = arith.addf %394, %393 : vector<16x16xf32>
    %396 = arith.divf %394, %395 : vector<16x16xf32>
    %397 = vector.extract_strided_slice %380 {offsets = [0, 32], sizes = [16, 16], strides = [1, 1]} : vector<16x48xf32> to vector<16x16xf32>
    %398 = vector.extract_strided_slice %350 {offsets = [0, 32], sizes = [16, 16], strides = [1, 1]} : vector<16x48xf32> to vector<16x16xf32>
    %399 = arith.mulf %388, %398 : vector<16x16xf32>
    %400 = arith.addf %397, %399 : vector<16x16xf32>
    %401 = math.tanh %400 : vector<16x16xf32>
    %cst_117 = arith.constant 1.000000e+00 : f32
    %402 = vector.broadcast %cst_117 : f32 to vector<16x16xf32>
    %403 = arith.subf %402, %396 : vector<16x16xf32>
    %404 = arith.mulf %403, %401 : vector<16x16xf32>
    %405 = arith.mulf %396, %342 : vector<16x16xf32>
    %406 = arith.addf %404, %405 : vector<16x16xf32>
    %c80_118 = arith.constant 80 : index
    %c0_119 = arith.constant 0 : index
    %407 = vector.load %arg18[%c80_118, %c0_119] : memref<128x32xf32, #tpu.memory_space<vmem>>, vector<16x16xf32>
    tpu.vector_store %arg18[%c80_118, %c0_119], %378 {strides = array<i32>} : memref<128x32xf32, #tpu.memory_space<vmem>>, vector<16x16xf32>,
    %c32_120 = arith.constant 32 : index
    %c16_121 = arith.constant 16 : index
    %408 = vector.load %arg18[%c32_120, %c16_121] : memref<128x32xf32, #tpu.memory_space<vmem>>, vector<16x16xf32>
    tpu.vector_store %arg18[%c32_120, %c16_121], %406 {strides = array<i32>} : memref<128x32xf32, #tpu.memory_space<vmem>>, vector<16x16xf32>,
    %cst_122 = arith.constant dense<0.000000e+00> : vector<16x48xf32>
    %409 = tpu.matmul %378, %16, %cst_122 {dimension_numbers = #tpu.dot_dimension_numbers<[1], [0], [0], [1], [0, 0, 1, 1], [], []>} : vector<16x16xf32>, vector<16x48xf32>, vector<16x48xf32> -> vector<16x48xf32>
    %410 = vector.broadcast %19 : vector<1x48xf32> to vector<16x48xf32>
    %411 = arith.addf %409, %410 : vector<16x48xf32>
    %cst_123 = arith.constant dense<0.000000e+00> : vector<16x48xf32>
    %412 = tpu.matmul %406, %17, %cst_123 {dimension_numbers = #tpu.dot_dimension_numbers<[1], [0], [0], [1], [0, 0, 1, 1], [], []>} : vector<16x16xf32>, vector<16x48xf32>, vector<16x48xf32> -> vector<16x48xf32>
    %413 = vector.broadcast %20 : vector<1x48xf32> to vector<16x48xf32>
    %414 = arith.addf %412, %413 : vector<16x48xf32>
    %c0_124 = arith.constant 0 : index
    %c96_125 = arith.constant 96 : index
    %c0_126 = arith.constant 0 : index
    %415 = vector.load %arg17[%c0_124, %c96_125, %c0_126] : memref<2x128x48xf32, #tpu.memory_space<vmem>>, vector<1x16x48xf32>
    %416 = vector.shape_cast %415 : vector<1x16x48xf32> to vector<16x48xf32>
    %417 = vector.extract_strided_slice %416 {offsets = [0, 0], sizes = [16, 16], strides = [1, 1]} : vector<16x48xf32> to vector<16x16xf32>
    %418 = vector.extract_strided_slice %411 {offsets = [0, 0], sizes = [16, 16], strides = [1, 1]} : vector<16x48xf32> to vector<16x16xf32>
    %419 = arith.addf %417, %418 : vector<16x16xf32>
    %420 = arith.negf %419 : vector<16x16xf32>
    %421 = math.exp %420 : vector<16x16xf32>
    %cst_127 = arith.constant 1.000000e+00 : f32
    %422 = vector.broadcast %cst_127 : f32 to vector<16x16xf32>
    %423 = arith.addf %422, %421 : vector<16x16xf32>
    %424 = arith.divf %422, %423 : vector<16x16xf32>
    %425 = vector.extract_strided_slice %416 {offsets = [0, 16], sizes = [16, 16], strides = [1, 1]} : vector<16x48xf32> to vector<16x16xf32>
    %426 = vector.extract_strided_slice %411 {offsets = [0, 16], sizes = [16, 16], strides = [1, 1]} : vector<16x48xf32> to vector<16x16xf32>
    %427 = arith.addf %425, %426 : vector<16x16xf32>
    %428 = arith.negf %427 : vector<16x16xf32>
    %429 = math.exp %428 : vector<16x16xf32>
    %cst_128 = arith.constant 1.000000e+00 : f32
    %430 = vector.broadcast %cst_128 : f32 to vector<16x16xf32>
    %431 = arith.addf %430, %429 : vector<16x16xf32>
    %432 = arith.divf %430, %431 : vector<16x16xf32>
    %433 = vector.extract_strided_slice %416 {offsets = [0, 32], sizes = [16, 16], strides = [1, 1]} : vector<16x48xf32> to vector<16x16xf32>
    %434 = vector.extract_strided_slice %411 {offsets = [0, 32], sizes = [16, 16], strides = [1, 1]} : vector<16x48xf32> to vector<16x16xf32>
    %435 = arith.mulf %424, %434 : vector<16x16xf32>
    %436 = arith.addf %433, %435 : vector<16x16xf32>
    %437 = math.tanh %436 : vector<16x16xf32>
    %cst_129 = arith.constant 1.000000e+00 : f32
    %438 = vector.broadcast %cst_129 : f32 to vector<16x16xf32>
    %439 = arith.subf %438, %432 : vector<16x16xf32>
    %440 = arith.mulf %439, %437 : vector<16x16xf32>
    %441 = arith.mulf %432, %378 : vector<16x16xf32>
    %442 = arith.addf %440, %441 : vector<16x16xf32>
    %c1_130 = arith.constant 1 : index
    %c16_131 = arith.constant 16 : index
    %c0_132 = arith.constant 0 : index
    %443 = vector.load %arg17[%c1_130, %c16_131, %c0_132] : memref<2x128x48xf32, #tpu.memory_space<vmem>>, vector<1x16x48xf32>
    %444 = vector.shape_cast %443 : vector<1x16x48xf32> to vector<16x48xf32>
    %445 = vector.extract_strided_slice %444 {offsets = [0, 0], sizes = [16, 16], strides = [1, 1]} : vector<16x48xf32> to vector<16x16xf32>
    %446 = vector.extract_strided_slice %414 {offsets = [0, 0], sizes = [16, 16], strides = [1, 1]} : vector<16x48xf32> to vector<16x16xf32>
    %447 = arith.addf %445, %446 : vector<16x16xf32>
    %448 = arith.negf %447 : vector<16x16xf32>
    %449 = math.exp %448 : vector<16x16xf32>
    %cst_133 = arith.constant 1.000000e+00 : f32
    %450 = vector.broadcast %cst_133 : f32 to vector<16x16xf32>
    %451 = arith.addf %450, %449 : vector<16x16xf32>
    %452 = arith.divf %450, %451 : vector<16x16xf32>
    %453 = vector.extract_strided_slice %444 {offsets = [0, 16], sizes = [16, 16], strides = [1, 1]} : vector<16x48xf32> to vector<16x16xf32>
    %454 = vector.extract_strided_slice %414 {offsets = [0, 16], sizes = [16, 16], strides = [1, 1]} : vector<16x48xf32> to vector<16x16xf32>
    %455 = arith.addf %453, %454 : vector<16x16xf32>
    %456 = arith.negf %455 : vector<16x16xf32>
    %457 = math.exp %456 : vector<16x16xf32>
    %cst_134 = arith.constant 1.000000e+00 : f32
    %458 = vector.broadcast %cst_134 : f32 to vector<16x16xf32>
    %459 = arith.addf %458, %457 : vector<16x16xf32>
    %460 = arith.divf %458, %459 : vector<16x16xf32>
    %461 = vector.extract_strided_slice %444 {offsets = [0, 32], sizes = [16, 16], strides = [1, 1]} : vector<16x48xf32> to vector<16x16xf32>
    %462 = vector.extract_strided_slice %414 {offsets = [0, 32], sizes = [16, 16], strides = [1, 1]} : vector<16x48xf32> to vector<16x16xf32>
    %463 = arith.mulf %452, %462 : vector<16x16xf32>
    %464 = arith.addf %461, %463 : vector<16x16xf32>
    %465 = math.tanh %464 : vector<16x16xf32>
    %cst_135 = arith.constant 1.000000e+00 : f32
    %466 = vector.broadcast %cst_135 : f32 to vector<16x16xf32>
    %467 = arith.subf %466, %460 : vector<16x16xf32>
    %468 = arith.mulf %467, %465 : vector<16x16xf32>
    %469 = arith.mulf %460, %406 : vector<16x16xf32>
    %470 = arith.addf %468, %469 : vector<16x16xf32>
    %c96_136 = arith.constant 96 : index
    %c0_137 = arith.constant 0 : index
    %471 = vector.load %arg18[%c96_136, %c0_137] : memref<128x32xf32, #tpu.memory_space<vmem>>, vector<16x16xf32>
    tpu.vector_store %arg18[%c96_136, %c0_137], %442 {strides = array<i32>} : memref<128x32xf32, #tpu.memory_space<vmem>>, vector<16x16xf32>,
    %c16_138 = arith.constant 16 : index
    %c16_139 = arith.constant 16 : index
    %472 = vector.load %arg18[%c16_138, %c16_139] : memref<128x32xf32, #tpu.memory_space<vmem>>, vector<16x16xf32>
    tpu.vector_store %arg18[%c16_138, %c16_139], %470 {strides = array<i32>} : memref<128x32xf32, #tpu.memory_space<vmem>>, vector<16x16xf32>,
    %cst_140 = arith.constant dense<0.000000e+00> : vector<16x48xf32>
    %473 = tpu.matmul %442, %16, %cst_140 {dimension_numbers = #tpu.dot_dimension_numbers<[1], [0], [0], [1], [0, 0, 1, 1], [], []>} : vector<16x16xf32>, vector<16x48xf32>, vector<16x48xf32> -> vector<16x48xf32>
    %474 = vector.broadcast %19 : vector<1x48xf32> to vector<16x48xf32>
    %475 = arith.addf %473, %474 : vector<16x48xf32>
    %cst_141 = arith.constant dense<0.000000e+00> : vector<16x48xf32>
    %476 = tpu.matmul %470, %17, %cst_141 {dimension_numbers = #tpu.dot_dimension_numbers<[1], [0], [0], [1], [0, 0, 1, 1], [], []>} : vector<16x16xf32>, vector<16x48xf32>, vector<16x48xf32> -> vector<16x48xf32>
    %477 = vector.broadcast %20 : vector<1x48xf32> to vector<16x48xf32>
    %478 = arith.addf %476, %477 : vector<16x48xf32>
    %c0_142 = arith.constant 0 : index
    %c112_143 = arith.constant 112 : index
    %c0_144 = arith.constant 0 : index
    %479 = vector.load %arg17[%c0_142, %c112_143, %c0_144] : memref<2x128x48xf32, #tpu.memory_space<vmem>>, vector<1x16x48xf32>
    %480 = vector.shape_cast %479 : vector<1x16x48xf32> to vector<16x48xf32>
    %481 = vector.extract_strided_slice %480 {offsets = [0, 0], sizes = [16, 16], strides = [1, 1]} : vector<16x48xf32> to vector<16x16xf32>
    %482 = vector.extract_strided_slice %475 {offsets = [0, 0], sizes = [16, 16], strides = [1, 1]} : vector<16x48xf32> to vector<16x16xf32>
    %483 = arith.addf %481, %482 : vector<16x16xf32>
    %484 = arith.negf %483 : vector<16x16xf32>
    %485 = math.exp %484 : vector<16x16xf32>
    %cst_145 = arith.constant 1.000000e+00 : f32
    %486 = vector.broadcast %cst_145 : f32 to vector<16x16xf32>
    %487 = arith.addf %486, %485 : vector<16x16xf32>
    %488 = arith.divf %486, %487 : vector<16x16xf32>
    %489 = vector.extract_strided_slice %480 {offsets = [0, 16], sizes = [16, 16], strides = [1, 1]} : vector<16x48xf32> to vector<16x16xf32>
    %490 = vector.extract_strided_slice %475 {offsets = [0, 16], sizes = [16, 16], strides = [1, 1]} : vector<16x48xf32> to vector<16x16xf32>
    %491 = arith.addf %489, %490 : vector<16x16xf32>
    %492 = arith.negf %491 : vector<16x16xf32>
    %493 = math.exp %492 : vector<16x16xf32>
    %cst_146 = arith.constant 1.000000e+00 : f32
    %494 = vector.broadcast %cst_146 : f32 to vector<16x16xf32>
    %495 = arith.addf %494, %493 : vector<16x16xf32>
    %496 = arith.divf %494, %495 : vector<16x16xf32>
    %497 = vector.extract_strided_slice %480 {offsets = [0, 32], sizes = [16, 16], strides = [1, 1]} : vector<16x48xf32> to vector<16x16xf32>
    %498 = vector.extract_strided_slice %475 {offsets = [0, 32], sizes = [16, 16], strides = [1, 1]} : vector<16x48xf32> to vector<16x16xf32>
    %499 = arith.mulf %488, %498 : vector<16x16xf32>
    %500 = arith.addf %497, %499 : vector<16x16xf32>
    %501 = math.tanh %500 : vector<16x16xf32>
    %cst_147 = arith.constant 1.000000e+00 : f32
    %502 = vector.broadcast %cst_147 : f32 to vector<16x16xf32>
    %503 = arith.subf %502, %496 : vector<16x16xf32>
    %504 = arith.mulf %503, %501 : vector<16x16xf32>
    %505 = arith.mulf %496, %442 : vector<16x16xf32>
    %506 = arith.addf %504, %505 : vector<16x16xf32>
    %c1_148 = arith.constant 1 : index
    %c0_149 = arith.constant 0 : index
    %c0_150 = arith.constant 0 : index
    %507 = vector.load %arg17[%c1_148, %c0_149, %c0_150] : memref<2x128x48xf32, #tpu.memory_space<vmem>>, vector<1x16x48xf32>
    %508 = vector.shape_cast %507 : vector<1x16x48xf32> to vector<16x48xf32>
    %509 = vector.extract_strided_slice %508 {offsets = [0, 0], sizes = [16, 16], strides = [1, 1]} : vector<16x48xf32> to vector<16x16xf32>
    %510 = vector.extract_strided_slice %478 {offsets = [0, 0], sizes = [16, 16], strides = [1, 1]} : vector<16x48xf32> to vector<16x16xf32>
    %511 = arith.addf %509, %510 : vector<16x16xf32>
    %512 = arith.negf %511 : vector<16x16xf32>
    %513 = math.exp %512 : vector<16x16xf32>
    %cst_151 = arith.constant 1.000000e+00 : f32
    %514 = vector.broadcast %cst_151 : f32 to vector<16x16xf32>
    %515 = arith.addf %514, %513 : vector<16x16xf32>
    %516 = arith.divf %514, %515 : vector<16x16xf32>
    %517 = vector.extract_strided_slice %508 {offsets = [0, 16], sizes = [16, 16], strides = [1, 1]} : vector<16x48xf32> to vector<16x16xf32>
    %518 = vector.extract_strided_slice %478 {offsets = [0, 16], sizes = [16, 16], strides = [1, 1]} : vector<16x48xf32> to vector<16x16xf32>
    %519 = arith.addf %517, %518 : vector<16x16xf32>
    %520 = arith.negf %519 : vector<16x16xf32>
    %521 = math.exp %520 : vector<16x16xf32>
    %cst_152 = arith.constant 1.000000e+00 : f32
    %522 = vector.broadcast %cst_152 : f32 to vector<16x16xf32>
    %523 = arith.addf %522, %521 : vector<16x16xf32>
    %524 = arith.divf %522, %523 : vector<16x16xf32>
    %525 = vector.extract_strided_slice %508 {offsets = [0, 32], sizes = [16, 16], strides = [1, 1]} : vector<16x48xf32> to vector<16x16xf32>
    %526 = vector.extract_strided_slice %478 {offsets = [0, 32], sizes = [16, 16], strides = [1, 1]} : vector<16x48xf32> to vector<16x16xf32>
    %527 = arith.mulf %516, %526 : vector<16x16xf32>
    %528 = arith.addf %525, %527 : vector<16x16xf32>
    %529 = math.tanh %528 : vector<16x16xf32>
    %cst_153 = arith.constant 1.000000e+00 : f32
    %530 = vector.broadcast %cst_153 : f32 to vector<16x16xf32>
    %531 = arith.subf %530, %524 : vector<16x16xf32>
    %532 = arith.mulf %531, %529 : vector<16x16xf32>
    %533 = arith.mulf %524, %470 : vector<16x16xf32>
    %534 = arith.addf %532, %533 : vector<16x16xf32>
    %c112_154 = arith.constant 112 : index
    %c0_155 = arith.constant 0 : index
    %535 = vector.load %arg18[%c112_154, %c0_155] : memref<128x32xf32, #tpu.memory_space<vmem>>, vector<16x16xf32>
    tpu.vector_store %arg18[%c112_154, %c0_155], %506 {strides = array<i32>} : memref<128x32xf32, #tpu.memory_space<vmem>>, vector<16x16xf32>,
    %c0_156 = arith.constant 0 : index
    %c16_157 = arith.constant 16 : index
    %536 = vector.load %arg18[%c0_156, %c16_157] : memref<128x32xf32, #tpu.memory_space<vmem>>, vector<16x16xf32>
    tpu.vector_store %arg18[%c0_156, %c16_157], %534 {strides = array<i32>} : memref<128x32xf32, #tpu.memory_space<vmem>>, vector<16x16xf32>,
    %c0_158 = arith.constant 0 : index
    %c0_159 = arith.constant 0 : index
    %c0_160 = arith.constant 0 : index
    %537 = vector.load %arg15[%c0_158, %c0_159, %c0_160] : memref<2x16x16xf32, #tpu.memory_space<vmem>>, vector<1x16x16xf32>
    %538 = vector.shape_cast %537 : vector<1x16x16xf32> to vector<16x16xf32>
    %539 = vector.shape_cast %506 : vector<16x16xf32> to vector<1x16x16xf32>
    tpu.vector_store %arg15[%c0_158, %c0_159, %c0_160], %539 {strides = array<i32>} : memref<2x16x16xf32, #tpu.memory_space<vmem>>, vector<1x16x16xf32>,
    %c1_161 = arith.constant 1 : index
    %c0_162 = arith.constant 0 : index
    %c0_163 = arith.constant 0 : index
    %540 = vector.load %arg15[%c1_161, %c0_162, %c0_163] : memref<2x16x16xf32, #tpu.memory_space<vmem>>, vector<1x16x16xf32>
    %541 = vector.shape_cast %540 : vector<1x16x16xf32> to vector<16x16xf32>
    %542 = vector.shape_cast %534 : vector<16x16xf32> to vector<1x16x16xf32>
    tpu.vector_store %arg15[%c1_161, %c0_162, %c0_163], %542 {strides = array<i32>} : memref<2x16x16xf32, #tpu.memory_space<vmem>>, vector<1x16x16xf32>,
    %c0_164 = arith.constant 0 : index
    %c0_165 = arith.constant 0 : index
    %543 = vector.load %arg18[%c0_164, %c0_165] : memref<128x32xf32, #tpu.memory_space<vmem>>, vector<128x32xf32>
    %c0_166 = arith.constant 0 : index
    %c0_167 = arith.constant 0 : index
    %544 = vector.load %arg7[%c0_166, %c0_167] : memref<32x32xf32, #tpu.memory_space<vmem>>, vector<32x32xf32>
    %cst_168 = arith.constant dense<0.000000e+00> : vector<128x32xf32>
    %545 = tpu.matmul %543, %544, %cst_168 {dimension_numbers = #tpu.dot_dimension_numbers<[1], [0], [0], [1], [0, 0, 1, 1], [], []>} : vector<128x32xf32>, vector<32x32xf32>, vector<128x32xf32> -> vector<128x32xf32>
    %c0_169 = arith.constant 0 : index
    %c0_170 = arith.constant 0 : index
    %546 = vector.load %arg8[%c0_169, %c0_170] : memref<1x32xf32, #tpu.memory_space<vmem>>, vector<1x32xf32>
    %547 = vector.broadcast %546 : vector<1x32xf32> to vector<128x32xf32>
    %548 = arith.addf %545, %547 : vector<128x32xf32>
    %549 = math.tanh %548 : vector<128x32xf32>
    %c0_171 = arith.constant 0 : index
    %c0_172 = arith.constant 0 : index
    %550 = vector.load %arg9[%c0_171, %c0_172] : memref<1x32xf32, #tpu.memory_space<vmem>>, vector<1x32xf32>
    %551 = vector.broadcast %550 : vector<1x32xf32> to vector<128x32xf32>
    %552 = arith.mulf %549, %551 : vector<128x32xf32>
    %cst_173 = arith.constant dense<0.000000e+00> : vector<128xf32>
    %553 = vector.multi_reduction <add>, %552, %cst_173 [1] : vector<128x32xf32> to vector<128xf32>
    %554 = vector.shape_cast %553 : vector<128xf32> to vector<128x1xf32>
    %555 = vector.shape_cast %554 : vector<128x1xf32> to vector<8x16x1xf32>
    %cst_174 = arith.constant dense<0xFF800000> : vector<16x1xf32>
    %556 = vector.multi_reduction <maximumf>, %555, %cst_174 [0] : vector<8x16x1xf32> to vector<16x1xf32>
    %557 = vector.shape_cast %556 : vector<16x1xf32> to vector<1x16x1xf32>
    %558 = vector.broadcast %557 : vector<1x16x1xf32> to vector<8x16x1xf32>
    %559 = arith.subf %555, %558 : vector<8x16x1xf32>
    %560 = math.exp %559 : vector<8x16x1xf32>
    %cst_175 = arith.constant dense<0.000000e+00> : vector<16x1xf32>
    %561 = vector.multi_reduction <add>, %560, %cst_175 [0] : vector<8x16x1xf32> to vector<16x1xf32>
    %562 = vector.shape_cast %561 : vector<16x1xf32> to vector<1x16x1xf32>
    %563 = tpu.reciprocal %562 {approx = true} : vector<1x16x1xf32> -> vector<1x16x1xf32>
    %564 = vector.broadcast %563 : vector<1x16x1xf32> to vector<8x16x1xf32>
    %565 = arith.mulf %560, %564 : vector<8x16x1xf32>
    %566 = vector.shape_cast %543 : vector<128x32xf32> to vector<8x16x32xf32>
    %567 = vector.broadcast %565 : vector<8x16x1xf32> to vector<8x16x32xf32>
    %568 = arith.mulf %566, %567 : vector<8x16x32xf32>
    %cst_176 = arith.constant dense<0.000000e+00> : vector<16x32xf32>
    %569 = vector.multi_reduction <add>, %568, %cst_176 [0] : vector<8x16x32xf32> to vector<16x32xf32>
    %c0_177 = arith.constant 0 : index
    %c0_178 = arith.constant 0 : index
    %570 = vector.load %arg10[%c0_177, %c0_178] : memref<32x5xf32, #tpu.memory_space<vmem>>, vector<32x5xf32>
    %cst_179 = arith.constant dense<0.000000e+00> : vector<16x5xf32>
    %571 = tpu.matmul %569, %570, %cst_179 {dimension_numbers = #tpu.dot_dimension_numbers<[1], [0], [0], [1], [0, 0, 1, 1], [], []>} : vector<16x32xf32>, vector<32x5xf32>, vector<16x5xf32> -> vector<16x5xf32>
    %c0_180 = arith.constant 0 : index
    %c0_181 = arith.constant 0 : index
    %572 = vector.load %arg11[%c0_180, %c0_181] : memref<1x5xf32, #tpu.memory_space<vmem>>, vector<1x5xf32>
    %573 = vector.broadcast %572 : vector<1x5xf32> to vector<16x5xf32>
    %574 = arith.addf %571, %573 : vector<16x5xf32>
    %c0_182 = arith.constant 0 : index
    %c0_183 = arith.constant 0 : index
    %575 = vector.load %arg16[%c0_182, %c0_183] : memref<16x5xf32, #tpu.memory_space<vmem>>, vector<16x5xf32>
    tpu.vector_store %arg16[%c0_182, %c0_183], %574 {strides = array<i32>} : memref<16x5xf32, #tpu.memory_space<vmem>>, vector<16x5xf32>,
    %c0_184 = arith.constant 0 : index
    %c0_185 = arith.constant 0 : index
    %576 = vector.load %arg12[%c0_184, %c0_185] : memref<5x3xf32, #tpu.memory_space<vmem>>, vector<5x3xf32>
    %cst_186 = arith.constant dense<0.000000e+00> : vector<16x3xf32>
    %577 = tpu.matmul %574, %576, %cst_186 {dimension_numbers = #tpu.dot_dimension_numbers<[1], [0], [0], [1], [0, 0, 1, 1], [], []>} : vector<16x5xf32>, vector<5x3xf32>, vector<16x3xf32> -> vector<16x3xf32>
    %c0_187 = arith.constant 0 : index
    %c0_188 = arith.constant 0 : index
    %578 = vector.load %arg13[%c0_187, %c0_188] : memref<1x3xf32, #tpu.memory_space<vmem>>, vector<1x3xf32>
    %579 = vector.broadcast %578 : vector<1x3xf32> to vector<16x3xf32>
    %580 = arith.addf %577, %579 : vector<16x3xf32>
    %cst_189 = arith.constant dense<0xFF800000> : vector<16xf32>
    %581 = vector.multi_reduction <maximumf>, %580, %cst_189 [1] : vector<16x3xf32> to vector<16xf32>
    %582 = vector.shape_cast %581 : vector<16xf32> to vector<16x1xf32>
    %583 = vector.broadcast %582 : vector<16x1xf32> to vector<16x3xf32>
    %584 = arith.subf %580, %583 : vector<16x3xf32>
    %585 = math.exp %584 : vector<16x3xf32>
    %cst_190 = arith.constant dense<0.000000e+00> : vector<16xf32>
    %586 = vector.multi_reduction <add>, %585, %cst_190 [1] : vector<16x3xf32> to vector<16xf32>
    %587 = vector.shape_cast %586 : vector<16xf32> to vector<16x1xf32>
    %588 = tpu.reciprocal %587 {approx = true} : vector<16x1xf32> -> vector<16x1xf32>
    %589 = vector.broadcast %588 : vector<16x1xf32> to vector<16x3xf32>
    %590 = arith.mulf %585, %589 : vector<16x3xf32>
    %c0_191 = arith.constant 0 : index
    %c0_192 = arith.constant 0 : index
    %591 = vector.load %arg14[%c0_191, %c0_192] : memref<16x3xf32, #tpu.memory_space<vmem>>, vector<16x3xf32>
    tpu.vector_store %arg14[%c0_191, %c0_192], %590 {strides = array<i32>} : memref<16x3xf32, #tpu.memory_space<vmem>>, vector<16x3xf32>,
    return
  }
  func.func @transform_0(%arg0: i32) -> (i32, i32, i32) {
    %c0_i32 = arith.constant 0 : i32
    %c0_i32_0 = arith.constant 0 : i32
    %c0_i32_1 = arith.constant 0 : i32
    return %c0_i32, %arg0, %c0_i32_0 : i32, i32, i32
  }
  func.func @transform_1(%arg0: i32) -> (i32, i32, i32) {
    %c0_i32 = arith.constant 0 : i32
    %c0_i32_0 = arith.constant 0 : i32
    %c0_i32_1 = arith.constant 0 : i32
    return %c0_i32, %arg0, %c0_i32_0 : i32, i32, i32
  }
  func.func @transform_2(%arg0: i32) -> (i32, i32) {
    %c0_i32 = arith.constant 0 : i32
    %c0_i32_0 = arith.constant 0 : i32
    %c0_i32_1 = arith.constant 0 : i32
    return %c0_i32, %c0_i32_0 : i32, i32
  }
  func.func @transform_3(%arg0: i32) -> (i32, i32) {
    %c0_i32 = arith.constant 0 : i32
    %c0_i32_0 = arith.constant 0 : i32
    %c0_i32_1 = arith.constant 0 : i32
    return %c0_i32, %c0_i32_0 : i32, i32
  }
  func.func @transform_4(%arg0: i32) -> (i32, i32) {
    %c0_i32 = arith.constant 0 : i32
    %c0_i32_0 = arith.constant 0 : i32
    %c0_i32_1 = arith.constant 0 : i32
    return %c0_i32, %c0_i32_0 : i32, i32
  }
  func.func @transform_5(%arg0: i32) -> (i32, i32) {
    %c0_i32 = arith.constant 0 : i32
    %c0_i32_0 = arith.constant 0 : i32
    %c0_i32_1 = arith.constant 0 : i32
    return %c0_i32, %c0_i32_0 : i32, i32
  }
  func.func @transform_6(%arg0: i32) -> (i32, i32) {
    %c0_i32 = arith.constant 0 : i32
    %c0_i32_0 = arith.constant 0 : i32
    %c0_i32_1 = arith.constant 0 : i32
    return %c0_i32, %c0_i32_0 : i32, i32
  }
  func.func @transform_7(%arg0: i32) -> (i32, i32) {
    %c0_i32 = arith.constant 0 : i32
    %c0_i32_0 = arith.constant 0 : i32
    %c0_i32_1 = arith.constant 0 : i32
    return %c0_i32, %c0_i32_0 : i32, i32
  }
  func.func @transform_8(%arg0: i32) -> (i32, i32) {
    %c0_i32 = arith.constant 0 : i32
    %c0_i32_0 = arith.constant 0 : i32
    %c0_i32_1 = arith.constant 0 : i32
    return %c0_i32, %c0_i32_0 : i32, i32
  }
  func.func @transform_9(%arg0: i32) -> (i32, i32) {
    %c0_i32 = arith.constant 0 : i32
    %c0_i32_0 = arith.constant 0 : i32
    %c0_i32_1 = arith.constant 0 : i32
    return %c0_i32, %c0_i32_0 : i32, i32
  }
  func.func @transform_10(%arg0: i32) -> (i32, i32) {
    %c0_i32 = arith.constant 0 : i32
    %c0_i32_0 = arith.constant 0 : i32
    %c0_i32_1 = arith.constant 0 : i32
    return %c0_i32, %c0_i32_0 : i32, i32
  }
  func.func @transform_11(%arg0: i32) -> (i32, i32) {
    %c0_i32 = arith.constant 0 : i32
    %c0_i32_0 = arith.constant 0 : i32
    %c0_i32_1 = arith.constant 0 : i32
    return %c0_i32, %c0_i32_0 : i32, i32
  }
  func.func @transform_12(%arg0: i32) -> (i32, i32) {
    %c0_i32 = arith.constant 0 : i32
    %c0_i32_0 = arith.constant 0 : i32
    %c0_i32_1 = arith.constant 0 : i32
    return %c0_i32, %c0_i32_0 : i32, i32
  }
  func.func @transform_13(%arg0: i32) -> (i32, i32) {
    %c0_i32 = arith.constant 0 : i32
    %c0_i32_0 = arith.constant 0 : i32
    return %arg0, %c0_i32 : i32, i32
  }
  func.func @transform_14(%arg0: i32) -> (i32, i32, i32) {
    %c0_i32 = arith.constant 0 : i32
    %c0_i32_0 = arith.constant 0 : i32
    %c0_i32_1 = arith.constant 0 : i32
    return %c0_i32, %arg0, %c0_i32_0 : i32, i32, i32
  }
  func.func @transform_15(%arg0: i32) -> (i32, i32) {
    %c0_i32 = arith.constant 0 : i32
    %c0_i32_0 = arith.constant 0 : i32
    return %arg0, %c0_i32 : i32, i32
  }
}

</mosaic_0001>

<llo_original>
// kernel: tpu_custom_call.1
$region0: #{tpu_custom_call.1}
  #allocation0 [shape = 'u32[]', space=smem, size = 0x4, offset = 0x4, fixed_abs, tag = 'smem constant byte address 0x4 - core index']
  #allocation1 [shape = 'u32[144,128]{1,0:T(1,128)}', space=vmem, size = 0x12000, scoped, tag = 'internal scratch']
  #allocation2 [shape = 'f32[2,128,48]{2,1,0:T(8,128)}', space=vmem, size = 0x20000, scoped, tag = 'scratch operand']
  #allocation3 [shape = 'f32[128,32]{1,0:T(8,128)}', space=vmem, size = 0x10000, scoped, tag = 'scratch operand']
  %s0 = inlined_call_operand.hbm [shape: f32[8,16,32], index: 0, kind: input, shape index: {}]
  %s1 = inlined_call_operand.vmem [shape: f32[2,16,16], index: 1, kind: input, shape index: {}]
  %s2 = inlined_call_operand.hbm [shape: f32[32,96], index: 2, kind: input, shape index: {}]
  %s3 = inlined_call_operand.hbm [shape: f32[1,96], index: 3, kind: input, shape index: {}]
  %s4 = inlined_call_operand.vmem [shape: f32[32,48], index: 4, kind: input, shape index: {}]
  %s5 = inlined_call_operand.vmem [shape: f32[2,48], index: 5, kind: input, shape index: {}]
  %s6 = inlined_call_operand.hbm [shape: f32[32,32], index: 6, kind: input, shape index: {}]
  %s7 = inlined_call_operand.hbm [shape: f32[1,32], index: 7, kind: input, shape index: {}]
  %s8 = inlined_call_operand.vmem [shape: f32[1,32], index: 8, kind: input, shape index: {}]
  %s9 = inlined_call_operand.vmem [shape: f32[32,5], index: 9, kind: input, shape index: {}]
  %s10 = inlined_call_operand.vmem [shape: f32[1,5], index: 10, kind: input, shape index: {}]
  %s11 = inlined_call_operand.vmem [shape: f32[5,3], index: 11, kind: input, shape index: {}]
  %s12 = inlined_call_operand.vmem [shape: f32[1,3], index: 12, kind: input, shape index: {}]
  %s13 = inlined_call_operand.vmem [shape: f32[16,3], index: 13, kind: output, shape index: {0}]
  %s14 = inlined_call_operand.hbm [shape: f32[2,16,16], index: 14, kind: output, shape index: {1}]
  %s15 = inlined_call_operand.vmem [shape: f32[16,5], index: 15, kind: output, shape index: {2}]
  %16 = xla_tuple %s13, %s14, %s15
  %s17 = sld [smem:[#allocation0]]
  $region98: #{tpu_custom_call.1} parent=0
    _
  %s19 = ssub.s32 1, %s17
  %s20 = scalar_select 0, %s19, %s17
  $region1: #{tpu_custom_call.1} parent=0
    #allocation4 [shape = 'u8[65536]{0}', space=vmem, size = 0x10000, scoped, tag = 'input window, operand 0, single buffered']
    #allocation5 [shape = 's32[1]{0}', space=sflag, size = 0x4, scoped, tag = 'scoped memory for tpu_custom_call.1']
    #allocation6 [shape = 's32[1]{0}', space=sflag, size = 0x4, scoped, tag = 'scoped memory for tpu_custom_call.1']
    #allocation7 [shape = 'u8[16384]{0}', space=vmem, size = 0x4000, scoped, tag = 'input window, operand 2, single buffered']
    #allocation8 [shape = 's32[1]{0}', space=sflag, size = 0x4, scoped, tag = 'scoped memory for tpu_custom_call.1']
    #allocation9 [shape = 'u8[512]{0}', space=vmem, size = 0x400, scoped, tag = 'input window, operand 3, single buffered']
    #allocation10 [shape = 'u8[16384]{0}', space=vmem, size = 0x4000, scoped, tag = 'input window, operand 6, single buffered']
    #allocation11 [shape = 's32[1]{0}', space=sflag, size = 0x4, scoped, tag = 'scoped memory for tpu_custom_call.1']
    #allocation12 [shape = 'u8[512]{0}', space=vmem, size = 0x400, scoped, tag = 'input window, operand 7, single buffered']
    #allocation13 [shape = 'u8[16384]{0}', space=vmem, size = 0x4000, scoped, tag = 'output window, operand 1, single buffered']
    %21 = vsyncpa [#allocation5], 0
    %22 = vsyncpa [#allocation8], 0
    %23 = vsyncpa [#allocation11], 0
    %24 = vsyncpa [#allocation6], 0
    // Predicated region
    $region2: #{tpu_custom_call.1} parent=1 // pred_check
      _
    $region3: #{tpu_custom_call.1} parent=1 // pred_check_branch
      %26 = sbr.rel (0) target = $region5
    $region4: #{tpu_custom_call.1} parent=1 // pred_region
      %s28 = ssub.s32 2048, 2048
      %29 = vsyncadd [#allocation5], %s28
      %s30 = sshll.u32 [#allocation4], 4
      %s31 = int_to_ptr.vmem [resolvable:$true] %s30
      %36 = dma.hbm_to_vmem [thread:$0]  %s0, 2048, %s31, [#allocation5], 128, 128, 8
    $region5: #{tpu_custom_call.1} parent=1 // pred_fallthru
      _
    // Predicated region
    $region6: #{tpu_custom_call.1} parent=1 // pred_check
      _
    $region7: #{tpu_custom_call.1} parent=1 // pred_check_branch
      %38 = sbr.rel (0) target = $region9
    $region8: #{tpu_custom_call.1} parent=1 // pred_region
      _
    $region9: #{tpu_custom_call.1} parent=1 // pred_fallthru
      _
    // Predicated region
    $region10: #{tpu_custom_call.1} parent=1 // pred_check
      _
    $region11: #{tpu_custom_call.1} parent=1 // pred_check_branch
      %40 = sbr.rel (0) target = $region13
    $region12: #{tpu_custom_call.1} parent=1 // pred_region
      %s42 = ssub.s32 512, 512
      %43 = vsyncadd [#allocation8], %s42
      %s44 = sshll.u32 [#allocation7], 4
      %s45 = int_to_ptr.vmem [resolvable:$true] %s44
      %50 = dma.hbm_to_vmem [thread:$0]  %s2, 512, %s45, [#allocation8], 128, 128, 8
    $region13: #{tpu_custom_call.1} parent=1 // pred_fallthru
      _
    // Predicated region
    $region14: #{tpu_custom_call.1} parent=1 // pred_check
      _
    $region15: #{tpu_custom_call.1} parent=1 // pred_check_branch
      %52 = sbr.rel (0) target = $region17
    $region16: #{tpu_custom_call.1} parent=1 // pred_region
      %s54 = ssub.s32 16, 16
      %55 = vsyncadd [#allocation8], %s54
      %s57 = sshll.u32 [#allocation9], 4
      %s58 = int_to_ptr.vmem [resolvable:$true] %s57
      %60 = dma.hbm_to_vmem [thread:$0]  %s3, 16, %s58, [#allocation8]
    $region17: #{tpu_custom_call.1} parent=1 // pred_fallthru
      _
    // Predicated region
    $region18: #{tpu_custom_call.1} parent=1 // pred_check
      _
    $region19: #{tpu_custom_call.1} parent=1 // pred_check_branch
      %62 = sbr.rel (0) target = $region21
    $region20: #{tpu_custom_call.1} parent=1 // pred_region
      _
    $region21: #{tpu_custom_call.1} parent=1 // pred_fallthru
      _
    // Predicated region
    $region22: #{tpu_custom_call.1} parent=1 // pred_check
      _
    $region23: #{tpu_custom_call.1} parent=1 // pred_check_branch
      %64 = sbr.rel (0) target = $region25
    $region24: #{tpu_custom_call.1} parent=1 // pred_region
      _
    $region25: #{tpu_custom_call.1} parent=1 // pred_fallthru
      _
    // Predicated region
    $region26: #{tpu_custom_call.1} parent=1 // pred_check
      _
    $region27: #{tpu_custom_call.1} parent=1 // pred_check_branch
      %66 = sbr.rel (0) target = $region29
    $region28: #{tpu_custom_call.1} parent=1 // pred_region
      %s68 = ssub.s32 512, 512
      %69 = vsyncadd [#allocation11], %s68
      %s70 = sshll.u32 [#allocation10], 4
      %s71 = int_to_ptr.vmem [resolvable:$true] %s70
      %76 = dma.hbm_to_vmem [thread:$0]  %s6, 512, %s71, [#allocation11], 128, 128, 8
    $region29: #{tpu_custom_call.1} parent=1 // pred_fallthru
      _
    // Predicated region
    $region30: #{tpu_custom_call.1} parent=1 // pred_check
      _
    $region31: #{tpu_custom_call.1} parent=1 // pred_check_branch
      %78 = sbr.rel (0) target = $region33
    $region32: #{tpu_custom_call.1} parent=1 // pred_region
      %s80 = ssub.s32 16, 16
      %81 = vsyncadd [#allocation11], %s80
      %s83 = sshll.u32 [#allocation12], 4
      %s84 = int_to_ptr.vmem [resolvable:$true] %s83
      %86 = dma.hbm_to_vmem [thread:$0]  %s7, 16, %s84, [#allocation11]
    $region33: #{tpu_custom_call.1} parent=1 // pred_fallthru
      _
    // Predicated region
    $region34: #{tpu_custom_call.1} parent=1 // pred_check
      _
    $region35: #{tpu_custom_call.1} parent=1 // pred_check_branch
      %88 = sbr.rel (0) target = $region37
    $region36: #{tpu_custom_call.1} parent=1 // pred_region
      _
    $region37: #{tpu_custom_call.1} parent=1 // pred_fallthru
      _
    // Predicated region
    $region38: #{tpu_custom_call.1} parent=1 // pred_check
      _
    $region39: #{tpu_custom_call.1} parent=1 // pred_check_branch
      %90 = sbr.rel (0) target = $region41
    $region40: #{tpu_custom_call.1} parent=1 // pred_region
      _
    $region41: #{tpu_custom_call.1} parent=1 // pred_fallthru
      _
    // Predicated region
    $region42: #{tpu_custom_call.1} parent=1 // pred_check
      _
    $region43: #{tpu_custom_call.1} parent=1 // pred_check_branch
      %92 = sbr.rel (0) target = $region45
    $region44: #{tpu_custom_call.1} parent=1 // pred_region
      _
    $region45: #{tpu_custom_call.1} parent=1 // pred_fallthru
      _
    // Predicated region
    $region46: #{tpu_custom_call.1} parent=1 // pred_check
      _
    $region47: #{tpu_custom_call.1} parent=1 // pred_check_branch
      %94 = sbr.rel (0) target = $region49
    $region48: #{tpu_custom_call.1} parent=1 // pred_region
      _
    $region49: #{tpu_custom_call.1} parent=1 // pred_fallthru
      _
    // Predicated region
    $region50: #{tpu_custom_call.1} parent=1 // pred_check
      _
    $region51: #{tpu_custom_call.1} parent=1 // pred_check_branch
      %96 = sbr.rel (0) target = $region53
    $region52: #{tpu_custom_call.1} parent=1 // pred_region
      _
    $region53: #{tpu_custom_call.1} parent=1 // pred_fallthru
      _
    // Predicated region
    $region54: #{tpu_custom_call.1} parent=1 // pred_check
      _
    $region55: #{tpu_custom_call.1} parent=1 // pred_check_branch
      %98 = sbr.rel (0) target = $region57
    $region56: #{tpu_custom_call.1} parent=1 // pred_region
      %99 = dma.done [#allocation5], 2048
    $region57: #{tpu_custom_call.1} parent=1 // pred_fallthru
      _
    // Predicated region
    $region58: #{tpu_custom_call.1} parent=1 // pred_check
      _
    $region59: #{tpu_custom_call.1} parent=1 // pred_check_branch
      %101 = sbr.rel (0) target = $region61
    $region60: #{tpu_custom_call.1} parent=1 // pred_region
      %102 = dma.done [#allocation8], 512
    $region61: #{tpu_custom_call.1} parent=1 // pred_fallthru
      _
    // Predicated region
    $region62: #{tpu_custom_call.1} parent=1 // pred_check
      _
    $region63: #{tpu_custom_call.1} parent=1 // pred_check_branch
      %104 = sbr.rel (0) target = $region65
    $region64: #{tpu_custom_call.1} parent=1 // pred_region
      %105 = dma.done [#allocation8], 16
    $region65: #{tpu_custom_call.1} parent=1 // pred_fallthru
      _
    // Predicated region
    $region66: #{tpu_custom_call.1} parent=1 // pred_check
      _
    $region67: #{tpu_custom_call.1} parent=1 // pred_check_branch
      %107 = sbr.rel (0) target = $region69
    $region68: #{tpu_custom_call.1} parent=1 // pred_region
      %108 = dma.done [#allocation11], 512
    $region69: #{tpu_custom_call.1} parent=1 // pred_fallthru
      _
    // Predicated region
    $region70: #{tpu_custom_call.1} parent=1 // pred_check
      _
    $region71: #{tpu_custom_call.1} parent=1 // pred_check_branch
      %110 = sbr.rel (0) target = $region73
    $region72: #{tpu_custom_call.1} parent=1 // pred_region
      %111 = dma.done [#allocation11], 16
    $region73: #{tpu_custom_call.1} parent=1 // pred_fallthru
      _
    %v112 = vld [vmem:[#allocation4] sm:$0xff]
    %v113 = vld [vmem:[#allocation4 + $0x8] sm:$0xff]
    %v114 = vld [vmem:[#allocation4 + $0x10] sm:$0xff]
    %v115 = vld [vmem:[#allocation4 + $0x18] sm:$0xff]
    %v116 = vld [vmem:[#allocation4 + $0x20] sm:$0xff]
    %v117 = vld [vmem:[#allocation4 + $0x28] sm:$0xff]
    %v118 = vld [vmem:[#allocation4 + $0x30] sm:$0xff]
    %v119 = vld [vmem:[#allocation4 + $0x38] sm:$0xff]
    %v120 = vld [vmem:[#allocation4 + $0x40] sm:$0xff]
    %v121 = vld [vmem:[#allocation4 + $0x48] sm:$0xff]
    %v122 = vld [vmem:[#allocation4 + $0x50] sm:$0xff]
    %v123 = vld [vmem:[#allocation4 + $0x58] sm:$0xff]
    %v124 = vld [vmem:[#allocation4 + $0x60] sm:$0xff]
    %v125 = vld [vmem:[#allocation4 + $0x68] sm:$0xff]
    %v126 = vld [vmem:[#allocation4 + $0x70] sm:$0xff]
    %v127 = vld [vmem:[#allocation4 + $0x78] sm:$0xff]
    %v128 = vld [vmem:[#allocation7] sm:$0xff]
    %v129 = vld [vmem:[#allocation7 + $0x8] sm:$0xff]
    %v130 = vld [vmem:[#allocation7 + $0x10] sm:$0xff]
    %v131 = vld [vmem:[#allocation7 + $0x18] sm:$0xff]
    %v132 = vld [vmem:[#allocation9] sm:$0x1]
    %v134 = vlaneseq
    %v135 = vshrl.u32 %v134, 7
    %v136 = vsub.s32 0, %v135
    %v137 = vrot.slane %v132, %v136
    %vm139 = vcmask 261120
    %v141 = vsel %vm139, %v112, 0
    %v144 = vsel %vm139, %v113, 0
    %v147 = vsel %vm139, %v114, 0
    %v150 = vsel %vm139, %v115, 0
    %v153 = vsel %vm139, %v116, 0
    %v156 = vsel %vm139, %v117, 0
    %v159 = vsel %vm139, %v118, 0
    %v162 = vsel %vm139, %v119, 0
    %v165 = vsel %vm139, %v120, 0
    %v168 = vsel %vm139, %v121, 0
    %v171 = vsel %vm139, %v122, 0
    %v174 = vsel %vm139, %v123, 0
    %v177 = vsel %vm139, %v124, 0
    %v180 = vsel %vm139, %v125, 0
    %v183 = vsel %vm139, %v126, 0
    %v186 = vsel %vm139, %v127, 0
    %188 = vmatprep.subr.mxu0 0.0
    %189 = vmatpush1.msra.mxu0 %v128
    %190 = vmatprep.subr.mxu0 0.0
    %191 = vmatpush1.msra.mxu0 %v129
    %192 = vmatprep.subr.mxu0 0.0
    %193 = vmatpush1.msra.mxu0 %v130
    %194 = vmatprep.subr.mxu0 0.0
    %195 = vmatpush1.msra.mxu0 %v131
    %196 = vmatprep.subr.mxu0 0.0
    %197 = vmatpush1.msra.mxu0 0.0
    %198 = vmatprep.subr.mxu0 0.0
    %199 = vmatpush1.msra.mxu0 0.0
    %200 = vmatprep.subr.mxu0 0.0
    %201 = vmatpush1.msra.mxu0 0.0
    %202 = vmatprep.subr.mxu0 0.0
    %203 = vmatpush1.msra.mxu0 0.0
    %204 = vmatprep.subr.mxu0 0.0
    %205 = vmatpush1.msra.mxu0 0.0
    %206 = vmatprep.subr.mxu0 0.0
    %207 = vmatpush1.msra.mxu0 0.0
    %208 = vmatprep.subr.mxu0 0.0
    %209 = vmatpush1.msra.mxu0 0.0
    %210 = vmatprep.subr.mxu0 0.0
    %211 = vmatpush1.msra.mxu0 0.0
    %212 = vmatprep.subr.mxu0 0.0
    %213 = vmatpush1.msra.mxu0 0.0
    %214 = vmatprep.subr.mxu0 0.0
    %215 = vmatpush1.msra.mxu0 0.0
    %216 = vmatprep.subr.mxu0 0.0
    %217 = vmatpush1.msra.mxu0 0.0
    %218 = vmatprep.subr.mxu0 0.0
    %219 = vmatpush1.msra.mxu0 0.0
    %220 = vmatprep.subr.mxu0 0.0
    %221 = vmatpush1.msra.mxu0 0.0
    %222 = vmatprep.subr.mxu0 0.0
    %223 = vmatpush1.msra.mxu0 0.0
    %224 = vmatprep.subr.mxu0 0.0
    %225 = vmatpush1.msra.mxu0 0.0
    %226 = vmatprep.subr.mxu0 0.0
    %227 = vmatpush1.msra.mxu0 0.0
    %228 = vmatprep.subr.mxu0 0.0
    %229 = vmatpush1.msra.mxu0 0.0
    %230 = vmatprep.subr.mxu0 0.0
    %231 = vmatpush1.msra.mxu0 0.0
    %232 = vmatprep.subr.mxu0 0.0
    %233 = vmatpush1.msra.mxu0 0.0
    %234 = vmatprep.subr.mxu0 0.0
    %235 = vmatpush1.msra.mxu0 0.0
    %236 = vmatprep.subr.mxu0 0.0
    %237 = vmatpush1.msra.mxu0 0.0
    %238 = vmatprep.subr.mxu0 0.0
    %239 = vmatpush1.msra.mxu0 0.0
    %240 = vmatprep.subr.mxu0 0.0
    %241 = vmatpush1.msra.mxu0 0.0
    %242 = vmatprep.subr.mxu0 0.0
    %243 = vmatpush1.msra.mxu0 0.0
    %244 = vmatprep.subr.mxu0 0.0
    %245 = vmatpush1.msra.mxu0 0.0
    %246 = vmatprep.subr.mxu0 0.0
    %247 = vmatpush1.msra.mxu0 0.0
    %248 = vmatprep.subr.mxu0 0.0
    %249 = vmatpush1.msra.mxu0 0.0
    %250 = vmatprep.subr.mxu0 0.0
    %251 = vmatpush1.msra.mxu0 0.0
    %252 = vmatprep.mubr.f32.mxu0 0.0
    %253 = vmatmul.mubr.f32.gmra.mrb[0].mxu0 %v141
    %v254 = vpop.f32.mrb[0].mxu0
    %v255 = vadd.f32 %v137, %v254
    %v256 = vpop.f32.mrb[0].mxu0
    %257 = vmatprep.mubr.f32.mxu0 0.0
    %258 = vmatmul.mubr.f32.gmra.mrb[0].mxu0 %v144
    %v259 = vpop.f32.mrb[0].mxu0
    %v260 = vadd.f32 %v137, %v259
    %v261 = vpop.f32.mrb[0].mxu0
    %262 = vmatprep.mubr.f32.mxu0 0.0
    %263 = vmatmul.mubr.f32.gmra.mrb[0].mxu0 %v147
    %v264 = vpop.f32.mrb[0].mxu0
    %v265 = vadd.f32 %v137, %v264
    %v266 = vpop.f32.mrb[0].mxu0
    %267 = vmatprep.mubr.f32.mxu0 0.0
    %268 = vmatmul.mubr.f32.gmra.mrb[0].mxu0 %v150
    %v269 = vpop.f32.mrb[0].mxu0
    %v270 = vadd.f32 %v137, %v269
    %v271 = vpop.f32.mrb[0].mxu0
    %272 = vmatprep.mubr.f32.mxu0 0.0
    %273 = vmatmul.mubr.f32.gmra.mrb[0].mxu0 %v153
    %v274 = vpop.f32.mrb[0].mxu0
    %v275 = vadd.f32 %v137, %v274
    %v276 = vpop.f32.mrb[0].mxu0
    %277 = vmatprep.mubr.f32.mxu0 0.0
    %278 = vmatmul.mubr.f32.gmra.mrb[0].mxu0 %v156
    %v279 = vpop.f32.mrb[0].mxu0
    %v280 = vadd.f32 %v137, %v279
    %v281 = vpop.f32.mrb[0].mxu0
    %282 = vmatprep.mubr.f32.mxu0 0.0
    %283 = vmatmul.mubr.f32.gmra.mrb[0].mxu0 %v159
    %v284 = vpop.f32.mrb[0].mxu0
    %v285 = vadd.f32 %v137, %v284
    %v286 = vpop.f32.mrb[0].mxu0
    %287 = vmatprep.mubr.f32.mxu0 0.0
    %288 = vmatmul.mubr.f32.gmra.mrb[0].mxu0 %v162
    %v289 = vpop.f32.mrb[0].mxu0
    %v290 = vadd.f32 %v137, %v289
    %v291 = vpop.f32.mrb[0].mxu0
    %292 = vmatprep.mubr.f32.mxu0 0.0
    %293 = vmatmul.mubr.f32.gmra.mrb[0].mxu0 %v165
    %v294 = vpop.f32.mrb[0].mxu0
    %v295 = vadd.f32 %v137, %v294
    %v296 = vpop.f32.mrb[0].mxu0
    %297 = vmatprep.mubr.f32.mxu0 0.0
    %298 = vmatmul.mubr.f32.gmra.mrb[0].mxu0 %v168
    %v299 = vpop.f32.mrb[0].mxu0
    %v300 = vadd.f32 %v137, %v299
    %v301 = vpop.f32.mrb[0].mxu0
    %302 = vmatprep.mubr.f32.mxu0 0.0
    %303 = vmatmul.mubr.f32.gmra.mrb[0].mxu0 %v171
    %v304 = vpop.f32.mrb[0].mxu0
    %v305 = vadd.f32 %v137, %v304
    %v306 = vpop.f32.mrb[0].mxu0
    %307 = vmatprep.mubr.f32.mxu0 0.0
    %308 = vmatmul.mubr.f32.gmra.mrb[0].mxu0 %v174
    %v309 = vpop.f32.mrb[0].mxu0
    %v310 = vadd.f32 %v137, %v309
    %v311 = vpop.f32.mrb[0].mxu0
    %312 = vmatprep.mubr.f32.mxu0 0.0
    %313 = vmatmul.mubr.f32.gmra.mrb[0].mxu0 %v177
    %v314 = vpop.f32.mrb[0].mxu0
    %v315 = vadd.f32 %v137, %v314
    %v316 = vpop.f32.mrb[0].mxu0
    %317 = vmatprep.mubr.f32.mxu0 0.0
    %318 = vmatmul.mubr.f32.gmra.mrb[0].mxu0 %v180
    %v319 = vpop.f32.mrb[0].mxu0
    %v320 = vadd.f32 %v137, %v319
    %v321 = vpop.f32.mrb[0].mxu0
    %322 = vmatprep.mubr.f32.mxu0 0.0
    %323 = vmatmul.mubr.f32.gmra.mrb[0].mxu0 %v183
    %v324 = vpop.f32.mrb[0].mxu0
    %v325 = vadd.f32 %v137, %v324
    %v326 = vpop.f32.mrb[0].mxu0
    %327 = vmatprep.mubr.f32.mxu0 0.0
    %328 = vmatmul.mubr.f32.gmra.mrb[0].mxu0 %v186
    %v329 = vpop.f32.mrb[0].mxu0
    %v330 = vadd.f32 %v137, %v329
    %v331 = vpop.f32.mrb[0].mxu0
    %332 = vdwg.mxu0
    %vm333 = vcmask 392192
    %334 = vst.msk [vmem:[#allocation2] sm:$0xff] %vm333, %v255
    %335 = vst.msk [vmem:[#allocation2 + $0x8] sm:$0xff] %vm333, %v260
    %336 = vst.msk [vmem:[#allocation2 + $0x10] sm:$0xff] %vm333, %v265
    %337 = vst.msk [vmem:[#allocation2 + $0x18] sm:$0xff] %vm333, %v270
    %338 = vst.msk [vmem:[#allocation2 + $0x20] sm:$0xff] %vm333, %v275
    %339 = vst.msk [vmem:[#allocation2 + $0x28] sm:$0xff] %vm333, %v280
    %340 = vst.msk [vmem:[#allocation2 + $0x30] sm:$0xff] %vm333, %v285
    %341 = vst.msk [vmem:[#allocation2 + $0x38] sm:$0xff] %vm333, %v290
    %342 = vst.msk [vmem:[#allocation2 + $0x40] sm:$0xff] %vm333, %v295
    %343 = vst.msk [vmem:[#allocation2 + $0x48] sm:$0xff] %vm333, %v300
    %344 = vst.msk [vmem:[#allocation2 + $0x50] sm:$0xff] %vm333, %v305
    %345 = vst.msk [vmem:[#allocation2 + $0x58] sm:$0xff] %vm333, %v310
    %346 = vst.msk [vmem:[#allocation2 + $0x60] sm:$0xff] %vm333, %v315
    %347 = vst.msk [vmem:[#allocation2 + $0x68] sm:$0xff] %vm333, %v320
    %348 = vst.msk [vmem:[#allocation2 + $0x70] sm:$0xff] %vm333, %v325
    %349 = vst.msk [vmem:[#allocation2 + $0x78] sm:$0xff] %vm333, %v330
    %366 = vrot.lane.b32.xlu0 %v255, 80
    %v367 = vpop.permute.xlu0 %366
    %368 = vrot.lane.b32.xlu0 %v260, 80
    %v369 = vpop.permute.xlu0 %368
    %370 = vrot.lane.b32.xlu0 %v265, 80
    %v371 = vpop.permute.xlu0 %370
    %372 = vrot.lane.b32.xlu0 %v270, 80
    %v373 = vpop.permute.xlu0 %372
    %374 = vrot.lane.b32.xlu0 %v275, 80
    %v375 = vpop.permute.xlu0 %374
    %376 = vrot.lane.b32.xlu0 %v280, 80
    %v377 = vpop.permute.xlu0 %376
    %378 = vrot.lane.b32.xlu0 %v285, 80
    %v379 = vpop.permute.xlu0 %378
    %380 = vrot.lane.b32.xlu0 %v290, 80
    %v381 = vpop.permute.xlu0 %380
    %382 = vrot.lane.b32.xlu0 %v295, 80
    %v383 = vpop.permute.xlu0 %382
    %384 = vrot.lane.b32.xlu0 %v300, 80
    %v385 = vpop.permute.xlu0 %384
    %386 = vrot.lane.b32.xlu0 %v305, 80
    %v387 = vpop.permute.xlu0 %386
    %388 = vrot.lane.b32.xlu0 %v310, 80
    %v389 = vpop.permute.xlu0 %388
    %390 = vrot.lane.b32.xlu0 %v315, 80
    %v391 = vpop.permute.xlu0 %390
    %392 = vrot.lane.b32.xlu0 %v320, 80
    %v393 = vpop.permute.xlu0 %392
    %394 = vrot.lane.b32.xlu0 %v325, 80
    %v395 = vpop.permute.xlu0 %394
    %396 = vrot.lane.b32.xlu0 %v330, 80
    %v397 = vpop.permute.xlu0 %396
    %s414 = scalar_lea.vmem [#allocation2], 128
    %415 = vst.msk [vmem:[%s414] sm:$0xff] %vm333, %v367
    %416 = vst.msk [vmem:[%s414 + $0x8] sm:$0xff] %vm333, %v369
    %417 = vst.msk [vmem:[%s414 + $0x10] sm:$0xff] %vm333, %v371
    %418 = vst.msk [vmem:[%s414 + $0x18] sm:$0xff] %vm333, %v373
    %419 = vst.msk [vmem:[%s414 + $0x20] sm:$0xff] %vm333, %v375
    %420 = vst.msk [vmem:[%s414 + $0x28] sm:$0xff] %vm333, %v377
    %421 = vst.msk [vmem:[%s414 + $0x30] sm:$0xff] %vm333, %v379
    %422 = vst.msk [vmem:[%s414 + $0x38] sm:$0xff] %vm333, %v381
    %423 = vst.msk [vmem:[%s414 + $0x40] sm:$0xff] %vm333, %v383
    %424 = vst.msk [vmem:[%s414 + $0x48] sm:$0xff] %vm333, %v385
    %425 = vst.msk [vmem:[%s414 + $0x50] sm:$0xff] %vm333, %v387
    %426 = vst.msk [vmem:[%s414 + $0x58] sm:$0xff] %vm333, %v389
    %427 = vst.msk [vmem:[%s414 + $0x60] sm:$0xff] %vm333, %v391
    %428 = vst.msk [vmem:[%s414 + $0x68] sm:$0xff] %vm333, %v393
    %429 = vst.msk [vmem:[%s414 + $0x70] sm:$0xff] %vm333, %v395
    %430 = vst.msk [vmem:[%s414 + $0x78] sm:$0xff] %vm333, %v397
    %v431 = vld [vmem:[%s4] sm:$0xff]
    %v432 = vld [vmem:[%s4 + $0x8] sm:$0xff]
    %v433 = vld [vmem:[%s4 + $0x10] sm:$0xff]
    %v434 = vld [vmem:[%s4 + $0x18] sm:$0xff]
    %v435 = vld [vmem:[%s5] sm:$0x3]
    %v436 = vld [vmem:[%s1] sm:$0xff]
    %v437 = vld [vmem:[%s1 + $0x8] sm:$0xff]
    %s438 = scalar_lea.vmem %s1, 16
    %v439 = vld [vmem:[%s438] sm:$0xff]
    %v440 = vld [vmem:[%s438 + $0x8] sm:$0xff]
    %v441 = vlaneseq
    %v442 = vshrl.u32 %v441, 7
    %v443 = vsub.s32 0, %v442
    %v444 = vrot.slane %v435, %v443
    %vm445 = vcmask 130048
    %v447 = vsel %vm445, %v436, 0
    %v450 = vsel %vm445, %v437, 0
    %452 = vmatprep.subr.mxu0 0.0
    %453 = vmatpush1.msra.mxu0 %v431
    %454 = vmatprep.subr.mxu0 0.0
    %455 = vmatpush1.msra.mxu0 %v432
    %456 = vmatprep.subr.mxu0 0.0
    %457 = vmatpush1.msra.mxu0 0.0
    %458 = vmatprep.subr.mxu0 0.0
    %459 = vmatpush1.msra.mxu0 0.0
    %460 = vmatprep.subr.mxu0 0.0
    %461 = vmatpush1.msra.mxu0 0.0
    %462 = vmatprep.subr.mxu0 0.0
    %463 = vmatpush1.msra.mxu0 0.0
    %464 = vmatprep.subr.mxu0 0.0
    %465 = vmatpush1.msra.mxu0 0.0
    %466 = vmatprep.subr.mxu0 0.0
    %467 = vmatpush1.msra.mxu0 0.0
    %468 = vmatprep.subr.mxu0 0.0
    %469 = vmatpush1.msra.mxu0 0.0
    %470 = vmatprep.subr.mxu0 0.0
    %471 = vmatpush1.msra.mxu0 0.0
    %472 = vmatprep.subr.mxu0 0.0
    %473 = vmatpush1.msra.mxu0 0.0
    %474 = vmatprep.subr.mxu0 0.0
    %475 = vmatpush1.msra.mxu0 0.0
    %476 = vmatprep.subr.mxu0 0.0
    %477 = vmatpush1.msra.mxu0 0.0
    %478 = vmatprep.subr.mxu0 0.0
    %479 = vmatpush1.msra.mxu0 0.0
    %480 = vmatprep.subr.mxu0 0.0
    %481 = vmatpush1.msra.mxu0 0.0
    %482 = vmatprep.subr.mxu0 0.0
    %483 = vmatpush1.msra.mxu0 0.0
    %484 = vmatprep.subr.mxu0 0.0
    %485 = vmatpush1.msra.mxu0 0.0
    %486 = vmatprep.subr.mxu0 0.0
    %487 = vmatpush1.msra.mxu0 0.0
    %488 = vmatprep.subr.mxu0 0.0
    %489 = vmatpush1.msra.mxu0 0.0
    %490 = vmatprep.subr.mxu0 0.0
    %491 = vmatpush1.msra.mxu0 0.0
    %492 = vmatprep.subr.mxu0 0.0
    %493 = vmatpush1.msra.mxu0 0.0
    %494 = vmatprep.subr.mxu0 0.0
    %495 = vmatpush1.msra.mxu0 0.0
    %496 = vmatprep.subr.mxu0 0.0
    %497 = vmatpush1.msra.mxu0 0.0
    %498 = vmatprep.subr.mxu0 0.0
    %499 = vmatpush1.msra.mxu0 0.0
    %500 = vmatprep.subr.mxu0 0.0
    %501 = vmatpush1.msra.mxu0 0.0
    %502 = vmatprep.subr.mxu0 0.0
    %503 = vmatpush1.msra.mxu0 0.0
    %504 = vmatprep.subr.mxu0 0.0
    %505 = vmatpush1.msra.mxu0 0.0
    %506 = vmatprep.subr.mxu0 0.0
    %507 = vmatpush1.msra.mxu0 0.0
    %508 = vmatprep.subr.mxu0 0.0
    %509 = vmatpush1.msra.mxu0 0.0
    %510 = vmatprep.subr.mxu0 0.0
    %511 = vmatpush1.msra.mxu0 0.0
    %512 = vmatprep.subr.mxu0 0.0
    %513 = vmatpush1.msra.mxu0 0.0
    %514 = vmatprep.subr.mxu0 0.0
    %515 = vmatpush1.msra.mxu0 0.0
    %516 = vmatprep.mubr.f32.mxu0 0.0
    %517 = vmatmul.mubr.f32.gmra.mrb[0].mxu0 %v447
    %v518 = vpop.f32.mrb[0].mxu0
    %v519 = vadd.f32 %v444, %v518
    %v520 = vpop.f32.mrb[0].mxu0
    %521 = vmatprep.mubr.f32.mxu0 0.0
    %522 = vmatmul.mubr.f32.gmra.mrb[0].mxu0 %v450
    %v523 = vpop.f32.mrb[0].mxu0
    %v524 = vadd.f32 %v444, %v523
    %v525 = vpop.f32.mrb[0].mxu0
    %526 = vdwg.mxu0
    %v527 = vlaneseq
    %v528 = vshrl.u32 %v527, 7
    %v529 = vsub.s32 1, %v528
    %v530 = vrot.slane %v435, %v529
    %v532 = vsel %vm445, %v439, 0
    %v535 = vsel %vm445, %v440, 0
    %537 = vmatprep.subr.mxu0 0.0
    %538 = vmatpush1.msra.mxu0 %v433
    %539 = vmatprep.subr.mxu0 0.0
    %540 = vmatpush1.msra.mxu0 %v434
    %541 = vmatprep.subr.mxu0 0.0
    %542 = vmatpush1.msra.mxu0 0.0
    %543 = vmatprep.subr.mxu0 0.0
    %544 = vmatpush1.msra.mxu0 0.0
    %545 = vmatprep.subr.mxu0 0.0
    %546 = vmatpush1.msra.mxu0 0.0
    %547 = vmatprep.subr.mxu0 0.0
    %548 = vmatpush1.msra.mxu0 0.0
    %549 = vmatprep.subr.mxu0 0.0
    %550 = vmatpush1.msra.mxu0 0.0
    %551 = vmatprep.subr.mxu0 0.0
    %552 = vmatpush1.msra.mxu0 0.0
    %553 = vmatprep.subr.mxu0 0.0
    %554 = vmatpush1.msra.mxu0 0.0
    %555 = vmatprep.subr.mxu0 0.0
    %556 = vmatpush1.msra.mxu0 0.0
    %557 = vmatprep.subr.mxu0 0.0
    %558 = vmatpush1.msra.mxu0 0.0
    %559 = vmatprep.subr.mxu0 0.0
    %560 = vmatpush1.msra.mxu0 0.0
    %561 = vmatprep.subr.mxu0 0.0
    %562 = vmatpush1.msra.mxu0 0.0
    %563 = vmatprep.subr.mxu0 0.0
    %564 = vmatpush1.msra.mxu0 0.0
    %565 = vmatprep.subr.mxu0 0.0
    %566 = vmatpush1.msra.mxu0 0.0
    %567 = vmatprep.subr.mxu0 0.0
    %568 = vmatpush1.msra.mxu0 0.0
    %569 = vmatprep.subr.mxu0 0.0
    %570 = vmatpush1.msra.mxu0 0.0
    %571 = vmatprep.subr.mxu0 0.0
    %572 = vmatpush1.msra.mxu0 0.0
    %573 = vmatprep.subr.mxu0 0.0
    %574 = vmatpush1.msra.mxu0 0.0
    %575 = vmatprep.subr.mxu0 0.0
    %576 = vmatpush1.msra.mxu0 0.0
    %577 = vmatprep.subr.mxu0 0.0
    %578 = vmatpush1.msra.mxu0 0.0
    %579 = vmatprep.subr.mxu0 0.0
    %580 = vmatpush1.msra.mxu0 0.0
    %581 = vmatprep.subr.mxu0 0.0
    %582 = vmatpush1.msra.mxu0 0.0
    %583 = vmatprep.subr.mxu0 0.0
    %584 = vmatpush1.msra.mxu0 0.0
    %585 = vmatprep.subr.mxu0 0.0
    %586 = vmatpush1.msra.mxu0 0.0
    %587 = vmatprep.subr.mxu0 0.0
    %588 = vmatpush1.msra.mxu0 0.0
    %589 = vmatprep.subr.mxu0 0.0
    %590 = vmatpush1.msra.mxu0 0.0
    %591 = vmatprep.subr.mxu0 0.0
    %592 = vmatpush1.msra.mxu0 0.0
    %593 = vmatprep.subr.mxu0 0.0
    %594 = vmatpush1.msra.mxu0 0.0
    %595 = vmatprep.subr.mxu0 0.0
    %596 = vmatpush1.msra.mxu0 0.0
    %597 = vmatprep.subr.mxu0 0.0
    %598 = vmatpush1.msra.mxu0 0.0
    %599 = vmatprep.subr.mxu0 0.0
    %600 = vmatpush1.msra.mxu0 0.0
    %601 = vmatprep.mubr.f32.mxu0 0.0
    %602 = vmatmul.mubr.f32.gmra.mrb[0].mxu0 %v532
    %v603 = vpop.f32.mrb[0].mxu0
    %v604 = vadd.f32 %v530, %v603
    %v605 = vpop.f32.mrb[0].mxu0
    %606 = vmatprep.mubr.f32.mxu0 0.0
    %607 = vmatmul.mubr.f32.gmra.mrb[0].mxu0 %v535
    %v608 = vpop.f32.mrb[0].mxu0
    %v609 = vadd.f32 %v530, %v608
    %v610 = vpop.f32.mrb[0].mxu0
    %611 = vdwg.mxu0
    %v612 = vld [vmem:[#allocation2] sm:$0xff]
    %v613 = vld [vmem:[#allocation2 + $0x8] sm:$0xff]
    %v614 = vadd.f32 %v612, %v519
    %v615 = vadd.f32 %v613, %v524
    %v616 = vxor.u32 %v614, 2147483648
    %v617 = vxor.u32 %v615, 2147483648
    %v618 = vmul.f32 %v616, 1.442695
    %v619 = vpow.pop %v618
    %v620 = vmul.f32 %v617, 1.442695
    %v621 = vpow.pop %v620
    %v622 = vadd.f32 %v619, 1.0
    %v623 = vadd.f32 %v621, 1.0
    %v624 = vrcp.pop %v622
    %v625 = vmul.f32 1.0, %v624
    %v626 = vrcp.pop %v623
    %v627 = vmul.f32 1.0, %v626
    %630 = vrot.lane.b32.xlu0 %v519, 96
    %v631 = vpop.permute.xlu0 %630
    %632 = vrot.lane.b32.xlu0 %v524, 96
    %v633 = vpop.permute.xlu0 %632
    %v636 = vmul.f32 %v625, %v631
    %v637 = vmul.f32 %v627, %v633
    %640 = vrot.lane.b32.xlu0 %v636, 32
    %v641 = vpop.permute.xlu0 %640
    %642 = vrot.lane.b32.xlu0 %v637, 32
    %v643 = vpop.permute.xlu0 %642
    %v646 = vadd.f32 %v612, %v641
    %v647 = vadd.f32 %v613, %v643
    %v648 = vtanh.pop %v646
    %v649 = vtanh.pop %v647
    %v650 = vsub.f32 1.0, %v625
    %v651 = vsub.f32 1.0, %v627
    %654 = vrot.lane.b32.xlu0 %v648, 112
    %v655 = vpop.permute.xlu0 %654
    %656 = vrot.lane.b32.xlu0 %v649, 112
    %v657 = vpop.permute.xlu0 %656
    %v660 = vmul.f32 %v650, %v655
    %v661 = vmul.f32 %v651, %v657
    %662 = vrot.lane.b32.xlu0 %v436, 16
    %v663 = vpop.permute.xlu0 %662
    %664 = vrot.lane.b32.xlu0 %v437, 16
    %v665 = vpop.permute.xlu0 %664
    %v668 = vmul.f32 %v625, %v663
    %v669 = vmul.f32 %v627, %v665
    %v670 = vadd.f32 %v660, %v668
    %v671 = vadd.f32 %v661, %v669
    %v672 = vld [vmem:[%s414 + $0x70] sm:$0xff]
    %v673 = vld [vmem:[%s414 + $0x78] sm:$0xff]
    %v674 = vadd.f32 %v672, %v604
    %v675 = vadd.f32 %v673, %v609
    %v676 = vxor.u32 %v674, 2147483648
    %v677 = vxor.u32 %v675, 2147483648
    %v678 = vmul.f32 %v676, 1.442695
    %v679 = vpow.pop %v678
    %v680 = vmul.f32 %v677, 1.442695
    %v681 = vpow.pop %v680
    %v682 = vadd.f32 %v679, 1.0
    %v683 = vadd.f32 %v681, 1.0
    %v684 = vrcp.pop %v682
    %v685 = vmul.f32 1.0, %v684
    %v686 = vrcp.pop %v683
    %v687 = vmul.f32 1.0, %v686
    %690 = vrot.lane.b32.xlu0 %v604, 96
    %v691 = vpop.permute.xlu0 %690
    %692 = vrot.lane.b32.xlu0 %v609, 96
    %v693 = vpop.permute.xlu0 %692
    %v696 = vmul.f32 %v685, %v691
    %v697 = vmul.f32 %v687, %v693
    %700 = vrot.lane.b32.xlu0 %v696, 32
    %v701 = vpop.permute.xlu0 %700
    %702 = vrot.lane.b32.xlu0 %v697, 32
    %v703 = vpop.permute.xlu0 %702
    %v706 = vadd.f32 %v672, %v701
    %v707 = vadd.f32 %v673, %v703
    %v708 = vtanh.pop %v706
    %v709 = vtanh.pop %v707
    %v710 = vsub.f32 1.0, %v685
    %v711 = vsub.f32 1.0, %v687
    %714 = vrot.lane.b32.xlu0 %v708, 112
    %v715 = vpop.permute.xlu0 %714
    %716 = vrot.lane.b32.xlu0 %v709, 112
    %v717 = vpop.permute.xlu0 %716
    %v720 = vmul.f32 %v710, %v715
    %v721 = vmul.f32 %v711, %v717
    %722 = vrot.lane.b32.xlu0 %v439, 16
    %v723 = vpop.permute.xlu0 %722
    %724 = vrot.lane.b32.xlu0 %v440, 16
    %v725 = vpop.permute.xlu0 %724
    %v728 = vmul.f32 %v685, %v723
    %v729 = vmul.f32 %v687, %v725
    %v730 = vadd.f32 %v720, %v728
    %v731 = vadd.f32 %v721, %v729
    %734 = vrot.lane.b32.xlu0 %v670, 112
    %v735 = vpop.permute.xlu0 %734
    %736 = vrot.lane.b32.xlu0 %v671, 112
    %v737 = vpop.permute.xlu0 %736
    %740 = vst.msk [vmem:[#allocation3] sm:$0xff] %vm445, %v735
    %741 = vst.msk [vmem:[#allocation3 + $0x8] sm:$0xff] %vm445, %v737
    %vm742 = vcmask 261248
    %743 = vst.msk [vmem:[#allocation3 + $0x70] sm:$0xff] %vm742, %v730
    %744 = vst.msk [vmem:[#allocation3 + $0x78] sm:$0xff] %vm742, %v731
    %v745 = vsel %vm445, %v735, 0
    %v747 = vsel %vm445, %v737, 0
    %749 = vmatprep.subr.mxu0 0.0
    %750 = vmatpush1.msra.mxu0 %v431
    %751 = vmatprep.subr.mxu0 0.0
    %752 = vmatpush1.msra.mxu0 %v432
    %753 = vmatprep.subr.mxu0 0.0
    %754 = vmatpush1.msra.mxu0 0.0
    %755 = vmatprep.subr.mxu0 0.0
    %756 = vmatpush1.msra.mxu0 0.0
    %757 = vmatprep.subr.mxu0 0.0
    %758 = vmatpush1.msra.mxu0 0.0
    %759 = vmatprep.subr.mxu0 0.0
    %760 = vmatpush1.msra.mxu0 0.0
    %761 = vmatprep.subr.mxu0 0.0
    %762 = vmatpush1.msra.mxu0 0.0
    %763 = vmatprep.subr.mxu0 0.0
    %764 = vmatpush1.msra.mxu0 0.0
    %765 = vmatprep.subr.mxu0 0.0
    %766 = vmatpush1.msra.mxu0 0.0
    %767 = vmatprep.subr.mxu0 0.0
    %768 = vmatpush1.msra.mxu0 0.0
    %769 = vmatprep.subr.mxu0 0.0
    %770 = vmatpush1.msra.mxu0 0.0
    %771 = vmatprep.subr.mxu0 0.0
    %772 = vmatpush1.msra.mxu0 0.0
    %773 = vmatprep.subr.mxu0 0.0
    %774 = vmatpush1.msra.mxu0 0.0
    %775 = vmatprep.subr.mxu0 0.0
    %776 = vmatpush1.msra.mxu0 0.0
    %777 = vmatprep.subr.mxu0 0.0
    %778 = vmatpush1.msra.mxu0 0.0
    %779 = vmatprep.subr.mxu0 0.0
    %780 = vmatpush1.msra.mxu0 0.0
    %781 = vmatprep.subr.mxu0 0.0
    %782 = vmatpush1.msra.mxu0 0.0
    %783 = vmatprep.subr.mxu0 0.0
    %784 = vmatpush1.msra.mxu0 0.0
    %785 = vmatprep.subr.mxu0 0.0
    %786 = vmatpush1.msra.mxu0 0.0
    %787 = vmatprep.subr.mxu0 0.0
    %788 = vmatpush1.msra.mxu0 0.0
    %789 = vmatprep.subr.mxu0 0.0
    %790 = vmatpush1.msra.mxu0 0.0
    %791 = vmatprep.subr.mxu0 0.0
    %792 = vmatpush1.msra.mxu0 0.0
    %793 = vmatprep.subr.mxu0 0.0
    %794 = vmatpush1.msra.mxu0 0.0
    %795 = vmatprep.subr.mxu0 0.0
    %796 = vmatpush1.msra.mxu0 0.0
    %797 = vmatprep.subr.mxu0 0.0
    %798 = vmatpush1.msra.mxu0 0.0
    %799 = vmatprep.subr.mxu0 0.0
    %800 = vmatpush1.msra.mxu0 0.0
    %801 = vmatprep.subr.mxu0 0.0
    %802 = vmatpush1.msra.mxu0 0.0
    %803 = vmatprep.subr.mxu0 0.0
    %804 = vmatpush1.msra.mxu0 0.0
    %805 = vmatprep.subr.mxu0 0.0
    %806 = vmatpush1.msra.mxu0 0.0
    %807 = vmatprep.subr.mxu0 0.0
    %808 = vmatpush1.msra.mxu0 0.0
    %809 = vmatprep.subr.mxu0 0.0
    %810 = vmatpush1.msra.mxu0 0.0
    %811 = vmatprep.subr.mxu0 0.0
    %812 = vmatpush1.msra.mxu0 0.0
    %813 = vmatprep.mubr.f32.mxu0 0.0
    %814 = vmatmul.mubr.f32.gmra.mrb[0].mxu0 %v745
    %v815 = vpop.f32.mrb[0].mxu0
    %v816 = vadd.f32 %v444, %v815
    %v817 = vpop.f32.mrb[0].mxu0
    %818 = vmatprep.mubr.f32.mxu0 0.0
    %819 = vmatmul.mubr.f32.gmra.mrb[0].mxu0 %v747
    %v820 = vpop.f32.mrb[0].mxu0
    %v821 = vadd.f32 %v444, %v820
    %v822 = vpop.f32.mrb[0].mxu0
    %823 = vdwg.mxu0
    %826 = vrot.lane.b32.xlu0 %v730, 112
    %v827 = vpop.permute.xlu0 %826
    %828 = vrot.lane.b32.xlu0 %v731, 112
    %v829 = vpop.permute.xlu0 %828
    %v830 = vsel %vm445, %v827, 0
    %v832 = vsel %vm445, %v829, 0
    %834 = vmatprep.subr.mxu0 0.0
    %835 = vmatpush1.msra.mxu0 %v433
    %836 = vmatprep.subr.mxu0 0.0
    %837 = vmatpush1.msra.mxu0 %v434
    %838 = vmatprep.subr.mxu0 0.0
    %839 = vmatpush1.msra.mxu0 0.0
    %840 = vmatprep.subr.mxu0 0.0
    %841 = vmatpush1.msra.mxu0 0.0
    %842 = vmatprep.subr.mxu0 0.0
    %843 = vmatpush1.msra.mxu0 0.0
    %844 = vmatprep.subr.mxu0 0.0
    %845 = vmatpush1.msra.mxu0 0.0
    %846 = vmatprep.subr.mxu0 0.0
    %847 = vmatpush1.msra.mxu0 0.0
    %848 = vmatprep.subr.mxu0 0.0
    %849 = vmatpush1.msra.mxu0 0.0
    %850 = vmatprep.subr.mxu0 0.0
    %851 = vmatpush1.msra.mxu0 0.0
    %852 = vmatprep.subr.mxu0 0.0
    %853 = vmatpush1.msra.mxu0 0.0
    %854 = vmatprep.subr.mxu0 0.0
    %855 = vmatpush1.msra.mxu0 0.0
    %856 = vmatprep.subr.mxu0 0.0
    %857 = vmatpush1.msra.mxu0 0.0
    %858 = vmatprep.subr.mxu0 0.0
    %859 = vmatpush1.msra.mxu0 0.0
    %860 = vmatprep.subr.mxu0 0.0
    %861 = vmatpush1.msra.mxu0 0.0
    %862 = vmatprep.subr.mxu0 0.0
    %863 = vmatpush1.msra.mxu0 0.0
    %864 = vmatprep.subr.mxu0 0.0
    %865 = vmatpush1.msra.mxu0 0.0
    %866 = vmatprep.subr.mxu0 0.0
    %867 = vmatpush1.msra.mxu0 0.0
    %868 = vmatprep.subr.mxu0 0.0
    %869 = vmatpush1.msra.mxu0 0.0
    %870 = vmatprep.subr.mxu0 0.0
    %871 = vmatpush1.msra.mxu0 0.0
    %872 = vmatprep.subr.mxu0 0.0
    %873 = vmatpush1.msra.mxu0 0.0
    %874 = vmatprep.subr.mxu0 0.0
    %875 = vmatpush1.msra.mxu0 0.0
    %876 = vmatprep.subr.mxu0 0.0
    %877 = vmatpush1.msra.mxu0 0.0
    %878 = vmatprep.subr.mxu0 0.0
    %879 = vmatpush1.msra.mxu0 0.0
    %880 = vmatprep.subr.mxu0 0.0
    %881 = vmatpush1.msra.mxu0 0.0
    %882 = vmatprep.subr.mxu0 0.0
    %883 = vmatpush1.msra.mxu0 0.0
    %884 = vmatprep.subr.mxu0 0.0
    %885 = vmatpush1.msra.mxu0 0.0
    %886 = vmatprep.subr.mxu0 0.0
    %887 = vmatpush1.msra.mxu0 0.0
    %888 = vmatprep.subr.mxu0 0.0
    %889 = vmatpush1.msra.mxu0 0.0
    %890 = vmatprep.subr.mxu0 0.0
    %891 = vmatpush1.msra.mxu0 0.0
    %892 = vmatprep.subr.mxu0 0.0
    %893 = vmatpush1.msra.mxu0 0.0
    %894 = vmatprep.subr.mxu0 0.0
    %895 = vmatpush1.msra.mxu0 0.0
    %896 = vmatprep.subr.mxu0 0.0
    %897 = vmatpush1.msra.mxu0 0.0
    %898 = vmatprep.mubr.f32.mxu0 0.0
    %899 = vmatmul.mubr.f32.gmra.mrb[0].mxu0 %v830
    %v900 = vpop.f32.mrb[0].mxu0
    %v901 = vadd.f32 %v530, %v900
    %v902 = vpop.f32.mrb[0].mxu0
    %903 = vmatprep.mubr.f32.mxu0 0.0
    %904 = vmatmul.mubr.f32.gmra.mrb[0].mxu0 %v832
    %v905 = vpop.f32.mrb[0].mxu0
    %v906 = vadd.f32 %v530, %v905
    %v907 = vpop.f32.mrb[0].mxu0
    %908 = vdwg.mxu0
    %v909 = vld [vmem:[#allocation2 + $0x10] sm:$0xff]
    %v910 = vld [vmem:[#allocation2 + $0x18] sm:$0xff]
    %v911 = vadd.f32 %v909, %v816
    %v912 = vadd.f32 %v910, %v821
    %v913 = vxor.u32 %v911, 2147483648
    %v914 = vxor.u32 %v912, 2147483648
    %v915 = vmul.f32 %v913, 1.442695
    %v916 = vpow.pop %v915
    %v917 = vmul.f32 %v914, 1.442695
    %v918 = vpow.pop %v917
    %v919 = vadd.f32 %v916, 1.0
    %v920 = vadd.f32 %v918, 1.0
    %v921 = vrcp.pop %v919
    %v922 = vmul.f32 1.0, %v921
    %v923 = vrcp.pop %v920
    %v924 = vmul.f32 1.0, %v923
    %927 = vrot.lane.b32.xlu0 %v816, 96
    %v928 = vpop.permute.xlu0 %927
    %929 = vrot.lane.b32.xlu0 %v821, 96
    %v930 = vpop.permute.xlu0 %929
    %v933 = vmul.f32 %v922, %v928
    %v934 = vmul.f32 %v924, %v930
    %937 = vrot.lane.b32.xlu0 %v933, 32
    %v938 = vpop.permute.xlu0 %937
    %939 = vrot.lane.b32.xlu0 %v934, 32
    %v940 = vpop.permute.xlu0 %939
    %v943 = vadd.f32 %v909, %v938
    %v944 = vadd.f32 %v910, %v940
    %v945 = vtanh.pop %v943
    %v946 = vtanh.pop %v944
    %v947 = vsub.f32 1.0, %v922
    %v948 = vsub.f32 1.0, %v924
    %951 = vrot.lane.b32.xlu0 %v945, 112
    %v952 = vpop.permute.xlu0 %951
    %953 = vrot.lane.b32.xlu0 %v946, 112
    %v954 = vpop.permute.xlu0 %953
    %v957 = vmul.f32 %v947, %v952
    %v958 = vmul.f32 %v948, %v954
    %v959 = vmul.f32 %v922, %v670
    %v960 = vmul.f32 %v924, %v671
    %v961 = vadd.f32 %v957, %v959
    %v962 = vadd.f32 %v958, %v960
    %v963 = vld [vmem:[%s414 + $0x60] sm:$0xff]
    %v964 = vld [vmem:[%s414 + $0x68] sm:$0xff]
    %v965 = vadd.f32 %v963, %v901
    %v966 = vadd.f32 %v964, %v906
    %v967 = vxor.u32 %v965, 2147483648
    %v968 = vxor.u32 %v966, 2147483648
    %v969 = vmul.f32 %v967, 1.442695
    %v970 = vpow.pop %v969
    %v971 = vmul.f32 %v968, 1.442695
    %v972 = vpow.pop %v971
    %v973 = vadd.f32 %v970, 1.0
    %v974 = vadd.f32 %v972, 1.0
    %v975 = vrcp.pop %v973
    %v976 = vmul.f32 1.0, %v975
    %v977 = vrcp.pop %v974
    %v978 = vmul.f32 1.0, %v977
    %981 = vrot.lane.b32.xlu0 %v901, 96
    %v982 = vpop.permute.xlu0 %981
    %983 = vrot.lane.b32.xlu0 %v906, 96
    %v984 = vpop.permute.xlu0 %983
    %v987 = vmul.f32 %v976, %v982
    %v988 = vmul.f32 %v978, %v984
    %991 = vrot.lane.b32.xlu0 %v987, 32
    %v992 = vpop.permute.xlu0 %991
    %993 = vrot.lane.b32.xlu0 %v988, 32
    %v994 = vpop.permute.xlu0 %993
    %v997 = vadd.f32 %v963, %v992
    %v998 = vadd.f32 %v964, %v994
    %v999 = vtanh.pop %v997
    %v1000 = vtanh.pop %v998
    %v1001 = vsub.f32 1.0, %v976
    %v1002 = vsub.f32 1.0, %v978
    %1005 = vrot.lane.b32.xlu0 %v999, 112
    %v1006 = vpop.permute.xlu0 %1005
    %1007 = vrot.lane.b32.xlu0 %v1000, 112
    %v1008 = vpop.permute.xlu0 %1007
    %v1011 = vmul.f32 %v1001, %v1006
    %v1012 = vmul.f32 %v1002, %v1008
    %v1013 = vmul.f32 %v976, %v730
    %v1014 = vmul.f32 %v978, %v731
    %v1015 = vadd.f32 %v1011, %v1013
    %v1016 = vadd.f32 %v1012, %v1014
    %1019 = vrot.lane.b32.xlu0 %v961, 112
    %v1020 = vpop.permute.xlu0 %1019
    %1021 = vrot.lane.b32.xlu0 %v962, 112
    %v1022 = vpop.permute.xlu0 %1021
    %1025 = vst.msk [vmem:[#allocation3 + $0x10] sm:$0xff] %vm445, %v1020
    %1026 = vst.msk [vmem:[#allocation3 + $0x18] sm:$0xff] %vm445, %v1022
    %1027 = vst.msk [vmem:[#allocation3 + $0x60] sm:$0xff] %vm742, %v1015
    %1028 = vst.msk [vmem:[#allocation3 + $0x68] sm:$0xff] %vm742, %v1016
    %v1029 = vsel %vm445, %v1020, 0
    %v1031 = vsel %vm445, %v1022, 0
    %1033 = vmatprep.subr.mxu0 0.0
    %1034 = vmatpush1.msra.mxu0 %v431
    %1035 = vmatprep.subr.mxu0 0.0
    %1036 = vmatpush1.msra.mxu0 %v432
    %1037 = vmatprep.subr.mxu0 0.0
    %1038 = vmatpush1.msra.mxu0 0.0
    %1039 = vmatprep.subr.mxu0 0.0
    %1040 = vmatpush1.msra.mxu0 0.0
    %1041 = vmatprep.subr.mxu0 0.0
    %1042 = vmatpush1.msra.mxu0 0.0
    %1043 = vmatprep.subr.mxu0 0.0
    %1044 = vmatpush1.msra.mxu0 0.0
    %1045 = vmatprep.subr.mxu0 0.0
    %1046 = vmatpush1.msra.mxu0 0.0
    %1047 = vmatprep.subr.mxu0 0.0
    %1048 = vmatpush1.msra.mxu0 0.0
    %1049 = vmatprep.subr.mxu0 0.0
    %1050 = vmatpush1.msra.mxu0 0.0
    %1051 = vmatprep.subr.mxu0 0.0
    %1052 = vmatpush1.msra.mxu0 0.0
    %1053 = vmatprep.subr.mxu0 0.0
    %1054 = vmatpush1.msra.mxu0 0.0
    %1055 = vmatprep.subr.mxu0 0.0
    %1056 = vmatpush1.msra.mxu0 0.0
    %1057 = vmatprep.subr.mxu0 0.0
    %1058 = vmatpush1.msra.mxu0 0.0
    %1059 = vmatprep.subr.mxu0 0.0
    %1060 = vmatpush1.msra.mxu0 0.0
    %1061 = vmatprep.subr.mxu0 0.0
    %1062 = vmatpush1.msra.mxu0 0.0
    %1063 = vmatprep.subr.mxu0 0.0
    %1064 = vmatpush1.msra.mxu0 0.0
    %1065 = vmatprep.subr.mxu0 0.0
    %1066 = vmatpush1.msra.mxu0 0.0
    %1067 = vmatprep.subr.mxu0 0.0
    %1068 = vmatpush1.msra.mxu0 0.0
    %1069 = vmatprep.subr.mxu0 0.0
    %1070 = vmatpush1.msra.mxu0 0.0
    %1071 = vmatprep.subr.mxu0 0.0
    %1072 = vmatpush1.msra.mxu0 0.0
    %1073 = vmatprep.subr.mxu0 0.0
    %1074 = vmatpush1.msra.mxu0 0.0
    %1075 = vmatprep.subr.mxu0 0.0
    %1076 = vmatpush1.msra.mxu0 0.0
    %1077 = vmatprep.subr.mxu0 0.0
    %1078 = vmatpush1.msra.mxu0 0.0
    %1079 = vmatprep.subr.mxu0 0.0
    %1080 = vmatpush1.msra.mxu0 0.0
    %1081 = vmatprep.subr.mxu0 0.0
    %1082 = vmatpush1.msra.mxu0 0.0
    %1083 = vmatprep.subr.mxu0 0.0
    %1084 = vmatpush1.msra.mxu0 0.0
    %1085 = vmatprep.subr.mxu0 0.0
    %1086 = vmatpush1.msra.mxu0 0.0
    %1087 = vmatprep.subr.mxu0 0.0
    %1088 = vmatpush1.msra.mxu0 0.0
    %1089 = vmatprep.subr.mxu0 0.0
    %1090 = vmatpush1.msra.mxu0 0.0
    %1091 = vmatprep.subr.mxu0 0.0
    %1092 = vmatpush1.msra.mxu0 0.0
    %1093 = vmatprep.subr.mxu0 0.0
    %1094 = vmatpush1.msra.mxu0 0.0
    %1095 = vmatprep.subr.mxu0 0.0
    %1096 = vmatpush1.msra.mxu0 0.0
    %1097 = vmatprep.mubr.f32.mxu0 0.0
    %1098 = vmatmul.mubr.f32.gmra.mrb[0].mxu0 %v1029
    %v1099 = vpop.f32.mrb[0].mxu0
    %v1100 = vadd.f32 %v444, %v1099
    %v1101 = vpop.f32.mrb[0].mxu0
    %1102 = vmatprep.mubr.f32.mxu0 0.0
    %1103 = vmatmul.mubr.f32.gmra.mrb[0].mxu0 %v1031
    %v1104 = vpop.f32.mrb[0].mxu0
    %v1105 = vadd.f32 %v444, %v1104
    %v1106 = vpop.f32.mrb[0].mxu0
    %1107 = vdwg.mxu0
    %1110 = vrot.lane.b32.xlu0 %v1015, 112
    %v1111 = vpop.permute.xlu0 %1110
    %1112 = vrot.lane.b32.xlu0 %v1016, 112
    %v1113 = vpop.permute.xlu0 %1112
    %v1114 = vsel %vm445, %v1111, 0
    %v1116 = vsel %vm445, %v1113, 0
    %1118 = vmatprep.subr.mxu0 0.0
    %1119 = vmatpush1.msra.mxu0 %v433
    %1120 = vmatprep.subr.mxu0 0.0
    %1121 = vmatpush1.msra.mxu0 %v434
    %1122 = vmatprep.subr.mxu0 0.0
    %1123 = vmatpush1.msra.mxu0 0.0
    %1124 = vmatprep.subr.mxu0 0.0
    %1125 = vmatpush1.msra.mxu0 0.0
    %1126 = vmatprep.subr.mxu0 0.0
    %1127 = vmatpush1.msra.mxu0 0.0
    %1128 = vmatprep.subr.mxu0 0.0
    %1129 = vmatpush1.msra.mxu0 0.0
    %1130 = vmatprep.subr.mxu0 0.0
    %1131 = vmatpush1.msra.mxu0 0.0
    %1132 = vmatprep.subr.mxu0 0.0
    %1133 = vmatpush1.msra.mxu0 0.0
    %1134 = vmatprep.subr.mxu0 0.0
    %1135 = vmatpush1.msra.mxu0 0.0
    %1136 = vmatprep.subr.mxu0 0.0
    %1137 = vmatpush1.msra.mxu0 0.0
    %1138 = vmatprep.subr.mxu0 0.0
    %1139 = vmatpush1.msra.mxu0 0.0
    %1140 = vmatprep.subr.mxu0 0.0
    %1141 = vmatpush1.msra.mxu0 0.0
    %1142 = vmatprep.subr.mxu0 0.0
    %1143 = vmatpush1.msra.mxu0 0.0
    %1144 = vmatprep.subr.mxu0 0.0
    %1145 = vmatpush1.msra.mxu0 0.0
    %1146 = vmatprep.subr.mxu0 0.0
    %1147 = vmatpush1.msra.mxu0 0.0
    %1148 = vmatprep.subr.mxu0 0.0
    %1149 = vmatpush1.msra.mxu0 0.0
    %1150 = vmatprep.subr.mxu0 0.0
    %1151 = vmatpush1.msra.mxu0 0.0
    %1152 = vmatprep.subr.mxu0 0.0
    %1153 = vmatpush1.msra.mxu0 0.0
    %1154 = vmatprep.subr.mxu0 0.0
    %1155 = vmatpush1.msra.mxu0 0.0
    %1156 = vmatprep.subr.mxu0 0.0
    %1157 = vmatpush1.msra.mxu0 0.0
    %1158 = vmatprep.subr.mxu0 0.0
    %1159 = vmatpush1.msra.mxu0 0.0
    %1160 = vmatprep.subr.mxu0 0.0
    %1161 = vmatpush1.msra.mxu0 0.0
    %1162 = vmatprep.subr.mxu0 0.0
    %1163 = vmatpush1.msra.mxu0 0.0
    %1164 = vmatprep.subr.mxu0 0.0
    %1165 = vmatpush1.msra.mxu0 0.0
    %1166 = vmatprep.subr.mxu0 0.0
    %1167 = vmatpush1.msra.mxu0 0.0
    %1168 = vmatprep.subr.mxu0 0.0
    %1169 = vmatpush1.msra.mxu0 0.0
    %1170 = vmatprep.subr.mxu0 0.0
    %1171 = vmatpush1.msra.mxu0 0.0
    %1172 = vmatprep.subr.mxu0 0.0
    %1173 = vmatpush1.msra.mxu0 0.0
    %1174 = vmatprep.subr.mxu0 0.0
    %1175 = vmatpush1.msra.mxu0 0.0
    %1176 = vmatprep.subr.mxu0 0.0
    %1177 = vmatpush1.msra.mxu0 0.0
    %1178 = vmatprep.subr.mxu0 0.0
    %1179 = vmatpush1.msra.mxu0 0.0
    %1180 = vmatprep.subr.mxu0 0.0
    %1181 = vmatpush1.msra.mxu0 0.0
    %1182 = vmatprep.mubr.f32.mxu0 0.0
    %1183 = vmatmul.mubr.f32.gmra.mrb[0].mxu0 %v1114
    %v1184 = vpop.f32.mrb[0].mxu0
    %v1185 = vadd.f32 %v530, %v1184
    %v1186 = vpop.f32.mrb[0].mxu0
    %1187 = vmatprep.mubr.f32.mxu0 0.0
    %1188 = vmatmul.mubr.f32.gmra.mrb[0].mxu0 %v1116
    %v1189 = vpop.f32.mrb[0].mxu0
    %v1190 = vadd.f32 %v530, %v1189
    %v1191 = vpop.f32.mrb[0].mxu0
    %1192 = vdwg.mxu0
    %v1193 = vld [vmem:[#allocation2 + $0x20] sm:$0xff]
    %v1194 = vld [vmem:[#allocation2 + $0x28] sm:$0xff]
    %v1195 = vadd.f32 %v1193, %v1100
    %v1196 = vadd.f32 %v1194, %v1105
    %v1197 = vxor.u32 %v1195, 2147483648
    %v1198 = vxor.u32 %v1196, 2147483648
    %v1199 = vmul.f32 %v1197, 1.442695
    %v1200 = vpow.pop %v1199
    %v1201 = vmul.f32 %v1198, 1.442695
    %v1202 = vpow.pop %v1201
    %v1203 = vadd.f32 %v1200, 1.0
    %v1204 = vadd.f32 %v1202, 1.0
    %v1205 = vrcp.pop %v1203
    %v1206 = vmul.f32 1.0, %v1205
    %v1207 = vrcp.pop %v1204
    %v1208 = vmul.f32 1.0, %v1207
    %1211 = vrot.lane.b32.xlu0 %v1100, 96
    %v1212 = vpop.permute.xlu0 %1211
    %1213 = vrot.lane.b32.xlu0 %v1105, 96
    %v1214 = vpop.permute.xlu0 %1213
    %v1217 = vmul.f32 %v1206, %v1212
    %v1218 = vmul.f32 %v1208, %v1214
    %1221 = vrot.lane.b32.xlu0 %v1217, 32
    %v1222 = vpop.permute.xlu0 %1221
    %1223 = vrot.lane.b32.xlu0 %v1218, 32
    %v1224 = vpop.permute.xlu0 %1223
    %v1227 = vadd.f32 %v1193, %v1222
    %v1228 = vadd.f32 %v1194, %v1224
    %v1229 = vtanh.pop %v1227
    %v1230 = vtanh.pop %v1228
    %v1231 = vsub.f32 1.0, %v1206
    %v1232 = vsub.f32 1.0, %v1208
    %1235 = vrot.lane.b32.xlu0 %v1229, 112
    %v1236 = vpop.permute.xlu0 %1235
    %1237 = vrot.lane.b32.xlu0 %v1230, 112
    %v1238 = vpop.permute.xlu0 %1237
    %v1241 = vmul.f32 %v1231, %v1236
    %v1242 = vmul.f32 %v1232, %v1238
    %v1243 = vmul.f32 %v1206, %v961
    %v1244 = vmul.f32 %v1208, %v962
    %v1245 = vadd.f32 %v1241, %v1243
    %v1246 = vadd.f32 %v1242, %v1244
    %v1247 = vld [vmem:[%s414 + $0x50] sm:$0xff]
    %v1248 = vld [vmem:[%s414 + $0x58] sm:$0xff]
    %v1249 = vadd.f32 %v1247, %v1185
    %v1250 = vadd.f32 %v1248, %v1190
    %v1251 = vxor.u32 %v1249, 2147483648
    %v1252 = vxor.u32 %v1250, 2147483648
    %v1253 = vmul.f32 %v1251, 1.442695
    %v1254 = vpow.pop %v1253
    %v1255 = vmul.f32 %v1252, 1.442695
    %v1256 = vpow.pop %v1255
    %v1257 = vadd.f32 %v1254, 1.0
    %v1258 = vadd.f32 %v1256, 1.0
    %v1259 = vrcp.pop %v1257
    %v1260 = vmul.f32 1.0, %v1259
    %v1261 = vrcp.pop %v1258
    %v1262 = vmul.f32 1.0, %v1261
    %1265 = vrot.lane.b32.xlu0 %v1185, 96
    %v1266 = vpop.permute.xlu0 %1265
    %1267 = vrot.lane.b32.xlu0 %v1190, 96
    %v1268 = vpop.permute.xlu0 %1267
    %v1271 = vmul.f32 %v1260, %v1266
    %v1272 = vmul.f32 %v1262, %v1268
    %1275 = vrot.lane.b32.xlu0 %v1271, 32
    %v1276 = vpop.permute.xlu0 %1275
    %1277 = vrot.lane.b32.xlu0 %v1272, 32
    %v1278 = vpop.permute.xlu0 %1277
    %v1281 = vadd.f32 %v1247, %v1276
    %v1282 = vadd.f32 %v1248, %v1278
    %v1283 = vtanh.pop %v1281
    %v1284 = vtanh.pop %v1282
    %v1285 = vsub.f32 1.0, %v1260
    %v1286 = vsub.f32 1.0, %v1262
    %1289 = vrot.lane.b32.xlu0 %v1283, 112
    %v1290 = vpop.permute.xlu0 %1289
    %1291 = vrot.lane.b32.xlu0 %v1284, 112
    %v1292 = vpop.permute.xlu0 %1291
    %v1295 = vmul.f32 %v1285, %v1290
    %v1296 = vmul.f32 %v1286, %v1292
    %v1297 = vmul.f32 %v1260, %v1015
    %v1298 = vmul.f32 %v1262, %v1016
    %v1299 = vadd.f32 %v1295, %v1297
    %v1300 = vadd.f32 %v1296, %v1298
    %1303 = vrot.lane.b32.xlu0 %v1245, 112
    %v1304 = vpop.permute.xlu0 %1303
    %1305 = vrot.lane.b32.xlu0 %v1246, 112
    %v1306 = vpop.permute.xlu0 %1305
    %1309 = vst.msk [vmem:[#allocation3 + $0x20] sm:$0xff] %vm445, %v1304
    %1310 = vst.msk [vmem:[#allocation3 + $0x28] sm:$0xff] %vm445, %v1306
    %1311 = vst.msk [vmem:[#allocation3 + $0x50] sm:$0xff] %vm742, %v1299
    %1312 = vst.msk [vmem:[#allocation3 + $0x58] sm:$0xff] %vm742, %v1300
    %v1313 = vsel %vm445, %v1304, 0
    %v1315 = vsel %vm445, %v1306, 0
    %1317 = vmatprep.subr.mxu0 0.0
    %1318 = vmatpush1.msra.mxu0 %v431
    %1319 = vmatprep.subr.mxu0 0.0
    %1320 = vmatpush1.msra.mxu0 %v432
    %1321 = vmatprep.subr.mxu0 0.0
    %1322 = vmatpush1.msra.mxu0 0.0
    %1323 = vmatprep.subr.mxu0 0.0
    %1324 = vmatpush1.msra.mxu0 0.0
    %1325 = vmatprep.subr.mxu0 0.0
    %1326 = vmatpush1.msra.mxu0 0.0
    %1327 = vmatprep.subr.mxu0 0.0
    %1328 = vmatpush1.msra.mxu0 0.0
    %1329 = vmatprep.subr.mxu0 0.0
    %1330 = vmatpush1.msra.mxu0 0.0
    %1331 = vmatprep.subr.mxu0 0.0
    %1332 = vmatpush1.msra.mxu0 0.0
    %1333 = vmatprep.subr.mxu0 0.0
    %1334 = vmatpush1.msra.mxu0 0.0
    %1335 = vmatprep.subr.mxu0 0.0
    %1336 = vmatpush1.msra.mxu0 0.0
    %1337 = vmatprep.subr.mxu0 0.0
    %1338 = vmatpush1.msra.mxu0 0.0
    %1339 = vmatprep.subr.mxu0 0.0
    %1340 = vmatpush1.msra.mxu0 0.0
    %1341 = vmatprep.subr.mxu0 0.0
    %1342 = vmatpush1.msra.mxu0 0.0
    %1343 = vmatprep.subr.mxu0 0.0
    %1344 = vmatpush1.msra.mxu0 0.0
    %1345 = vmatprep.subr.mxu0 0.0
    %1346 = vmatpush1.msra.mxu0 0.0
    %1347 = vmatprep.subr.mxu0 0.0
    %1348 = vmatpush1.msra.mxu0 0.0
    %1349 = vmatprep.subr.mxu0 0.0
    %1350 = vmatpush1.msra.mxu0 0.0
    %1351 = vmatprep.subr.mxu0 0.0
    %1352 = vmatpush1.msra.mxu0 0.0
    %1353 = vmatprep.subr.mxu0 0.0
    %1354 = vmatpush1.msra.mxu0 0.0
    %1355 = vmatprep.subr.mxu0 0.0
    %1356 = vmatpush1.msra.mxu0 0.0
    %1357 = vmatprep.subr.mxu0 0.0
    %1358 = vmatpush1.msra.mxu0 0.0
    %1359 = vmatprep.subr.mxu0 0.0
    %1360 = vmatpush1.msra.mxu0 0.0
    %1361 = vmatprep.subr.mxu0 0.0
    %1362 = vmatpush1.msra.mxu0 0.0
    %1363 = vmatprep.subr.mxu0 0.0
    %1364 = vmatpush1.msra.mxu0 0.0
    %1365 = vmatprep.subr.mxu0 0.0
    %1366 = vmatpush1.msra.mxu0 0.0
    %1367 = vmatprep.subr.mxu0 0.0
    %1368 = vmatpush1.msra.mxu0 0.0
    %1369 = vmatprep.subr.mxu0 0.0
    %1370 = vmatpush1.msra.mxu0 0.0
    %1371 = vmatprep.subr.mxu0 0.0
    %1372 = vmatpush1.msra.mxu0 0.0
    %1373 = vmatprep.subr.mxu0 0.0
    %1374 = vmatpush1.msra.mxu0 0.0
    %1375 = vmatprep.subr.mxu0 0.0
    %1376 = vmatpush1.msra.mxu0 0.0
    %1377 = vmatprep.subr.mxu0 0.0
    %1378 = vmatpush1.msra.mxu0 0.0
    %1379 = vmatprep.subr.mxu0 0.0
    %1380 = vmatpush1.msra.mxu0 0.0
    %1381 = vmatprep.mubr.f32.mxu0 0.0
    %1382 = vmatmul.mubr.f32.gmra.mrb[0].mxu0 %v1313
    %v1383 = vpop.f32.mrb[0].mxu0
    %v1384 = vadd.f32 %v444, %v1383
    %v1385 = vpop.f32.mrb[0].mxu0
    %1386 = vmatprep.mubr.f32.mxu0 0.0
    %1387 = vmatmul.mubr.f32.gmra.mrb[0].mxu0 %v1315
    %v1388 = vpop.f32.mrb[0].mxu0
    %v1389 = vadd.f32 %v444, %v1388
    %v1390 = vpop.f32.mrb[0].mxu0
    %1391 = vdwg.mxu0
    %1394 = vrot.lane.b32.xlu0 %v1299, 112
    %v1395 = vpop.permute.xlu0 %1394
    %1396 = vrot.lane.b32.xlu0 %v1300, 112
    %v1397 = vpop.permute.xlu0 %1396
    %v1398 = vsel %vm445, %v1395, 0
    %v1400 = vsel %vm445, %v1397, 0
    %1402 = vmatprep.subr.mxu0 0.0
    %1403 = vmatpush1.msra.mxu0 %v433
    %1404 = vmatprep.subr.mxu0 0.0
    %1405 = vmatpush1.msra.mxu0 %v434
    %1406 = vmatprep.subr.mxu0 0.0
    %1407 = vmatpush1.msra.mxu0 0.0
    %1408 = vmatprep.subr.mxu0 0.0
    %1409 = vmatpush1.msra.mxu0 0.0
    %1410 = vmatprep.subr.mxu0 0.0
    %1411 = vmatpush1.msra.mxu0 0.0
    %1412 = vmatprep.subr.mxu0 0.0
    %1413 = vmatpush1.msra.mxu0 0.0
    %1414 = vmatprep.subr.mxu0 0.0
    %1415 = vmatpush1.msra.mxu0 0.0
    %1416 = vmatprep.subr.mxu0 0.0
    %1417 = vmatpush1.msra.mxu0 0.0
    %1418 = vmatprep.subr.mxu0 0.0
    %1419 = vmatpush1.msra.mxu0 0.0
    %1420 = vmatprep.subr.mxu0 0.0
    %1421 = vmatpush1.msra.mxu0 0.0
    %1422 = vmatprep.subr.mxu0 0.0
    %1423 = vmatpush1.msra.mxu0 0.0
    %1424 = vmatprep.subr.mxu0 0.0
    %1425 = vmatpush1.msra.mxu0 0.0
    %1426 = vmatprep.subr.mxu0 0.0
    %1427 = vmatpush1.msra.mxu0 0.0
    %1428 = vmatprep.subr.mxu0 0.0
    %1429 = vmatpush1.msra.mxu0 0.0
    %1430 = vmatprep.subr.mxu0 0.0
    %1431 = vmatpush1.msra.mxu0 0.0
    %1432 = vmatprep.subr.mxu0 0.0
    %1433 = vmatpush1.msra.mxu0 0.0
    %1434 = vmatprep.subr.mxu0 0.0
    %1435 = vmatpush1.msra.mxu0 0.0
    %1436 = vmatprep.subr.mxu0 0.0
    %1437 = vmatpush1.msra.mxu0 0.0
    %1438 = vmatprep.subr.mxu0 0.0
    %1439 = vmatpush1.msra.mxu0 0.0
    %1440 = vmatprep.subr.mxu0 0.0
    %1441 = vmatpush1.msra.mxu0 0.0
    %1442 = vmatprep.subr.mxu0 0.0
    %1443 = vmatpush1.msra.mxu0 0.0
    %1444 = vmatprep.subr.mxu0 0.0
    %1445 = vmatpush1.msra.mxu0 0.0
    %1446 = vmatprep.subr.mxu0 0.0
    %1447 = vmatpush1.msra.mxu0 0.0
    %1448 = vmatprep.subr.mxu0 0.0
    %1449 = vmatpush1.msra.mxu0 0.0
    %1450 = vmatprep.subr.mxu0 0.0
    %1451 = vmatpush1.msra.mxu0 0.0
    %1452 = vmatprep.subr.mxu0 0.0
    %1453 = vmatpush1.msra.mxu0 0.0
    %1454 = vmatprep.subr.mxu0 0.0
    %1455 = vmatpush1.msra.mxu0 0.0
    %1456 = vmatprep.subr.mxu0 0.0
    %1457 = vmatpush1.msra.mxu0 0.0
    %1458 = vmatprep.subr.mxu0 0.0
    %1459 = vmatpush1.msra.mxu0 0.0
    %1460 = vmatprep.subr.mxu0 0.0
    %1461 = vmatpush1.msra.mxu0 0.0
    %1462 = vmatprep.subr.mxu0 0.0
    %1463 = vmatpush1.msra.mxu0 0.0
    %1464 = vmatprep.subr.mxu0 0.0
    %1465 = vmatpush1.msra.mxu0 0.0
    %1466 = vmatprep.mubr.f32.mxu0 0.0
    %1467 = vmatmul.mubr.f32.gmra.mrb[0].mxu0 %v1398
    %v1468 = vpop.f32.mrb[0].mxu0
    %v1469 = vadd.f32 %v530, %v1468
    %v1470 = vpop.f32.mrb[0].mxu0
    %1471 = vmatprep.mubr.f32.mxu0 0.0
    %1472 = vmatmul.mubr.f32.gmra.mrb[0].mxu0 %v1400
    %v1473 = vpop.f32.mrb[0].mxu0
    %v1474 = vadd.f32 %v530, %v1473
    %v1475 = vpop.f32.mrb[0].mxu0
    %1476 = vdwg.mxu0
    %v1477 = vld [vmem:[#allocation2 + $0x30] sm:$0xff]
    %v1478 = vld [vmem:[#allocation2 + $0x38] sm:$0xff]
    %v1479 = vadd.f32 %v1477, %v1384
    %v1480 = vadd.f32 %v1478, %v1389
    %v1481 = vxor.u32 %v1479, 2147483648
    %v1482 = vxor.u32 %v1480, 2147483648
    %v1483 = vmul.f32 %v1481, 1.442695
    %v1484 = vpow.pop %v1483
    %v1485 = vmul.f32 %v1482, 1.442695
    %v1486 = vpow.pop %v1485
    %v1487 = vadd.f32 %v1484, 1.0
    %v1488 = vadd.f32 %v1486, 1.0
    %v1489 = vrcp.pop %v1487
    %v1490 = vmul.f32 1.0, %v1489
    %v1491 = vrcp.pop %v1488
    %v1492 = vmul.f32 1.0, %v1491
    %1495 = vrot.lane.b32.xlu0 %v1384, 96
    %v1496 = vpop.permute.xlu0 %1495
    %1497 = vrot.lane.b32.xlu0 %v1389, 96
    %v1498 = vpop.permute.xlu0 %1497
    %v1501 = vmul.f32 %v1490, %v1496
    %v1502 = vmul.f32 %v1492, %v1498
    %1505 = vrot.lane.b32.xlu0 %v1501, 32
    %v1506 = vpop.permute.xlu0 %1505
    %1507 = vrot.lane.b32.xlu0 %v1502, 32
    %v1508 = vpop.permute.xlu0 %1507
    %v1511 = vadd.f32 %v1477, %v1506
    %v1512 = vadd.f32 %v1478, %v1508
    %v1513 = vtanh.pop %v1511
    %v1514 = vtanh.pop %v1512
    %v1515 = vsub.f32 1.0, %v1490
    %v1516 = vsub.f32 1.0, %v1492
    %1519 = vrot.lane.b32.xlu0 %v1513, 112
    %v1520 = vpop.permute.xlu0 %1519
    %1521 = vrot.lane.b32.xlu0 %v1514, 112
    %v1522 = vpop.permute.xlu0 %1521
    %v1525 = vmul.f32 %v1515, %v1520
    %v1526 = vmul.f32 %v1516, %v1522
    %v1527 = vmul.f32 %v1490, %v1245
    %v1528 = vmul.f32 %v1492, %v1246
    %v1529 = vadd.f32 %v1525, %v1527
    %v1530 = vadd.f32 %v1526, %v1528
    %v1531 = vld [vmem:[%s414 + $0x40] sm:$0xff]
    %v1532 = vld [vmem:[%s414 + $0x48] sm:$0xff]
    %v1533 = vadd.f32 %v1531, %v1469
    %v1534 = vadd.f32 %v1532, %v1474
    %v1535 = vxor.u32 %v1533, 2147483648
    %v1536 = vxor.u32 %v1534, 2147483648
    %v1537 = vmul.f32 %v1535, 1.442695
    %v1538 = vpow.pop %v1537
    %v1539 = vmul.f32 %v1536, 1.442695
    %v1540 = vpow.pop %v1539
    %v1541 = vadd.f32 %v1538, 1.0
    %v1542 = vadd.f32 %v1540, 1.0
    %v1543 = vrcp.pop %v1541
    %v1544 = vmul.f32 1.0, %v1543
    %v1545 = vrcp.pop %v1542
    %v1546 = vmul.f32 1.0, %v1545
    %1549 = vrot.lane.b32.xlu0 %v1469, 96
    %v1550 = vpop.permute.xlu0 %1549
    %1551 = vrot.lane.b32.xlu0 %v1474, 96
    %v1552 = vpop.permute.xlu0 %1551
    %v1555 = vmul.f32 %v1544, %v1550
    %v1556 = vmul.f32 %v1546, %v1552
    %1559 = vrot.lane.b32.xlu0 %v1555, 32
    %v1560 = vpop.permute.xlu0 %1559
    %1561 = vrot.lane.b32.xlu0 %v1556, 32
    %v1562 = vpop.permute.xlu0 %1561
    %v1565 = vadd.f32 %v1531, %v1560
    %v1566 = vadd.f32 %v1532, %v1562
    %v1567 = vtanh.pop %v1565
    %v1568 = vtanh.pop %v1566
    %v1569 = vsub.f32 1.0, %v1544
    %v1570 = vsub.f32 1.0, %v1546
    %1573 = vrot.lane.b32.xlu0 %v1567, 112
    %v1574 = vpop.permute.xlu0 %1573
    %1575 = vrot.lane.b32.xlu0 %v1568, 112
    %v1576 = vpop.permute.xlu0 %1575
    %v1579 = vmul.f32 %v1569, %v1574
    %v1580 = vmul.f32 %v1570, %v1576
    %v1581 = vmul.f32 %v1544, %v1299
    %v1582 = vmul.f32 %v1546, %v1300
    %v1583 = vadd.f32 %v1579, %v1581
    %v1584 = vadd.f32 %v1580, %v1582
    %1587 = vrot.lane.b32.xlu0 %v1529, 112
    %v1588 = vpop.permute.xlu0 %1587
    %1589 = vrot.lane.b32.xlu0 %v1530, 112
    %v1590 = vpop.permute.xlu0 %1589
    %1593 = vst.msk [vmem:[#allocation3 + $0x30] sm:$0xff] %vm445, %v1588
    %1594 = vst.msk [vmem:[#allocation3 + $0x38] sm:$0xff] %vm445, %v1590
    %1595 = vst.msk [vmem:[#allocation3 + $0x40] sm:$0xff] %vm742, %v1583
    %1596 = vst.msk [vmem:[#allocation3 + $0x48] sm:$0xff] %vm742, %v1584
    %v1597 = vsel %vm445, %v1588, 0
    %v1599 = vsel %vm445, %v1590, 0
    %1601 = vmatprep.subr.mxu0 0.0
    %1602 = vmatpush1.msra.mxu0 %v431
    %1603 = vmatprep.subr.mxu0 0.0
    %1604 = vmatpush1.msra.mxu0 %v432
    %1605 = vmatprep.subr.mxu0 0.0
    %1606 = vmatpush1.msra.mxu0 0.0
    %1607 = vmatprep.subr.mxu0 0.0
    %1608 = vmatpush1.msra.mxu0 0.0
    %1609 = vmatprep.subr.mxu0 0.0
    %1610 = vmatpush1.msra.mxu0 0.0
    %1611 = vmatprep.subr.mxu0 0.0
    %1612 = vmatpush1.msra.mxu0 0.0
    %1613 = vmatprep.subr.mxu0 0.0
    %1614 = vmatpush1.msra.mxu0 0.0
    %1615 = vmatprep.subr.mxu0 0.0
    %1616 = vmatpush1.msra.mxu0 0.0
    %1617 = vmatprep.subr.mxu0 0.0
    %1618 = vmatpush1.msra.mxu0 0.0
    %1619 = vmatprep.subr.mxu0 0.0
    %1620 = vmatpush1.msra.mxu0 0.0
    %1621 = vmatprep.subr.mxu0 0.0
    %1622 = vmatpush1.msra.mxu0 0.0
    %1623 = vmatprep.subr.mxu0 0.0
    %1624 = vmatpush1.msra.mxu0 0.0
    %1625 = vmatprep.subr.mxu0 0.0
    %1626 = vmatpush1.msra.mxu0 0.0
    %1627 = vmatprep.subr.mxu0 0.0
    %1628 = vmatpush1.msra.mxu0 0.0
    %1629 = vmatprep.subr.mxu0 0.0
    %1630 = vmatpush1.msra.mxu0 0.0
    %1631 = vmatprep.subr.mxu0 0.0
    %1632 = vmatpush1.msra.mxu0 0.0
    %1633 = vmatprep.subr.mxu0 0.0
    %1634 = vmatpush1.msra.mxu0 0.0
    %1635 = vmatprep.subr.mxu0 0.0
    %1636 = vmatpush1.msra.mxu0 0.0
    %1637 = vmatprep.subr.mxu0 0.0
    %1638 = vmatpush1.msra.mxu0 0.0
    %1639 = vmatprep.subr.mxu0 0.0
    %1640 = vmatpush1.msra.mxu0 0.0
    %1641 = vmatprep.subr.mxu0 0.0
    %1642 = vmatpush1.msra.mxu0 0.0
    %1643 = vmatprep.subr.mxu0 0.0
    %1644 = vmatpush1.msra.mxu0 0.0
    %1645 = vmatprep.subr.mxu0 0.0
    %1646 = vmatpush1.msra.mxu0 0.0
    %1647 = vmatprep.subr.mxu0 0.0
    %1648 = vmatpush1.msra.mxu0 0.0
    %1649 = vmatprep.subr.mxu0 0.0
    %1650 = vmatpush1.msra.mxu0 0.0
    %1651 = vmatprep.subr.mxu0 0.0
    %1652 = vmatpush1.msra.mxu0 0.0
    %1653 = vmatprep.subr.mxu0 0.0
    %1654 = vmatpush1.msra.mxu0 0.0
    %1655 = vmatprep.subr.mxu0 0.0
    %1656 = vmatpush1.msra.mxu0 0.0
    %1657 = vmatprep.subr.mxu0 0.0
    %1658 = vmatpush1.msra.mxu0 0.0
    %1659 = vmatprep.subr.mxu0 0.0
    %1660 = vmatpush1.msra.mxu0 0.0
    %1661 = vmatprep.subr.mxu0 0.0
    %1662 = vmatpush1.msra.mxu0 0.0
    %1663 = vmatprep.subr.mxu0 0.0
    %1664 = vmatpush1.msra.mxu0 0.0
    %1665 = vmatprep.mubr.f32.mxu0 0.0
    %1666 = vmatmul.mubr.f32.gmra.mrb[0].mxu0 %v1597
    %v1667 = vpop.f32.mrb[0].mxu0
    %v1668 = vadd.f32 %v444, %v1667
    %v1669 = vpop.f32.mrb[0].mxu0
    %1670 = vmatprep.mubr.f32.mxu0 0.0
    %1671 = vmatmul.mubr.f32.gmra.mrb[0].mxu0 %v1599
    %v1672 = vpop.f32.mrb[0].mxu0
    %v1673 = vadd.f32 %v444, %v1672
    %v1674 = vpop.f32.mrb[0].mxu0
    %1675 = vdwg.mxu0
    %1678 = vrot.lane.b32.xlu0 %v1583, 112
    %v1679 = vpop.permute.xlu0 %1678
    %1680 = vrot.lane.b32.xlu0 %v1584, 112
    %v1681 = vpop.permute.xlu0 %1680
    %v1682 = vsel %vm445, %v1679, 0
    %v1684 = vsel %vm445, %v1681, 0
    %1686 = vmatprep.subr.mxu0 0.0
    %1687 = vmatpush1.msra.mxu0 %v433
    %1688 = vmatprep.subr.mxu0 0.0
    %1689 = vmatpush1.msra.mxu0 %v434
    %1690 = vmatprep.subr.mxu0 0.0
    %1691 = vmatpush1.msra.mxu0 0.0
    %1692 = vmatprep.subr.mxu0 0.0
    %1693 = vmatpush1.msra.mxu0 0.0
    %1694 = vmatprep.subr.mxu0 0.0
    %1695 = vmatpush1.msra.mxu0 0.0
    %1696 = vmatprep.subr.mxu0 0.0
    %1697 = vmatpush1.msra.mxu0 0.0
    %1698 = vmatprep.subr.mxu0 0.0
    %1699 = vmatpush1.msra.mxu0 0.0
    %1700 = vmatprep.subr.mxu0 0.0
    %1701 = vmatpush1.msra.mxu0 0.0
    %1702 = vmatprep.subr.mxu0 0.0
    %1703 = vmatpush1.msra.mxu0 0.0
    %1704 = vmatprep.subr.mxu0 0.0
    %1705 = vmatpush1.msra.mxu0 0.0
    %1706 = vmatprep.subr.mxu0 0.0
    %1707 = vmatpush1.msra.mxu0 0.0
    %1708 = vmatprep.subr.mxu0 0.0
    %1709 = vmatpush1.msra.mxu0 0.0
    %1710 = vmatprep.subr.mxu0 0.0
    %1711 = vmatpush1.msra.mxu0 0.0
    %1712 = vmatprep.subr.mxu0 0.0
    %1713 = vmatpush1.msra.mxu0 0.0
    %1714 = vmatprep.subr.mxu0 0.0
    %1715 = vmatpush1.msra.mxu0 0.0
    %1716 = vmatprep.subr.mxu0 0.0
    %1717 = vmatpush1.msra.mxu0 0.0
    %1718 = vmatprep.subr.mxu0 0.0
    %1719 = vmatpush1.msra.mxu0 0.0
    %1720 = vmatprep.subr.mxu0 0.0
    %1721 = vmatpush1.msra.mxu0 0.0
    %1722 = vmatprep.subr.mxu0 0.0
    %1723 = vmatpush1.msra.mxu0 0.0
    %1724 = vmatprep.subr.mxu0 0.0
    %1725 = vmatpush1.msra.mxu0 0.0
    %1726 = vmatprep.subr.mxu0 0.0
    %1727 = vmatpush1.msra.mxu0 0.0
    %1728 = vmatprep.subr.mxu0 0.0
    %1729 = vmatpush1.msra.mxu0 0.0
    %1730 = vmatprep.subr.mxu0 0.0
    %1731 = vmatpush1.msra.mxu0 0.0
    %1732 = vmatprep.subr.mxu0 0.0
    %1733 = vmatpush1.msra.mxu0 0.0
    %1734 = vmatprep.subr.mxu0 0.0
    %1735 = vmatpush1.msra.mxu0 0.0
    %1736 = vmatprep.subr.mxu0 0.0
    %1737 = vmatpush1.msra.mxu0 0.0
    %1738 = vmatprep.subr.mxu0 0.0
    %1739 = vmatpush1.msra.mxu0 0.0
    %1740 = vmatprep.subr.mxu0 0.0
    %1741 = vmatpush1.msra.mxu0 0.0
    %1742 = vmatprep.subr.mxu0 0.0
    %1743 = vmatpush1.msra.mxu0 0.0
    %1744 = vmatprep.subr.mxu0 0.0
    %1745 = vmatpush1.msra.mxu0 0.0
    %1746 = vmatprep.subr.mxu0 0.0
    %1747 = vmatpush1.msra.mxu0 0.0
    %1748 = vmatprep.subr.mxu0 0.0
    %1749 = vmatpush1.msra.mxu0 0.0
    %1750 = vmatprep.mubr.f32.mxu0 0.0
    %1751 = vmatmul.mubr.f32.gmra.mrb[0].mxu0 %v1682
    %v1752 = vpop.f32.mrb[0].mxu0
    %v1753 = vadd.f32 %v530, %v1752
    %v1754 = vpop.f32.mrb[0].mxu0
    %1755 = vmatprep.mubr.f32.mxu0 0.0
    %1756 = vmatmul.mubr.f32.gmra.mrb[0].mxu0 %v1684
    %v1757 = vpop.f32.mrb[0].mxu0
    %v1758 = vadd.f32 %v530, %v1757
    %v1759 = vpop.f32.mrb[0].mxu0
    %1760 = vdwg.mxu0
    %v1761 = vld [vmem:[#allocation2 + $0x40] sm:$0xff]
    %v1762 = vld [vmem:[#allocation2 + $0x48] sm:$0xff]
    %v1763 = vadd.f32 %v1761, %v1668
    %v1764 = vadd.f32 %v1762, %v1673
    %v1765 = vxor.u32 %v1763, 2147483648
    %v1766 = vxor.u32 %v1764, 2147483648
    %v1767 = vmul.f32 %v1765, 1.442695
    %v1768 = vpow.pop %v1767
    %v1769 = vmul.f32 %v1766, 1.442695
    %v1770 = vpow.pop %v1769
    %v1771 = vadd.f32 %v1768, 1.0
    %v1772 = vadd.f32 %v1770, 1.0
    %v1773 = vrcp.pop %v1771
    %v1774 = vmul.f32 1.0, %v1773
    %v1775 = vrcp.pop %v1772
    %v1776 = vmul.f32 1.0, %v1775
    %1779 = vrot.lane.b32.xlu0 %v1668, 96
    %v1780 = vpop.permute.xlu0 %1779
    %1781 = vrot.lane.b32.xlu0 %v1673, 96
    %v1782 = vpop.permute.xlu0 %1781
    %v1785 = vmul.f32 %v1774, %v1780
    %v1786 = vmul.f32 %v1776, %v1782
    %1789 = vrot.lane.b32.xlu0 %v1785, 32
    %v1790 = vpop.permute.xlu0 %1789
    %1791 = vrot.lane.b32.xlu0 %v1786, 32
    %v1792 = vpop.permute.xlu0 %1791
    %v1795 = vadd.f32 %v1761, %v1790
    %v1796 = vadd.f32 %v1762, %v1792
    %v1797 = vtanh.pop %v1795
    %v1798 = vtanh.pop %v1796
    %v1799 = vsub.f32 1.0, %v1774
    %v1800 = vsub.f32 1.0, %v1776
    %1803 = vrot.lane.b32.xlu0 %v1797, 112
    %v1804 = vpop.permute.xlu0 %1803
    %1805 = vrot.lane.b32.xlu0 %v1798, 112
    %v1806 = vpop.permute.xlu0 %1805
    %v1809 = vmul.f32 %v1799, %v1804
    %v1810 = vmul.f32 %v1800, %v1806
    %v1811 = vmul.f32 %v1774, %v1529
    %v1812 = vmul.f32 %v1776, %v1530
    %v1813 = vadd.f32 %v1809, %v1811
    %v1814 = vadd.f32 %v1810, %v1812
    %v1815 = vld [vmem:[%s414 + $0x30] sm:$0xff]
    %v1816 = vld [vmem:[%s414 + $0x38] sm:$0xff]
    %v1817 = vadd.f32 %v1815, %v1753
    %v1818 = vadd.f32 %v1816, %v1758
    %v1819 = vxor.u32 %v1817, 2147483648
    %v1820 = vxor.u32 %v1818, 2147483648
    %v1821 = vmul.f32 %v1819, 1.442695
    %v1822 = vpow.pop %v1821
    %v1823 = vmul.f32 %v1820, 1.442695
    %v1824 = vpow.pop %v1823
    %v1825 = vadd.f32 %v1822, 1.0
    %v1826 = vadd.f32 %v1824, 1.0
    %v1827 = vrcp.pop %v1825
    %v1828 = vmul.f32 1.0, %v1827
    %v1829 = vrcp.pop %v1826
    %v1830 = vmul.f32 1.0, %v1829
    %1833 = vrot.lane.b32.xlu0 %v1753, 96
    %v1834 = vpop.permute.xlu0 %1833
    %1835 = vrot.lane.b32.xlu0 %v1758, 96
    %v1836 = vpop.permute.xlu0 %1835
    %v1839 = vmul.f32 %v1828, %v1834
    %v1840 = vmul.f32 %v1830, %v1836
    %1843 = vrot.lane.b32.xlu0 %v1839, 32
    %v1844 = vpop.permute.xlu0 %1843
    %1845 = vrot.lane.b32.xlu0 %v1840, 32
    %v1846 = vpop.permute.xlu0 %1845
    %v1849 = vadd.f32 %v1815, %v1844
    %v1850 = vadd.f32 %v1816, %v1846
    %v1851 = vtanh.pop %v1849
    %v1852 = vtanh.pop %v1850
    %v1853 = vsub.f32 1.0, %v1828
    %v1854 = vsub.f32 1.0, %v1830
    %1857 = vrot.lane.b32.xlu0 %v1851, 112
    %v1858 = vpop.permute.xlu0 %1857
    %1859 = vrot.lane.b32.xlu0 %v1852, 112
    %v1860 = vpop.permute.xlu0 %1859
    %v1863 = vmul.f32 %v1853, %v1858
    %v1864 = vmul.f32 %v1854, %v1860
    %v1865 = vmul.f32 %v1828, %v1583
    %v1866 = vmul.f32 %v1830, %v1584
    %v1867 = vadd.f32 %v1863, %v1865
    %v1868 = vadd.f32 %v1864, %v1866
    %1871 = vrot.lane.b32.xlu0 %v1813, 112
    %v1872 = vpop.permute.xlu0 %1871
    %1873 = vrot.lane.b32.xlu0 %v1814, 112
    %v1874 = vpop.permute.xlu0 %1873
    %1877 = vst.msk [vmem:[#allocation3 + $0x40] sm:$0xff] %vm445, %v1872
    %1878 = vst.msk [vmem:[#allocation3 + $0x48] sm:$0xff] %vm445, %v1874
    %1879 = vst.msk [vmem:[#allocation3 + $0x30] sm:$0xff] %vm742, %v1867
    %1880 = vst.msk [vmem:[#allocation3 + $0x38] sm:$0xff] %vm742, %v1868
    %v1881 = vsel %vm445, %v1872, 0
    %v1883 = vsel %vm445, %v1874, 0
    %1885 = vmatprep.subr.mxu0 0.0
    %1886 = vmatpush1.msra.mxu0 %v431
    %1887 = vmatprep.subr.mxu0 0.0
    %1888 = vmatpush1.msra.mxu0 %v432
    %1889 = vmatprep.subr.mxu0 0.0
    %1890 = vmatpush1.msra.mxu0 0.0
    %1891 = vmatprep.subr.mxu0 0.0
    %1892 = vmatpush1.msra.mxu0 0.0
    %1893 = vmatprep.subr.mxu0 0.0
    %1894 = vmatpush1.msra.mxu0 0.0
    %1895 = vmatprep.subr.mxu0 0.0
    %1896 = vmatpush1.msra.mxu0 0.0
    %1897 = vmatprep.subr.mxu0 0.0
    %1898 = vmatpush1.msra.mxu0 0.0
    %1899 = vmatprep.subr.mxu0 0.0
    %1900 = vmatpush1.msra.mxu0 0.0
    %1901 = vmatprep.subr.mxu0 0.0
    %1902 = vmatpush1.msra.mxu0 0.0
    %1903 = vmatprep.subr.mxu0 0.0
    %1904 = vmatpush1.msra.mxu0 0.0
    %1905 = vmatprep.subr.mxu0 0.0
    %1906 = vmatpush1.msra.mxu0 0.0
    %1907 = vmatprep.subr.mxu0 0.0
    %1908 = vmatpush1.msra.mxu0 0.0
    %1909 = vmatprep.subr.mxu0 0.0
    %1910 = vmatpush1.msra.mxu0 0.0
    %1911 = vmatprep.subr.mxu0 0.0
    %1912 = vmatpush1.msra.mxu0 0.0
    %1913 = vmatprep.subr.mxu0 0.0
    %1914 = vmatpush1.msra.mxu0 0.0
    %1915 = vmatprep.subr.mxu0 0.0
    %1916 = vmatpush1.msra.mxu0 0.0
    %1917 = vmatprep.subr.mxu0 0.0
    %1918 = vmatpush1.msra.mxu0 0.0
    %1919 = vmatprep.subr.mxu0 0.0
    %1920 = vmatpush1.msra.mxu0 0.0
    %1921 = vmatprep.subr.mxu0 0.0
    %1922 = vmatpush1.msra.mxu0 0.0
    %1923 = vmatprep.subr.mxu0 0.0
    %1924 = vmatpush1.msra.mxu0 0.0
    %1925 = vmatprep.subr.mxu0 0.0
    %1926 = vmatpush1.msra.mxu0 0.0
    %1927 = vmatprep.subr.mxu0 0.0
    %1928 = vmatpush1.msra.mxu0 0.0
    %1929 = vmatprep.subr.mxu0 0.0
    %1930 = vmatpush1.msra.mxu0 0.0
    %1931 = vmatprep.subr.mxu0 0.0
    %1932 = vmatpush1.msra.mxu0 0.0
    %1933 = vmatprep.subr.mxu0 0.0
    %1934 = vmatpush1.msra.mxu0 0.0
    %1935 = vmatprep.subr.mxu0 0.0
    %1936 = vmatpush1.msra.mxu0 0.0
    %1937 = vmatprep.subr.mxu0 0.0
    %1938 = vmatpush1.msra.mxu0 0.0
    %1939 = vmatprep.subr.mxu0 0.0
    %1940 = vmatpush1.msra.mxu0 0.0
    %1941 = vmatprep.subr.mxu0 0.0
    %1942 = vmatpush1.msra.mxu0 0.0
    %1943 = vmatprep.subr.mxu0 0.0
    %1944 = vmatpush1.msra.mxu0 0.0
    %1945 = vmatprep.subr.mxu0 0.0
    %1946 = vmatpush1.msra.mxu0 0.0
    %1947 = vmatprep.subr.mxu0 0.0
    %1948 = vmatpush1.msra.mxu0 0.0
    %1949 = vmatprep.mubr.f32.mxu0 0.0
    %1950 = vmatmul.mubr.f32.gmra.mrb[0].mxu0 %v1881
    %v1951 = vpop.f32.mrb[0].mxu0
    %v1952 = vadd.f32 %v444, %v1951
    %v1953 = vpop.f32.mrb[0].mxu0
    %1954 = vmatprep.mubr.f32.mxu0 0.0
    %1955 = vmatmul.mubr.f32.gmra.mrb[0].mxu0 %v1883
    %v1956 = vpop.f32.mrb[0].mxu0
    %v1957 = vadd.f32 %v444, %v1956
    %v1958 = vpop.f32.mrb[0].mxu0
    %1959 = vdwg.mxu0
    %1962 = vrot.lane.b32.xlu0 %v1867, 112
    %v1963 = vpop.permute.xlu0 %1962
    %1964 = vrot.lane.b32.xlu0 %v1868, 112
    %v1965 = vpop.permute.xlu0 %1964
    %v1966 = vsel %vm445, %v1963, 0
    %v1968 = vsel %vm445, %v1965, 0
    %1970 = vmatprep.subr.mxu0 0.0
    %1971 = vmatpush1.msra.mxu0 %v433
    %1972 = vmatprep.subr.mxu0 0.0
    %1973 = vmatpush1.msra.mxu0 %v434
    %1974 = vmatprep.subr.mxu0 0.0
    %1975 = vmatpush1.msra.mxu0 0.0
    %1976 = vmatprep.subr.mxu0 0.0
    %1977 = vmatpush1.msra.mxu0 0.0
    %1978 = vmatprep.subr.mxu0 0.0
    %1979 = vmatpush1.msra.mxu0 0.0
    %1980 = vmatprep.subr.mxu0 0.0
    %1981 = vmatpush1.msra.mxu0 0.0
    %1982 = vmatprep.subr.mxu0 0.0
    %1983 = vmatpush1.msra.mxu0 0.0
    %1984 = vmatprep.subr.mxu0 0.0
    %1985 = vmatpush1.msra.mxu0 0.0
    %1986 = vmatprep.subr.mxu0 0.0
    %1987 = vmatpush1.msra.mxu0 0.0
    %1988 = vmatprep.subr.mxu0 0.0
    %1989 = vmatpush1.msra.mxu0 0.0
    %1990 = vmatprep.subr.mxu0 0.0
    %1991 = vmatpush1.msra.mxu0 0.0
    %1992 = vmatprep.subr.mxu0 0.0
    %1993 = vmatpush1.msra.mxu0 0.0
    %1994 = vmatprep.subr.mxu0 0.0
    %1995 = vmatpush1.msra.mxu0 0.0
    %1996 = vmatprep.subr.mxu0 0.0
    %1997 = vmatpush1.msra.mxu0 0.0
    %1998 = vmatprep.subr.mxu0 0.0
    %1999 = vmatpush1.msra.mxu0 0.0
    %2000 = vmatprep.subr.mxu0 0.0
    %2001 = vmatpush1.msra.mxu0 0.0
    %2002 = vmatprep.subr.mxu0 0.0
    %2003 = vmatpush1.msra.mxu0 0.0
    %2004 = vmatprep.subr.mxu0 0.0
    %2005 = vmatpush1.msra.mxu0 0.0
    %2006 = vmatprep.subr.mxu0 0.0
    %2007 = vmatpush1.msra.mxu0 0.0
    %2008 = vmatprep.subr.mxu0 0.0
    %2009 = vmatpush1.msra.mxu0 0.0
    %2010 = vmatprep.subr.mxu0 0.0
    %2011 = vmatpush1.msra.mxu0 0.0
    %2012 = vmatprep.subr.mxu0 0.0
    %2013 = vmatpush1.msra.mxu0 0.0
    %2014 = vmatprep.subr.mxu0 0.0
    %2015 = vmatpush1.msra.mxu0 0.0
    %2016 = vmatprep.subr.mxu0 0.0
    %2017 = vmatpush1.msra.mxu0 0.0
    %2018 = vmatprep.subr.mxu0 0.0
    %2019 = vmatpush1.msra.mxu0 0.0
    %2020 = vmatprep.subr.mxu0 0.0
    %2021 = vmatpush1.msra.mxu0 0.0
    %2022 = vmatprep.subr.mxu0 0.0
    %2023 = vmatpush1.msra.mxu0 0.0
    %2024 = vmatprep.subr.mxu0 0.0
    %2025 = vmatpush1.msra.mxu0 0.0
    %2026 = vmatprep.subr.mxu0 0.0
    %2027 = vmatpush1.msra.mxu0 0.0
    %2028 = vmatprep.subr.mxu0 0.0
    %2029 = vmatpush1.msra.mxu0 0.0
    %2030 = vmatprep.subr.mxu0 0.0
    %2031 = vmatpush1.msra.mxu0 0.0
    %2032 = vmatprep.subr.mxu0 0.0
    %2033 = vmatpush1.msra.mxu0 0.0
    %2034 = vmatprep.mubr.f32.mxu0 0.0
    %2035 = vmatmul.mubr.f32.gmra.mrb[0].mxu0 %v1966
    %v2036 = vpop.f32.mrb[0].mxu0
    %v2037 = vadd.f32 %v530, %v2036
    %v2038 = vpop.f32.mrb[0].mxu0
    %2039 = vmatprep.mubr.f32.mxu0 0.0
    %2040 = vmatmul.mubr.f32.gmra.mrb[0].mxu0 %v1968
    %v2041 = vpop.f32.mrb[0].mxu0
    %v2042 = vadd.f32 %v530, %v2041
    %v2043 = vpop.f32.mrb[0].mxu0
    %2044 = vdwg.mxu0
    %v2045 = vld [vmem:[#allocation2 + $0x50] sm:$0xff]
    %v2046 = vld [vmem:[#allocation2 + $0x58] sm:$0xff]
    %v2047 = vadd.f32 %v2045, %v1952
    %v2048 = vadd.f32 %v2046, %v1957
    %v2049 = vxor.u32 %v2047, 2147483648
    %v2050 = vxor.u32 %v2048, 2147483648
    %v2051 = vmul.f32 %v2049, 1.442695
    %v2052 = vpow.pop %v2051
    %v2053 = vmul.f32 %v2050, 1.442695
    %v2054 = vpow.pop %v2053
    %v2055 = vadd.f32 %v2052, 1.0
    %v2056 = vadd.f32 %v2054, 1.0
    %v2057 = vrcp.pop %v2055
    %v2058 = vmul.f32 1.0, %v2057
    %v2059 = vrcp.pop %v2056
    %v2060 = vmul.f32 1.0, %v2059
    %2063 = vrot.lane.b32.xlu0 %v1952, 96
    %v2064 = vpop.permute.xlu0 %2063
    %2065 = vrot.lane.b32.xlu0 %v1957, 96
    %v2066 = vpop.permute.xlu0 %2065
    %v2069 = vmul.f32 %v2058, %v2064
    %v2070 = vmul.f32 %v2060, %v2066
    %2073 = vrot.lane.b32.xlu0 %v2069, 32
    %v2074 = vpop.permute.xlu0 %2073
    %2075 = vrot.lane.b32.xlu0 %v2070, 32
    %v2076 = vpop.permute.xlu0 %2075
    %v2079 = vadd.f32 %v2045, %v2074
    %v2080 = vadd.f32 %v2046, %v2076
    %v2081 = vtanh.pop %v2079
    %v2082 = vtanh.pop %v2080
    %v2083 = vsub.f32 1.0, %v2058
    %v2084 = vsub.f32 1.0, %v2060
    %2087 = vrot.lane.b32.xlu0 %v2081, 112
    %v2088 = vpop.permute.xlu0 %2087
    %2089 = vrot.lane.b32.xlu0 %v2082, 112
    %v2090 = vpop.permute.xlu0 %2089
    %v2093 = vmul.f32 %v2083, %v2088
    %v2094 = vmul.f32 %v2084, %v2090
    %v2095 = vmul.f32 %v2058, %v1813
    %v2096 = vmul.f32 %v2060, %v1814
    %v2097 = vadd.f32 %v2093, %v2095
    %v2098 = vadd.f32 %v2094, %v2096
    %v2099 = vld [vmem:[%s414 + $0x20] sm:$0xff]
    %v2100 = vld [vmem:[%s414 + $0x28] sm:$0xff]
    %v2101 = vadd.f32 %v2099, %v2037
    %v2102 = vadd.f32 %v2100, %v2042
    %v2103 = vxor.u32 %v2101, 2147483648
    %v2104 = vxor.u32 %v2102, 2147483648
    %v2105 = vmul.f32 %v2103, 1.442695
    %v2106 = vpow.pop %v2105
    %v2107 = vmul.f32 %v2104, 1.442695
    %v2108 = vpow.pop %v2107
    %v2109 = vadd.f32 %v2106, 1.0
    %v2110 = vadd.f32 %v2108, 1.0
    %v2111 = vrcp.pop %v2109
    %v2112 = vmul.f32 1.0, %v2111
    %v2113 = vrcp.pop %v2110
    %v2114 = vmul.f32 1.0, %v2113
    %2117 = vrot.lane.b32.xlu0 %v2037, 96
    %v2118 = vpop.permute.xlu0 %2117
    %2119 = vrot.lane.b32.xlu0 %v2042, 96
    %v2120 = vpop.permute.xlu0 %2119
    %v2123 = vmul.f32 %v2112, %v2118
    %v2124 = vmul.f32 %v2114, %v2120
    %2127 = vrot.lane.b32.xlu0 %v2123, 32
    %v2128 = vpop.permute.xlu0 %2127
    %2129 = vrot.lane.b32.xlu0 %v2124, 32
    %v2130 = vpop.permute.xlu0 %2129
    %v2133 = vadd.f32 %v2099, %v2128
    %v2134 = vadd.f32 %v2100, %v2130
    %v2135 = vtanh.pop %v2133
    %v2136 = vtanh.pop %v2134
    %v2137 = vsub.f32 1.0, %v2112
    %v2138 = vsub.f32 1.0, %v2114
    %2141 = vrot.lane.b32.xlu0 %v2135, 112
    %v2142 = vpop.permute.xlu0 %2141
    %2143 = vrot.lane.b32.xlu0 %v2136, 112
    %v2144 = vpop.permute.xlu0 %2143
    %v2147 = vmul.f32 %v2137, %v2142
    %v2148 = vmul.f32 %v2138, %v2144
    %v2149 = vmul.f32 %v2112, %v1867
    %v2150 = vmul.f32 %v2114, %v1868
    %v2151 = vadd.f32 %v2147, %v2149
    %v2152 = vadd.f32 %v2148, %v2150
    %2155 = vrot.lane.b32.xlu0 %v2097, 112
    %v2156 = vpop.permute.xlu0 %2155
    %2157 = vrot.lane.b32.xlu0 %v2098, 112
    %v2158 = vpop.permute.xlu0 %2157
    %2161 = vst.msk [vmem:[#allocation3 + $0x50] sm:$0xff] %vm445, %v2156
    %2162 = vst.msk [vmem:[#allocation3 + $0x58] sm:$0xff] %vm445, %v2158
    %2163 = vst.msk [vmem:[#allocation3 + $0x20] sm:$0xff] %vm742, %v2151
    %2164 = vst.msk [vmem:[#allocation3 + $0x28] sm:$0xff] %vm742, %v2152
    %v2165 = vsel %vm445, %v2156, 0
    %v2167 = vsel %vm445, %v2158, 0
    %2169 = vmatprep.subr.mxu0 0.0
    %2170 = vmatpush1.msra.mxu0 %v431
    %2171 = vmatprep.subr.mxu0 0.0
    %2172 = vmatpush1.msra.mxu0 %v432
    %2173 = vmatprep.subr.mxu0 0.0
    %2174 = vmatpush1.msra.mxu0 0.0
    %2175 = vmatprep.subr.mxu0 0.0
    %2176 = vmatpush1.msra.mxu0 0.0
    %2177 = vmatprep.subr.mxu0 0.0
    %2178 = vmatpush1.msra.mxu0 0.0
    %2179 = vmatprep.subr.mxu0 0.0
    %2180 = vmatpush1.msra.mxu0 0.0
    %2181 = vmatprep.subr.mxu0 0.0
    %2182 = vmatpush1.msra.mxu0 0.0
    %2183 = vmatprep.subr.mxu0 0.0
    %2184 = vmatpush1.msra.mxu0 0.0
    %2185 = vmatprep.subr.mxu0 0.0
    %2186 = vmatpush1.msra.mxu0 0.0
    %2187 = vmatprep.subr.mxu0 0.0
    %2188 = vmatpush1.msra.mxu0 0.0
    %2189 = vmatprep.subr.mxu0 0.0
    %2190 = vmatpush1.msra.mxu0 0.0
    %2191 = vmatprep.subr.mxu0 0.0
    %2192 = vmatpush1.msra.mxu0 0.0
    %2193 = vmatprep.subr.mxu0 0.0
    %2194 = vmatpush1.msra.mxu0 0.0
    %2195 = vmatprep.subr.mxu0 0.0
    %2196 = vmatpush1.msra.mxu0 0.0
    %2197 = vmatprep.subr.mxu0 0.0
    %2198 = vmatpush1.msra.mxu0 0.0
    %2199 = vmatprep.subr.mxu0 0.0
    %2200 = vmatpush1.msra.mxu0 0.0
    %2201 = vmatprep.subr.mxu0 0.0
    %2202 = vmatpush1.msra.mxu0 0.0
    %2203 = vmatprep.subr.mxu0 0.0
    %2204 = vmatpush1.msra.mxu0 0.0
    %2205 = vmatprep.subr.mxu0 0.0
    %2206 = vmatpush1.msra.mxu0 0.0
    %2207 = vmatprep.subr.mxu0 0.0
    %2208 = vmatpush1.msra.mxu0 0.0
    %2209 = vmatprep.subr.mxu0 0.0
    %2210 = vmatpush1.msra.mxu0 0.0
    %2211 = vmatprep.subr.mxu0 0.0
    %2212 = vmatpush1.msra.mxu0 0.0
    %2213 = vmatprep.subr.mxu0 0.0
    %2214 = vmatpush1.msra.mxu0 0.0
    %2215 = vmatprep.subr.mxu0 0.0
    %2216 = vmatpush1.msra.mxu0 0.0
    %2217 = vmatprep.subr.mxu0 0.0
    %2218 = vmatpush1.msra.mxu0 0.0
    %2219 = vmatprep.subr.mxu0 0.0
    %2220 = vmatpush1.msra.mxu0 0.0
    %2221 = vmatprep.subr.mxu0 0.0
    %2222 = vmatpush1.msra.mxu0 0.0
    %2223 = vmatprep.subr.mxu0 0.0
    %2224 = vmatpush1.msra.mxu0 0.0
    %2225 = vmatprep.subr.mxu0 0.0
    %2226 = vmatpush1.msra.mxu0 0.0
    %2227 = vmatprep.subr.mxu0 0.0
    %2228 = vmatpush1.msra.mxu0 0.0
    %2229 = vmatprep.subr.mxu0 0.0
    %2230 = vmatpush1.msra.mxu0 0.0
    %2231 = vmatprep.subr.mxu0 0.0
    %2232 = vmatpush1.msra.mxu0 0.0
    %2233 = vmatprep.mubr.f32.mxu0 0.0
    %2234 = vmatmul.mubr.f32.gmra.mrb[0].mxu0 %v2165
    %v2235 = vpop.f32.mrb[0].mxu0
    %v2236 = vadd.f32 %v444, %v2235
    %v2237 = vpop.f32.mrb[0].mxu0
    %2238 = vmatprep.mubr.f32.mxu0 0.0
    %2239 = vmatmul.mubr.f32.gmra.mrb[0].mxu0 %v2167
    %v2240 = vpop.f32.mrb[0].mxu0
    %v2241 = vadd.f32 %v444, %v2240
    %v2242 = vpop.f32.mrb[0].mxu0
    %2243 = vdwg.mxu0
    %2246 = vrot.lane.b32.xlu0 %v2151, 112
    %v2247 = vpop.permute.xlu0 %2246
    %2248 = vrot.lane.b32.xlu0 %v2152, 112
    %v2249 = vpop.permute.xlu0 %2248
    %v2250 = vsel %vm445, %v2247, 0
    %v2252 = vsel %vm445, %v2249, 0
    %2254 = vmatprep.subr.mxu0 0.0
    %2255 = vmatpush1.msra.mxu0 %v433
    %2256 = vmatprep.subr.mxu0 0.0
    %2257 = vmatpush1.msra.mxu0 %v434
    %2258 = vmatprep.subr.mxu0 0.0
    %2259 = vmatpush1.msra.mxu0 0.0
    %2260 = vmatprep.subr.mxu0 0.0
    %2261 = vmatpush1.msra.mxu0 0.0
    %2262 = vmatprep.subr.mxu0 0.0
    %2263 = vmatpush1.msra.mxu0 0.0
    %2264 = vmatprep.subr.mxu0 0.0
    %2265 = vmatpush1.msra.mxu0 0.0
    %2266 = vmatprep.subr.mxu0 0.0
    %2267 = vmatpush1.msra.mxu0 0.0
    %2268 = vmatprep.subr.mxu0 0.0
    %2269 = vmatpush1.msra.mxu0 0.0
    %2270 = vmatprep.subr.mxu0 0.0
    %2271 = vmatpush1.msra.mxu0 0.0
    %2272 = vmatprep.subr.mxu0 0.0
    %2273 = vmatpush1.msra.mxu0 0.0
    %2274 = vmatprep.subr.mxu0 0.0
    %2275 = vmatpush1.msra.mxu0 0.0
    %2276 = vmatprep.subr.mxu0 0.0
    %2277 = vmatpush1.msra.mxu0 0.0
    %2278 = vmatprep.subr.mxu0 0.0
    %2279 = vmatpush1.msra.mxu0 0.0
    %2280 = vmatprep.subr.mxu0 0.0
    %2281 = vmatpush1.msra.mxu0 0.0
    %2282 = vmatprep.subr.mxu0 0.0
    %2283 = vmatpush1.msra.mxu0 0.0
    %2284 = vmatprep.subr.mxu0 0.0
    %2285 = vmatpush1.msra.mxu0 0.0
    %2286 = vmatprep.subr.mxu0 0.0
    %2287 = vmatpush1.msra.mxu0 0.0
    %2288 = vmatprep.subr.mxu0 0.0
    %2289 = vmatpush1.msra.mxu0 0.0
    %2290 = vmatprep.subr.mxu0 0.0
    %2291 = vmatpush1.msra.mxu0 0.0
    %2292 = vmatprep.subr.mxu0 0.0
    %2293 = vmatpush1.msra.mxu0 0.0
    %2294 = vmatprep.subr.mxu0 0.0
    %2295 = vmatpush1.msra.mxu0 0.0
    %2296 = vmatprep.subr.mxu0 0.0
    %2297 = vmatpush1.msra.mxu0 0.0
    %2298 = vmatprep.subr.mxu0 0.0
    %2299 = vmatpush1.msra.mxu0 0.0
    %2300 = vmatprep.subr.mxu0 0.0
    %2301 = vmatpush1.msra.mxu0 0.0
    %2302 = vmatprep.subr.mxu0 0.0
    %2303 = vmatpush1.msra.mxu0 0.0
    %2304 = vmatprep.subr.mxu0 0.0
    %2305 = vmatpush1.msra.mxu0 0.0
    %2306 = vmatprep.subr.mxu0 0.0
    %2307 = vmatpush1.msra.mxu0 0.0
    %2308 = vmatprep.subr.mxu0 0.0
    %2309 = vmatpush1.msra.mxu0 0.0
    %2310 = vmatprep.subr.mxu0 0.0
    %2311 = vmatpush1.msra.mxu0 0.0
    %2312 = vmatprep.subr.mxu0 0.0
    %2313 = vmatpush1.msra.mxu0 0.0
    %2314 = vmatprep.subr.mxu0 0.0
    %2315 = vmatpush1.msra.mxu0 0.0
    %2316 = vmatprep.subr.mxu0 0.0
    %2317 = vmatpush1.msra.mxu0 0.0
    %2318 = vmatprep.mubr.f32.mxu0 0.0
    %2319 = vmatmul.mubr.f32.gmra.mrb[0].mxu0 %v2250
    %v2320 = vpop.f32.mrb[0].mxu0
    %v2321 = vadd.f32 %v530, %v2320
    %v2322 = vpop.f32.mrb[0].mxu0
    %2323 = vmatprep.mubr.f32.mxu0 0.0
    %2324 = vmatmul.mubr.f32.gmra.mrb[0].mxu0 %v2252
    %v2325 = vpop.f32.mrb[0].mxu0
    %v2326 = vadd.f32 %v530, %v2325
    %v2327 = vpop.f32.mrb[0].mxu0
    %2328 = vdwg.mxu0
    %v2329 = vld [vmem:[#allocation2 + $0x60] sm:$0xff]
    %v2330 = vld [vmem:[#allocation2 + $0x68] sm:$0xff]
    %v2331 = vadd.f32 %v2329, %v2236
    %v2332 = vadd.f32 %v2330, %v2241
    %v2333 = vxor.u32 %v2331, 2147483648
    %v2334 = vxor.u32 %v2332, 2147483648
    %v2335 = vmul.f32 %v2333, 1.442695
    %v2336 = vpow.pop %v2335
    %v2337 = vmul.f32 %v2334, 1.442695
    %v2338 = vpow.pop %v2337
    %v2339 = vadd.f32 %v2336, 1.0
    %v2340 = vadd.f32 %v2338, 1.0
    %v2341 = vrcp.pop %v2339
    %v2342 = vmul.f32 1.0, %v2341
    %v2343 = vrcp.pop %v2340
    %v2344 = vmul.f32 1.0, %v2343
    %2347 = vrot.lane.b32.xlu0 %v2236, 96
    %v2348 = vpop.permute.xlu0 %2347
    %2349 = vrot.lane.b32.xlu0 %v2241, 96
    %v2350 = vpop.permute.xlu0 %2349
    %v2353 = vmul.f32 %v2342, %v2348
    %v2354 = vmul.f32 %v2344, %v2350
    %2357 = vrot.lane.b32.xlu0 %v2353, 32
    %v2358 = vpop.permute.xlu0 %2357
    %2359 = vrot.lane.b32.xlu0 %v2354, 32
    %v2360 = vpop.permute.xlu0 %2359
    %v2363 = vadd.f32 %v2329, %v2358
    %v2364 = vadd.f32 %v2330, %v2360
    %v2365 = vtanh.pop %v2363
    %v2366 = vtanh.pop %v2364
    %v2367 = vsub.f32 1.0, %v2342
    %v2368 = vsub.f32 1.0, %v2344
    %2371 = vrot.lane.b32.xlu0 %v2365, 112
    %v2372 = vpop.permute.xlu0 %2371
    %2373 = vrot.lane.b32.xlu0 %v2366, 112
    %v2374 = vpop.permute.xlu0 %2373
    %v2377 = vmul.f32 %v2367, %v2372
    %v2378 = vmul.f32 %v2368, %v2374
    %v2379 = vmul.f32 %v2342, %v2097
    %v2380 = vmul.f32 %v2344, %v2098
    %v2381 = vadd.f32 %v2377, %v2379
    %v2382 = vadd.f32 %v2378, %v2380
    %v2383 = vld [vmem:[%s414 + $0x10] sm:$0xff]
    %v2384 = vld [vmem:[%s414 + $0x18] sm:$0xff]
    %v2385 = vadd.f32 %v2383, %v2321
    %v2386 = vadd.f32 %v2384, %v2326
    %v2387 = vxor.u32 %v2385, 2147483648
    %v2388 = vxor.u32 %v2386, 2147483648
    %v2389 = vmul.f32 %v2387, 1.442695
    %v2390 = vpow.pop %v2389
    %v2391 = vmul.f32 %v2388, 1.442695
    %v2392 = vpow.pop %v2391
    %v2393 = vadd.f32 %v2390, 1.0
    %v2394 = vadd.f32 %v2392, 1.0
    %v2395 = vrcp.pop %v2393
    %v2396 = vmul.f32 1.0, %v2395
    %v2397 = vrcp.pop %v2394
    %v2398 = vmul.f32 1.0, %v2397
    %2401 = vrot.lane.b32.xlu0 %v2321, 96
    %v2402 = vpop.permute.xlu0 %2401
    %2403 = vrot.lane.b32.xlu0 %v2326, 96
    %v2404 = vpop.permute.xlu0 %2403
    %v2407 = vmul.f32 %v2396, %v2402
    %v2408 = vmul.f32 %v2398, %v2404
    %2411 = vrot.lane.b32.xlu0 %v2407, 32
    %v2412 = vpop.permute.xlu0 %2411
    %2413 = vrot.lane.b32.xlu0 %v2408, 32
    %v2414 = vpop.permute.xlu0 %2413
    %v2417 = vadd.f32 %v2383, %v2412
    %v2418 = vadd.f32 %v2384, %v2414
    %v2419 = vtanh.pop %v2417
    %v2420 = vtanh.pop %v2418
    %v2421 = vsub.f32 1.0, %v2396
    %v2422 = vsub.f32 1.0, %v2398
    %2425 = vrot.lane.b32.xlu0 %v2419, 112
    %v2426 = vpop.permute.xlu0 %2425
    %2427 = vrot.lane.b32.xlu0 %v2420, 112
    %v2428 = vpop.permute.xlu0 %2427
    %v2431 = vmul.f32 %v2421, %v2426
    %v2432 = vmul.f32 %v2422, %v2428
    %v2433 = vmul.f32 %v2396, %v2151
    %v2434 = vmul.f32 %v2398, %v2152
    %v2435 = vadd.f32 %v2431, %v2433
    %v2436 = vadd.f32 %v2432, %v2434
    %2439 = vrot.lane.b32.xlu0 %v2381, 112
    %v2440 = vpop.permute.xlu0 %2439
    %2441 = vrot.lane.b32.xlu0 %v2382, 112
    %v2442 = vpop.permute.xlu0 %2441
    %2445 = vst.msk [vmem:[#allocation3 + $0x60] sm:$0xff] %vm445, %v2440
    %2446 = vst.msk [vmem:[#allocation3 + $0x68] sm:$0xff] %vm445, %v2442
    %2447 = vst.msk [vmem:[#allocation3 + $0x10] sm:$0xff] %vm742, %v2435
    %2448 = vst.msk [vmem:[#allocation3 + $0x18] sm:$0xff] %vm742, %v2436
    %v2449 = vsel %vm445, %v2440, 0
    %v2451 = vsel %vm445, %v2442, 0
    %2453 = vmatprep.subr.mxu0 0.0
    %2454 = vmatpush1.msra.mxu0 %v431
    %2455 = vmatprep.subr.mxu0 0.0
    %2456 = vmatpush1.msra.mxu0 %v432
    %2457 = vmatprep.subr.mxu0 0.0
    %2458 = vmatpush1.msra.mxu0 0.0
    %2459 = vmatprep.subr.mxu0 0.0
    %2460 = vmatpush1.msra.mxu0 0.0
    %2461 = vmatprep.subr.mxu0 0.0
    %2462 = vmatpush1.msra.mxu0 0.0
    %2463 = vmatprep.subr.mxu0 0.0
    %2464 = vmatpush1.msra.mxu0 0.0
    %2465 = vmatprep.subr.mxu0 0.0
    %2466 = vmatpush1.msra.mxu0 0.0
    %2467 = vmatprep.subr.mxu0 0.0
    %2468 = vmatpush1.msra.mxu0 0.0
    %2469 = vmatprep.subr.mxu0 0.0
    %2470 = vmatpush1.msra.mxu0 0.0
    %2471 = vmatprep.subr.mxu0 0.0
    %2472 = vmatpush1.msra.mxu0 0.0
    %2473 = vmatprep.subr.mxu0 0.0
    %2474 = vmatpush1.msra.mxu0 0.0
    %2475 = vmatprep.subr.mxu0 0.0
    %2476 = vmatpush1.msra.mxu0 0.0
    %2477 = vmatprep.subr.mxu0 0.0
    %2478 = vmatpush1.msra.mxu0 0.0
    %2479 = vmatprep.subr.mxu0 0.0
    %2480 = vmatpush1.msra.mxu0 0.0
    %2481 = vmatprep.subr.mxu0 0.0
    %2482 = vmatpush1.msra.mxu0 0.0
    %2483 = vmatprep.subr.mxu0 0.0
    %2484 = vmatpush1.msra.mxu0 0.0
    %2485 = vmatprep.subr.mxu0 0.0
    %2486 = vmatpush1.msra.mxu0 0.0
    %2487 = vmatprep.subr.mxu0 0.0
    %2488 = vmatpush1.msra.mxu0 0.0
    %2489 = vmatprep.subr.mxu0 0.0
    %2490 = vmatpush1.msra.mxu0 0.0
    %2491 = vmatprep.subr.mxu0 0.0
    %2492 = vmatpush1.msra.mxu0 0.0
    %2493 = vmatprep.subr.mxu0 0.0
    %2494 = vmatpush1.msra.mxu0 0.0
    %2495 = vmatprep.subr.mxu0 0.0
    %2496 = vmatpush1.msra.mxu0 0.0
    %2497 = vmatprep.subr.mxu0 0.0
    %2498 = vmatpush1.msra.mxu0 0.0
    %2499 = vmatprep.subr.mxu0 0.0
    %2500 = vmatpush1.msra.mxu0 0.0
    %2501 = vmatprep.subr.mxu0 0.0
    %2502 = vmatpush1.msra.mxu0 0.0
    %2503 = vmatprep.subr.mxu0 0.0
    %2504 = vmatpush1.msra.mxu0 0.0
    %2505 = vmatprep.subr.mxu0 0.0
    %2506 = vmatpush1.msra.mxu0 0.0
    %2507 = vmatprep.subr.mxu0 0.0
    %2508 = vmatpush1.msra.mxu0 0.0
    %2509 = vmatprep.subr.mxu0 0.0
    %2510 = vmatpush1.msra.mxu0 0.0
    %2511 = vmatprep.subr.mxu0 0.0
    %2512 = vmatpush1.msra.mxu0 0.0
    %2513 = vmatprep.subr.mxu0 0.0
    %2514 = vmatpush1.msra.mxu0 0.0
    %2515 = vmatprep.subr.mxu0 0.0
    %2516 = vmatpush1.msra.mxu0 0.0
    %2517 = vmatprep.mubr.f32.mxu0 0.0
    %2518 = vmatmul.mubr.f32.gmra.mrb[0].mxu0 %v2449
    %v2519 = vpop.f32.mrb[0].mxu0
    %v2520 = vadd.f32 %v444, %v2519
    %v2521 = vpop.f32.mrb[0].mxu0
    %2522 = vmatprep.mubr.f32.mxu0 0.0
    %2523 = vmatmul.mubr.f32.gmra.mrb[0].mxu0 %v2451
    %v2524 = vpop.f32.mrb[0].mxu0
    %v2525 = vadd.f32 %v444, %v2524
    %v2526 = vpop.f32.mrb[0].mxu0
    %2527 = vdwg.mxu0
    %2530 = vrot.lane.b32.xlu0 %v2435, 112
    %v2531 = vpop.permute.xlu0 %2530
    %2532 = vrot.lane.b32.xlu0 %v2436, 112
    %v2533 = vpop.permute.xlu0 %2532
    %v2534 = vsel %vm445, %v2531, 0
    %v2536 = vsel %vm445, %v2533, 0
    %2538 = vmatprep.subr.mxu0 0.0
    %2539 = vmatpush1.msra.mxu0 %v433
    %2540 = vmatprep.subr.mxu0 0.0
    %2541 = vmatpush1.msra.mxu0 %v434
    %2542 = vmatprep.subr.mxu0 0.0
    %2543 = vmatpush1.msra.mxu0 0.0
    %2544 = vmatprep.subr.mxu0 0.0
    %2545 = vmatpush1.msra.mxu0 0.0
    %2546 = vmatprep.subr.mxu0 0.0
    %2547 = vmatpush1.msra.mxu0 0.0
    %2548 = vmatprep.subr.mxu0 0.0
    %2549 = vmatpush1.msra.mxu0 0.0
    %2550 = vmatprep.subr.mxu0 0.0
    %2551 = vmatpush1.msra.mxu0 0.0
    %2552 = vmatprep.subr.mxu0 0.0
    %2553 = vmatpush1.msra.mxu0 0.0
    %2554 = vmatprep.subr.mxu0 0.0
    %2555 = vmatpush1.msra.mxu0 0.0
    %2556 = vmatprep.subr.mxu0 0.0
    %2557 = vmatpush1.msra.mxu0 0.0
    %2558 = vmatprep.subr.mxu0 0.0
    %2559 = vmatpush1.msra.mxu0 0.0
    %2560 = vmatprep.subr.mxu0 0.0
    %2561 = vmatpush1.msra.mxu0 0.0
    %2562 = vmatprep.subr.mxu0 0.0
    %2563 = vmatpush1.msra.mxu0 0.0
    %2564 = vmatprep.subr.mxu0 0.0
    %2565 = vmatpush1.msra.mxu0 0.0
    %2566 = vmatprep.subr.mxu0 0.0
    %2567 = vmatpush1.msra.mxu0 0.0
    %2568 = vmatprep.subr.mxu0 0.0
    %2569 = vmatpush1.msra.mxu0 0.0
    %2570 = vmatprep.subr.mxu0 0.0
    %2571 = vmatpush1.msra.mxu0 0.0
    %2572 = vmatprep.subr.mxu0 0.0
    %2573 = vmatpush1.msra.mxu0 0.0
    %2574 = vmatprep.subr.mxu0 0.0
    %2575 = vmatpush1.msra.mxu0 0.0
    %2576 = vmatprep.subr.mxu0 0.0
    %2577 = vmatpush1.msra.mxu0 0.0
    %2578 = vmatprep.subr.mxu0 0.0
    %2579 = vmatpush1.msra.mxu0 0.0
    %2580 = vmatprep.subr.mxu0 0.0
    %2581 = vmatpush1.msra.mxu0 0.0
    %2582 = vmatprep.subr.mxu0 0.0
    %2583 = vmatpush1.msra.mxu0 0.0
    %2584 = vmatprep.subr.mxu0 0.0
    %2585 = vmatpush1.msra.mxu0 0.0
    %2586 = vmatprep.subr.mxu0 0.0
    %2587 = vmatpush1.msra.mxu0 0.0
    %2588 = vmatprep.subr.mxu0 0.0
    %2589 = vmatpush1.msra.mxu0 0.0
    %2590 = vmatprep.subr.mxu0 0.0
    %2591 = vmatpush1.msra.mxu0 0.0
    %2592 = vmatprep.subr.mxu0 0.0
    %2593 = vmatpush1.msra.mxu0 0.0
    %2594 = vmatprep.subr.mxu0 0.0
    %2595 = vmatpush1.msra.mxu0 0.0
    %2596 = vmatprep.subr.mxu0 0.0
    %2597 = vmatpush1.msra.mxu0 0.0
    %2598 = vmatprep.subr.mxu0 0.0
    %2599 = vmatpush1.msra.mxu0 0.0
    %2600 = vmatprep.subr.mxu0 0.0
    %2601 = vmatpush1.msra.mxu0 0.0
    %2602 = vmatprep.mubr.f32.mxu0 0.0
    %2603 = vmatmul.mubr.f32.gmra.mrb[0].mxu0 %v2534
    %v2604 = vpop.f32.mrb[0].mxu0
    %v2605 = vadd.f32 %v530, %v2604
    %v2606 = vpop.f32.mrb[0].mxu0
    %2607 = vmatprep.mubr.f32.mxu0 0.0
    %2608 = vmatmul.mubr.f32.gmra.mrb[0].mxu0 %v2536
    %v2609 = vpop.f32.mrb[0].mxu0
    %v2610 = vadd.f32 %v530, %v2609
    %v2611 = vpop.f32.mrb[0].mxu0
    %2612 = vdwg.mxu0
    %v2613 = vld [vmem:[#allocation2 + $0x70] sm:$0xff]
    %v2614 = vld [vmem:[#allocation2 + $0x78] sm:$0xff]
    %v2615 = vadd.f32 %v2613, %v2520
    %v2616 = vadd.f32 %v2614, %v2525
    %v2617 = vxor.u32 %v2615, 2147483648
    %v2618 = vxor.u32 %v2616, 2147483648
    %v2619 = vmul.f32 %v2617, 1.442695
    %v2620 = vpow.pop %v2619
    %v2621 = vmul.f32 %v2618, 1.442695
    %v2622 = vpow.pop %v2621
    %v2623 = vadd.f32 %v2620, 1.0
    %v2624 = vadd.f32 %v2622, 1.0
    %v2625 = vrcp.pop %v2623
    %v2626 = vmul.f32 1.0, %v2625
    %v2627 = vrcp.pop %v2624
    %v2628 = vmul.f32 1.0, %v2627
    %2631 = vrot.lane.b32.xlu0 %v2520, 96
    %v2632 = vpop.permute.xlu0 %2631
    %2633 = vrot.lane.b32.xlu0 %v2525, 96
    %v2634 = vpop.permute.xlu0 %2633
    %v2637 = vmul.f32 %v2626, %v2632
    %v2638 = vmul.f32 %v2628, %v2634
    %2641 = vrot.lane.b32.xlu0 %v2637, 32
    %v2642 = vpop.permute.xlu0 %2641
    %2643 = vrot.lane.b32.xlu0 %v2638, 32
    %v2644 = vpop.permute.xlu0 %2643
    %v2647 = vadd.f32 %v2613, %v2642
    %v2648 = vadd.f32 %v2614, %v2644
    %v2649 = vtanh.pop %v2647
    %v2650 = vtanh.pop %v2648
    %v2651 = vsub.f32 1.0, %v2626
    %v2652 = vsub.f32 1.0, %v2628
    %2655 = vrot.lane.b32.xlu0 %v2649, 112
    %v2656 = vpop.permute.xlu0 %2655
    %2657 = vrot.lane.b32.xlu0 %v2650, 112
    %v2658 = vpop.permute.xlu0 %2657
    %v2661 = vmul.f32 %v2651, %v2656
    %v2662 = vmul.f32 %v2652, %v2658
    %v2663 = vmul.f32 %v2626, %v2381
    %v2664 = vmul.f32 %v2628, %v2382
    %v2665 = vadd.f32 %v2661, %v2663
    %v2666 = vadd.f32 %v2662, %v2664
    %v2667 = vld [vmem:[%s414] sm:$0xff]
    %v2668 = vld [vmem:[%s414 + $0x8] sm:$0xff]
    %v2669 = vadd.f32 %v2667, %v2605
    %v2670 = vadd.f32 %v2668, %v2610
    %v2671 = vxor.u32 %v2669, 2147483648
    %v2672 = vxor.u32 %v2670, 2147483648
    %v2673 = vmul.f32 %v2671, 1.442695
    %v2674 = vpow.pop %v2673
    %v2675 = vmul.f32 %v2672, 1.442695
    %v2676 = vpow.pop %v2675
    %v2677 = vadd.f32 %v2674, 1.0
    %v2678 = vadd.f32 %v2676, 1.0
    %v2679 = vrcp.pop %v2677
    %v2680 = vmul.f32 1.0, %v2679
    %v2681 = vrcp.pop %v2678
    %v2682 = vmul.f32 1.0, %v2681
    %2685 = vrot.lane.b32.xlu0 %v2605, 96
    %v2686 = vpop.permute.xlu0 %2685
    %2687 = vrot.lane.b32.xlu0 %v2610, 96
    %v2688 = vpop.permute.xlu0 %2687
    %v2691 = vmul.f32 %v2680, %v2686
    %v2692 = vmul.f32 %v2682, %v2688
    %2695 = vrot.lane.b32.xlu0 %v2691, 32
    %v2696 = vpop.permute.xlu0 %2695
    %2697 = vrot.lane.b32.xlu0 %v2692, 32
    %v2698 = vpop.permute.xlu0 %2697
    %v2701 = vadd.f32 %v2667, %v2696
    %v2702 = vadd.f32 %v2668, %v2698
    %v2703 = vtanh.pop %v2701
    %v2704 = vtanh.pop %v2702
    %v2705 = vsub.f32 1.0, %v2680
    %v2706 = vsub.f32 1.0, %v2682
    %2709 = vrot.lane.b32.xlu0 %v2703, 112
    %v2710 = vpop.permute.xlu0 %2709
    %2711 = vrot.lane.b32.xlu0 %v2704, 112
    %v2712 = vpop.permute.xlu0 %2711
    %v2715 = vmul.f32 %v2705, %v2710
    %v2716 = vmul.f32 %v2706, %v2712
    %v2717 = vmul.f32 %v2680, %v2435
    %v2718 = vmul.f32 %v2682, %v2436
    %v2719 = vadd.f32 %v2715, %v2717
    %v2720 = vadd.f32 %v2716, %v2718
    %2723 = vrot.lane.b32.xlu0 %v2665, 112
    %v2724 = vpop.permute.xlu0 %2723
    %2725 = vrot.lane.b32.xlu0 %v2666, 112
    %v2726 = vpop.permute.xlu0 %2725
    %2729 = vst.msk [vmem:[#allocation3 + $0x70] sm:$0xff] %vm445, %v2724
    %2730 = vst.msk [vmem:[#allocation3 + $0x78] sm:$0xff] %vm445, %v2726
    %2731 = vst.msk [vmem:[#allocation3] sm:$0xff] %vm742, %v2719
    %2732 = vst.msk [vmem:[#allocation3 + $0x8] sm:$0xff] %vm742, %v2720
    %2733 = vst.msk [vmem:[#allocation13] sm:$0xff] %vm445, %v2724
    %2734 = vst.msk [vmem:[#allocation13 + $0x8] sm:$0xff] %vm445, %v2726
    %2737 = vrot.lane.b32.xlu0 %v2719, 112
    %v2738 = vpop.permute.xlu0 %2737
    %2739 = vrot.lane.b32.xlu0 %v2720, 112
    %v2740 = vpop.permute.xlu0 %2739
    %s2743 = scalar_lea.vmem [#allocation13], 16
    %2744 = vst.msk [vmem:[%s2743] sm:$0xff] %vm445, %v2738
    %2745 = vst.msk [vmem:[%s2743 + $0x8] sm:$0xff] %vm445, %v2740
    %v2746 = vld [vmem:[#allocation3] sm:$0xff]
    %v2747 = vld [vmem:[#allocation3 + $0x8] sm:$0xff]
    %v2748 = vld [vmem:[#allocation3 + $0x10] sm:$0xff]
    %v2749 = vld [vmem:[#allocation3 + $0x18] sm:$0xff]
    %v2750 = vld [vmem:[#allocation3 + $0x20] sm:$0xff]
    %v2751 = vld [vmem:[#allocation3 + $0x28] sm:$0xff]
    %v2752 = vld [vmem:[#allocation3 + $0x30] sm:$0xff]
    %v2753 = vld [vmem:[#allocation3 + $0x38] sm:$0xff]
    %v2754 = vld [vmem:[#allocation3 + $0x40] sm:$0xff]
    %v2755 = vld [vmem:[#allocation3 + $0x48] sm:$0xff]
    %v2756 = vld [vmem:[#allocation3 + $0x50] sm:$0xff]
    %v2757 = vld [vmem:[#allocation3 + $0x58] sm:$0xff]
    %v2758 = vld [vmem:[#allocation3 + $0x60] sm:$0xff]
    %v2759 = vld [vmem:[#allocation3 + $0x68] sm:$0xff]
    %v2760 = vld [vmem:[#allocation3 + $0x70] sm:$0xff]
    %v2761 = vld [vmem:[#allocation3 + $0x78] sm:$0xff]
    %v2762 = vld [vmem:[#allocation10] sm:$0xff]
    %v2763 = vld [vmem:[#allocation10 + $0x8] sm:$0xff]
    %v2764 = vld [vmem:[#allocation10 + $0x10] sm:$0xff]
    %v2765 = vld [vmem:[#allocation10 + $0x18] sm:$0xff]
    %v2766 = vld [vmem:[#allocation12] sm:$0x1]
    %v2768 = vlaneseq
    %v2769 = vshrl.u32 %v2768, 7
    %v2770 = vsub.s32 0, %v2769
    %v2771 = vrot.slane %v2766, %v2770
    %v2774 = vsel %vm139, %v2746, 0
    %v2777 = vsel %vm139, %v2747, 0
    %v2780 = vsel %vm139, %v2748, 0
    %v2783 = vsel %vm139, %v2749, 0
    %v2786 = vsel %vm139, %v2750, 0
    %v2789 = vsel %vm139, %v2751, 0
    %v2792 = vsel %vm139, %v2752, 0
    %v2795 = vsel %vm139, %v2753, 0
    %v2798 = vsel %vm139, %v2754, 0
    %v2801 = vsel %vm139, %v2755, 0
    %v2804 = vsel %vm139, %v2756, 0
    %v2807 = vsel %vm139, %v2757, 0
    %v2810 = vsel %vm139, %v2758, 0
    %v2813 = vsel %vm139, %v2759, 0
    %v2816 = vsel %vm139, %v2760, 0
    %v2819 = vsel %vm139, %v2761, 0
    %2821 = vmatprep.subr.mxu0 0.0
    %2822 = vmatpush1.msra.mxu0 %v2762
    %2823 = vmatprep.subr.mxu0 0.0
    %2824 = vmatpush1.msra.mxu0 %v2763
    %2825 = vmatprep.subr.mxu0 0.0
    %2826 = vmatpush1.msra.mxu0 %v2764
    %2827 = vmatprep.subr.mxu0 0.0
    %2828 = vmatpush1.msra.mxu0 %v2765
    %2829 = vmatprep.subr.mxu0 0.0
    %2830 = vmatpush1.msra.mxu0 0.0
    %2831 = vmatprep.subr.mxu0 0.0
    %2832 = vmatpush1.msra.mxu0 0.0
    %2833 = vmatprep.subr.mxu0 0.0
    %2834 = vmatpush1.msra.mxu0 0.0
    %2835 = vmatprep.subr.mxu0 0.0
    %2836 = vmatpush1.msra.mxu0 0.0
    %2837 = vmatprep.subr.mxu0 0.0
    %2838 = vmatpush1.msra.mxu0 0.0
    %2839 = vmatprep.subr.mxu0 0.0
    %2840 = vmatpush1.msra.mxu0 0.0
    %2841 = vmatprep.subr.mxu0 0.0
    %2842 = vmatpush1.msra.mxu0 0.0
    %2843 = vmatprep.subr.mxu0 0.0
    %2844 = vmatpush1.msra.mxu0 0.0
    %2845 = vmatprep.subr.mxu0 0.0
    %2846 = vmatpush1.msra.mxu0 0.0
    %2847 = vmatprep.subr.mxu0 0.0
    %2848 = vmatpush1.msra.mxu0 0.0
    %2849 = vmatprep.subr.mxu0 0.0
    %2850 = vmatpush1.msra.mxu0 0.0
    %2851 = vmatprep.subr.mxu0 0.0
    %2852 = vmatpush1.msra.mxu0 0.0
    %2853 = vmatprep.subr.mxu0 0.0
    %2854 = vmatpush1.msra.mxu0 0.0
    %2855 = vmatprep.subr.mxu0 0.0
    %2856 = vmatpush1.msra.mxu0 0.0
    %2857 = vmatprep.subr.mxu0 0.0
    %2858 = vmatpush1.msra.mxu0 0.0
    %2859 = vmatprep.subr.mxu0 0.0
    %2860 = vmatpush1.msra.mxu0 0.0
    %2861 = vmatprep.subr.mxu0 0.0
    %2862 = vmatpush1.msra.mxu0 0.0
    %2863 = vmatprep.subr.mxu0 0.0
    %2864 = vmatpush1.msra.mxu0 0.0
    %2865 = vmatprep.subr.mxu0 0.0
    %2866 = vmatpush1.msra.mxu0 0.0
    %2867 = vmatprep.subr.mxu0 0.0
    %2868 = vmatpush1.msra.mxu0 0.0
    %2869 = vmatprep.subr.mxu0 0.0
    %2870 = vmatpush1.msra.mxu0 0.0
    %2871 = vmatprep.subr.mxu0 0.0
    %2872 = vmatpush1.msra.mxu0 0.0
    %2873 = vmatprep.subr.mxu0 0.0
    %2874 = vmatpush1.msra.mxu0 0.0
    %2875 = vmatprep.subr.mxu0 0.0
    %2876 = vmatpush1.msra.mxu0 0.0
    %2877 = vmatprep.subr.mxu0 0.0
    %2878 = vmatpush1.msra.mxu0 0.0
    %2879 = vmatprep.subr.mxu0 0.0
    %2880 = vmatpush1.msra.mxu0 0.0
    %2881 = vmatprep.subr.mxu0 0.0
    %2882 = vmatpush1.msra.mxu0 0.0
    %2883 = vmatprep.subr.mxu0 0.0
    %2884 = vmatpush1.msra.mxu0 0.0
    %2885 = vmatprep.mubr.f32.mxu0 0.0
    %2886 = vmatmul.mubr.f32.gmra.mrb[0].mxu0 %v2774
    %v2887 = vpop.f32.mrb[0].mxu0
    %v2888 = vadd.f32 %v2771, %v2887
    %v2889 = vpop.f32.mrb[0].mxu0
    %2890 = vmatprep.mubr.f32.mxu0 0.0
    %2891 = vmatmul.mubr.f32.gmra.mrb[0].mxu0 %v2777
    %v2892 = vpop.f32.mrb[0].mxu0
    %v2893 = vadd.f32 %v2771, %v2892
    %v2894 = vpop.f32.mrb[0].mxu0
    %2895 = vmatprep.mubr.f32.mxu0 0.0
    %2896 = vmatmul.mubr.f32.gmra.mrb[0].mxu0 %v2780
    %v2897 = vpop.f32.mrb[0].mxu0
    %v2898 = vadd.f32 %v2771, %v2897
    %v2899 = vpop.f32.mrb[0].mxu0
    %2900 = vmatprep.mubr.f32.mxu0 0.0
    %2901 = vmatmul.mubr.f32.gmra.mrb[0].mxu0 %v2783
    %v2902 = vpop.f32.mrb[0].mxu0
    %v2903 = vadd.f32 %v2771, %v2902
    %v2904 = vpop.f32.mrb[0].mxu0
    %2905 = vmatprep.mubr.f32.mxu0 0.0
    %2906 = vmatmul.mubr.f32.gmra.mrb[0].mxu0 %v2786
    %v2907 = vpop.f32.mrb[0].mxu0
    %v2908 = vadd.f32 %v2771, %v2907
    %v2909 = vpop.f32.mrb[0].mxu0
    %2910 = vmatprep.mubr.f32.mxu0 0.0
    %2911 = vmatmul.mubr.f32.gmra.mrb[0].mxu0 %v2789
    %v2912 = vpop.f32.mrb[0].mxu0
    %v2913 = vadd.f32 %v2771, %v2912
    %v2914 = vpop.f32.mrb[0].mxu0
    %2915 = vmatprep.mubr.f32.mxu0 0.0
    %2916 = vmatmul.mubr.f32.gmra.mrb[0].mxu0 %v2792
    %v2917 = vpop.f32.mrb[0].mxu0
    %v2918 = vadd.f32 %v2771, %v2917
    %v2919 = vpop.f32.mrb[0].mxu0
    %2920 = vmatprep.mubr.f32.mxu0 0.0
    %2921 = vmatmul.mubr.f32.gmra.mrb[0].mxu0 %v2795
    %v2922 = vpop.f32.mrb[0].mxu0
    %v2923 = vadd.f32 %v2771, %v2922
    %v2924 = vpop.f32.mrb[0].mxu0
    %2925 = vmatprep.mubr.f32.mxu0 0.0
    %2926 = vmatmul.mubr.f32.gmra.mrb[0].mxu0 %v2798
    %v2927 = vpop.f32.mrb[0].mxu0
    %v2928 = vadd.f32 %v2771, %v2927
    %v2929 = vpop.f32.mrb[0].mxu0
    %2930 = vmatprep.mubr.f32.mxu0 0.0
    %2931 = vmatmul.mubr.f32.gmra.mrb[0].mxu0 %v2801
    %v2932 = vpop.f32.mrb[0].mxu0
    %v2933 = vadd.f32 %v2771, %v2932
    %v2934 = vpop.f32.mrb[0].mxu0
    %2935 = vmatprep.mubr.f32.mxu0 0.0
    %2936 = vmatmul.mubr.f32.gmra.mrb[0].mxu0 %v2804
    %v2937 = vpop.f32.mrb[0].mxu0
    %v2938 = vadd.f32 %v2771, %v2937
    %v2939 = vpop.f32.mrb[0].mxu0
    %2940 = vmatprep.mubr.f32.mxu0 0.0
    %2941 = vmatmul.mubr.f32.gmra.mrb[0].mxu0 %v2807
    %v2942 = vpop.f32.mrb[0].mxu0
    %v2943 = vadd.f32 %v2771, %v2942
    %v2944 = vpop.f32.mrb[0].mxu0
    %2945 = vmatprep.mubr.f32.mxu0 0.0
    %2946 = vmatmul.mubr.f32.gmra.mrb[0].mxu0 %v2810
    %v2947 = vpop.f32.mrb[0].mxu0
    %v2948 = vadd.f32 %v2771, %v2947
    %v2949 = vpop.f32.mrb[0].mxu0
    %2950 = vmatprep.mubr.f32.mxu0 0.0
    %2951 = vmatmul.mubr.f32.gmra.mrb[0].mxu0 %v2813
    %v2952 = vpop.f32.mrb[0].mxu0
    %v2953 = vadd.f32 %v2771, %v2952
    %v2954 = vpop.f32.mrb[0].mxu0
    %2955 = vmatprep.mubr.f32.mxu0 0.0
    %2956 = vmatmul.mubr.f32.gmra.mrb[0].mxu0 %v2816
    %v2957 = vpop.f32.mrb[0].mxu0
    %v2958 = vadd.f32 %v2771, %v2957
    %v2959 = vpop.f32.mrb[0].mxu0
    %2960 = vmatprep.mubr.f32.mxu0 0.0
    %2961 = vmatmul.mubr.f32.gmra.mrb[0].mxu0 %v2819
    %v2962 = vpop.f32.mrb[0].mxu0
    %v2963 = vadd.f32 %v2771, %v2962
    %v2964 = vpop.f32.mrb[0].mxu0
    %2965 = vdwg.mxu0
    %v2966 = vtanh.pop %v2888
    %v2967 = vtanh.pop %v2893
    %v2968 = vtanh.pop %v2898
    %v2969 = vtanh.pop %v2903
    %v2970 = vtanh.pop %v2908
    %v2971 = vtanh.pop %v2913
    %v2972 = vtanh.pop %v2918
    %v2973 = vtanh.pop %v2923
    %v2974 = vtanh.pop %v2928
    %v2975 = vtanh.pop %v2933
    %v2976 = vtanh.pop %v2938
    %v2977 = vtanh.pop %v2943
    %v2978 = vtanh.pop %v2948
    %v2979 = vtanh.pop %v2953
    %v2980 = vtanh.pop %v2958
    %v2981 = vtanh.pop %v2963
    %v2982 = vld [vmem:[%s8] sm:$0x1]
    %v2984 = vlaneseq
    %v2985 = vshrl.u32 %v2984, 7
    %v2986 = vsub.s32 0, %v2985
    %v2987 = vrot.slane %v2982, %v2986
    %v2989 = vmul.f32 %v2966, %v2987
    %v2990 = vmul.f32 %v2967, %v2987
    %v2991 = vmul.f32 %v2968, %v2987
    %v2992 = vmul.f32 %v2969, %v2987
    %v2993 = vmul.f32 %v2970, %v2987
    %v2994 = vmul.f32 %v2971, %v2987
    %v2995 = vmul.f32 %v2972, %v2987
    %v2996 = vmul.f32 %v2973, %v2987
    %v2997 = vmul.f32 %v2974, %v2987
    %v2998 = vmul.f32 %v2975, %v2987
    %v2999 = vmul.f32 %v2976, %v2987
    %v3000 = vmul.f32 %v2977, %v2987
    %v3001 = vmul.f32 %v2978, %v2987
    %v3002 = vmul.f32 %v2979, %v2987
    %v3003 = vmul.f32 %v2980, %v2987
    %v3004 = vmul.f32 %v2981, %v2987
    %v3005 = vsel %vm139, %v2989, 0.0
    %3006 = vadd.xlane.f32.xlu0 %v3005
    %v3007 = vpop.xlane.xlu0 %3006
    %v3008 = vsel %vm139, %v2990, 0.0
    %3009 = vadd.xlane.f32.xlu0 %v3008
    %v3010 = vpop.xlane.xlu0 %3009
    %v3011 = vsel %vm139, %v2991, 0.0
    %3012 = vadd.xlane.f32.xlu0 %v3011
    %v3013 = vpop.xlane.xlu0 %3012
    %v3014 = vsel %vm139, %v2992, 0.0
    %3015 = vadd.xlane.f32.xlu0 %v3014
    %v3016 = vpop.xlane.xlu0 %3015
    %v3017 = vsel %vm139, %v2993, 0.0
    %3018 = vadd.xlane.f32.xlu0 %v3017
    %v3019 = vpop.xlane.xlu0 %3018
    %v3020 = vsel %vm139, %v2994, 0.0
    %3021 = vadd.xlane.f32.xlu0 %v3020
    %v3022 = vpop.xlane.xlu0 %3021
    %v3023 = vsel %vm139, %v2995, 0.0
    %3024 = vadd.xlane.f32.xlu0 %v3023
    %v3025 = vpop.xlane.xlu0 %3024
    %v3026 = vsel %vm139, %v2996, 0.0
    %3027 = vadd.xlane.f32.xlu0 %v3026
    %v3028 = vpop.xlane.xlu0 %3027
    %v3029 = vsel %vm139, %v2997, 0.0
    %3030 = vadd.xlane.f32.xlu0 %v3029
    %v3031 = vpop.xlane.xlu0 %3030
    %v3032 = vsel %vm139, %v2998, 0.0
    %3033 = vadd.xlane.f32.xlu0 %v3032
    %v3034 = vpop.xlane.xlu0 %3033
    %v3035 = vsel %vm139, %v2999, 0.0
    %3036 = vadd.xlane.f32.xlu0 %v3035
    %v3037 = vpop.xlane.xlu0 %3036
    %v3038 = vsel %vm139, %v3000, 0.0
    %3039 = vadd.xlane.f32.xlu0 %v3038
    %v3040 = vpop.xlane.xlu0 %3039
    %v3041 = vsel %vm139, %v3001, 0.0
    %3042 = vadd.xlane.f32.xlu0 %v3041
    %v3043 = vpop.xlane.xlu0 %3042
    %v3044 = vsel %vm139, %v3002, 0.0
    %3045 = vadd.xlane.f32.xlu0 %v3044
    %v3046 = vpop.xlane.xlu0 %3045
    %v3047 = vsel %vm139, %v3003, 0.0
    %3048 = vadd.xlane.f32.xlu0 %v3047
    %v3049 = vpop.xlane.xlu0 %3048
    %v3050 = vsel %vm139, %v3004, 0.0
    %3051 = vadd.xlane.f32.xlu0 %v3050
    %v3052 = vpop.xlane.xlu0 %3051
    %v3053 = vmax.f32 %v3007, %v3019
    %v3054 = vmax.f32 %v3013, %v3025
    %v3055 = vmax.f32 %v3053, %v3031
    %v3056 = vmax.f32 %v3054, %v3037
    %v3057 = vmax.f32 %v3055, %v3043
    %v3058 = vmax.f32 %v3056, %v3049
    %v3059 = vmax.f32 %v3057, %v3058
    %v3060 = vmax.f32 %v3010, %v3022
    %v3061 = vmax.f32 %v3016, %v3028
    %v3062 = vmax.f32 %v3060, %v3034
    %v3063 = vmax.f32 %v3061, %v3040
    %v3064 = vmax.f32 %v3062, %v3046
    %v3065 = vmax.f32 %v3063, %v3052
    %v3066 = vmax.f32 %v3064, %v3065
    %v3067 = vsub.f32 %v3007, %v3059
    %v3068 = vsub.f32 %v3010, %v3066
    %v3069 = vsub.f32 %v3013, %v3059
    %v3070 = vsub.f32 %v3016, %v3066
    %v3071 = vsub.f32 %v3019, %v3059
    %v3072 = vsub.f32 %v3022, %v3066
    %v3073 = vsub.f32 %v3025, %v3059
    %v3074 = vsub.f32 %v3028, %v3066
    %v3075 = vsub.f32 %v3031, %v3059
    %v3076 = vsub.f32 %v3034, %v3066
    %v3077 = vsub.f32 %v3037, %v3059
    %v3078 = vsub.f32 %v3040, %v3066
    %v3079 = vsub.f32 %v3043, %v3059
    %v3080 = vsub.f32 %v3046, %v3066
    %v3081 = vsub.f32 %v3049, %v3059
    %v3082 = vsub.f32 %v3052, %v3066
    %v3083 = vmul.f32 %v3067, 1.442695
    %v3084 = vpow.pop %v3083
    %v3085 = vmul.f32 %v3068, 1.442695
    %v3086 = vpow.pop %v3085
    %v3087 = vmul.f32 %v3069, 1.442695
    %v3088 = vpow.pop %v3087
    %v3089 = vmul.f32 %v3070, 1.442695
    %v3090 = vpow.pop %v3089
    %v3091 = vmul.f32 %v3071, 1.442695
    %v3092 = vpow.pop %v3091
    %v3093 = vmul.f32 %v3072, 1.442695
    %v3094 = vpow.pop %v3093
    %v3095 = vmul.f32 %v3073, 1.442695
    %v3096 = vpow.pop %v3095
    %v3097 = vmul.f32 %v3074, 1.442695
    %v3098 = vpow.pop %v3097
    %v3099 = vmul.f32 %v3075, 1.442695
    %v3100 = vpow.pop %v3099
    %v3101 = vmul.f32 %v3076, 1.442695
    %v3102 = vpow.pop %v3101
    %v3103 = vmul.f32 %v3077, 1.442695
    %v3104 = vpow.pop %v3103
    %v3105 = vmul.f32 %v3078, 1.442695
    %v3106 = vpow.pop %v3105
    %v3107 = vmul.f32 %v3079, 1.442695
    %v3108 = vpow.pop %v3107
    %v3109 = vmul.f32 %v3080, 1.442695
    %v3110 = vpow.pop %v3109
    %v3111 = vmul.f32 %v3081, 1.442695
    %v3112 = vpow.pop %v3111
    %v3113 = vmul.f32 %v3082, 1.442695
    %v3114 = vpow.pop %v3113
    %v3115 = vadd.f32 %v3084, %v3088
    %v3116 = vadd.f32 %v3115, %v3092
    %v3117 = vadd.f32 %v3116, %v3096
    %v3118 = vadd.f32 %v3117, %v3100
    %v3119 = vadd.f32 %v3118, %v3104
    %v3120 = vadd.f32 %v3119, %v3108
    %v3121 = vadd.f32 %v3120, %v3112
    %v3122 = vadd.f32 %v3086, %v3090
    %v3123 = vadd.f32 %v3122, %v3094
    %v3124 = vadd.f32 %v3123, %v3098
    %v3125 = vadd.f32 %v3124, %v3102
    %v3126 = vadd.f32 %v3125, %v3106
    %v3127 = vadd.f32 %v3126, %v3110
    %v3128 = vadd.f32 %v3127, %v3114
    %v3129 = vrcp.pop %v3121
    %v3130 = vrcp.pop %v3128
    %v3131 = vmul.f32 %v3084, %v3129
    %v3132 = vmul.f32 %v3086, %v3130
    %v3133 = vmul.f32 %v3088, %v3129
    %v3134 = vmul.f32 %v3090, %v3130
    %v3135 = vmul.f32 %v3092, %v3129
    %v3136 = vmul.f32 %v3094, %v3130
    %v3137 = vmul.f32 %v3096, %v3129
    %v3138 = vmul.f32 %v3098, %v3130
    %v3139 = vmul.f32 %v3100, %v3129
    %v3140 = vmul.f32 %v3102, %v3130
    %v3141 = vmul.f32 %v3104, %v3129
    %v3142 = vmul.f32 %v3106, %v3130
    %v3143 = vmul.f32 %v3108, %v3129
    %v3144 = vmul.f32 %v3110, %v3130
    %v3145 = vmul.f32 %v3112, %v3129
    %v3146 = vmul.f32 %v3114, %v3130
    %v3147 = vmul.f32 %v2746, %v3131
    %v3148 = vmul.f32 %v2747, %v3132
    %v3149 = vmul.f32 %v2748, %v3133
    %v3150 = vmul.f32 %v2749, %v3134
    %v3151 = vmul.f32 %v2750, %v3135
    %v3152 = vmul.f32 %v2751, %v3136
    %v3153 = vmul.f32 %v2752, %v3137
    %v3154 = vmul.f32 %v2753, %v3138
    %v3155 = vmul.f32 %v2754, %v3139
    %v3156 = vmul.f32 %v2755, %v3140
    %v3157 = vmul.f32 %v2756, %v3141
    %v3158 = vmul.f32 %v2757, %v3142
    %v3159 = vmul.f32 %v2758, %v3143
    %v3160 = vmul.f32 %v2759, %v3144
    %v3161 = vmul.f32 %v2760, %v3145
    %v3162 = vmul.f32 %v2761, %v3146
    %v3163 = vsel %vm139, %v3147, 0.0
    %v3164 = vsel %vm139, %v3149, 0.0
    %v3165 = vadd.f32 %v3163, %v3164
    %v3166 = vsel %vm139, %v3151, 0.0
    %v3167 = vadd.f32 %v3165, %v3166
    %v3168 = vsel %vm139, %v3153, 0.0
    %v3169 = vadd.f32 %v3167, %v3168
    %v3170 = vsel %vm139, %v3155, 0.0
    %v3171 = vadd.f32 %v3169, %v3170
    %v3172 = vsel %vm139, %v3157, 0.0
    %v3173 = vadd.f32 %v3171, %v3172
    %v3174 = vsel %vm139, %v3159, 0.0
    %v3175 = vadd.f32 %v3173, %v3174
    %v3176 = vsel %vm139, %v3161, 0.0
    %v3177 = vadd.f32 %v3175, %v3176
    %v3178 = vsel %vm139, %v3148, 0.0
    %v3179 = vsel %vm139, %v3150, 0.0
    %v3180 = vadd.f32 %v3178, %v3179
    %v3181 = vsel %vm139, %v3152, 0.0
    %v3182 = vadd.f32 %v3180, %v3181
    %v3183 = vsel %vm139, %v3154, 0.0
    %v3184 = vadd.f32 %v3182, %v3183
    %v3185 = vsel %vm139, %v3156, 0.0
    %v3186 = vadd.f32 %v3184, %v3185
    %v3187 = vsel %vm139, %v3158, 0.0
    %v3188 = vadd.f32 %v3186, %v3187
    %v3189 = vsel %vm139, %v3160, 0.0
    %v3190 = vadd.f32 %v3188, %v3189
    %v3191 = vsel %vm139, %v3162, 0.0
    %v3192 = vadd.f32 %v3190, %v3191
    %v3193 = vld [vmem:[%s9] sm:$0xff]
    %v3194 = vld [vmem:[%s9 + $0x8] sm:$0xff]
    %v3195 = vld [vmem:[%s9 + $0x10] sm:$0xff]
    %v3196 = vld [vmem:[%s9 + $0x18] sm:$0xff]
    %v3197 = vld [vmem:[%s10] sm:$0x1]
    %v3199 = vlaneseq
    %v3200 = vshrl.u32 %v3199, 7
    %v3201 = vsub.s32 0, %v3200
    %v3202 = vrot.slane %v3197, %v3201
    %v3205 = vsel %vm139, %v3177, 0
    %v3208 = vsel %vm139, %v3192, 0
    %3210 = vmatprep.subr.mxu0 0.0
    %3211 = vmatpush1.msra.mxu0 %v3193
    %3212 = vmatprep.subr.mxu0 0.0
    %3213 = vmatpush1.msra.mxu0 %v3194
    %3214 = vmatprep.subr.mxu0 0.0
    %3215 = vmatpush1.msra.mxu0 %v3195
    %3216 = vmatprep.subr.mxu0 0.0
    %3217 = vmatpush1.msra.mxu0 %v3196
    %3218 = vmatprep.subr.mxu0 0.0
    %3219 = vmatpush1.msra.mxu0 0.0
    %3220 = vmatprep.subr.mxu0 0.0
    %3221 = vmatpush1.msra.mxu0 0.0
    %3222 = vmatprep.subr.mxu0 0.0
    %3223 = vmatpush1.msra.mxu0 0.0
    %3224 = vmatprep.subr.mxu0 0.0
    %3225 = vmatpush1.msra.mxu0 0.0
    %3226 = vmatprep.subr.mxu0 0.0
    %3227 = vmatpush1.msra.mxu0 0.0
    %3228 = vmatprep.subr.mxu0 0.0
    %3229 = vmatpush1.msra.mxu0 0.0
    %3230 = vmatprep.subr.mxu0 0.0
    %3231 = vmatpush1.msra.mxu0 0.0
    %3232 = vmatprep.subr.mxu0 0.0
    %3233 = vmatpush1.msra.mxu0 0.0
    %3234 = vmatprep.subr.mxu0 0.0
    %3235 = vmatpush1.msra.mxu0 0.0
    %3236 = vmatprep.subr.mxu0 0.0
    %3237 = vmatpush1.msra.mxu0 0.0
    %3238 = vmatprep.subr.mxu0 0.0
    %3239 = vmatpush1.msra.mxu0 0.0
    %3240 = vmatprep.subr.mxu0 0.0
    %3241 = vmatpush1.msra.mxu0 0.0
    %3242 = vmatprep.subr.mxu0 0.0
    %3243 = vmatpush1.msra.mxu0 0.0
    %3244 = vmatprep.subr.mxu0 0.0
    %3245 = vmatpush1.msra.mxu0 0.0
    %3246 = vmatprep.subr.mxu0 0.0
    %3247 = vmatpush1.msra.mxu0 0.0
    %3248 = vmatprep.subr.mxu0 0.0
    %3249 = vmatpush1.msra.mxu0 0.0
    %3250 = vmatprep.subr.mxu0 0.0
    %3251 = vmatpush1.msra.mxu0 0.0
    %3252 = vmatprep.subr.mxu0 0.0
    %3253 = vmatpush1.msra.mxu0 0.0
    %3254 = vmatprep.subr.mxu0 0.0
    %3255 = vmatpush1.msra.mxu0 0.0
    %3256 = vmatprep.subr.mxu0 0.0
    %3257 = vmatpush1.msra.mxu0 0.0
    %3258 = vmatprep.subr.mxu0 0.0
    %3259 = vmatpush1.msra.mxu0 0.0
    %3260 = vmatprep.subr.mxu0 0.0
    %3261 = vmatpush1.msra.mxu0 0.0
    %3262 = vmatprep.subr.mxu0 0.0
    %3263 = vmatpush1.msra.mxu0 0.0
    %3264 = vmatprep.subr.mxu0 0.0
    %3265 = vmatpush1.msra.mxu0 0.0
    %3266 = vmatprep.subr.mxu0 0.0
    %3267 = vmatpush1.msra.mxu0 0.0
    %3268 = vmatprep.subr.mxu0 0.0
    %3269 = vmatpush1.msra.mxu0 0.0
    %3270 = vmatprep.subr.mxu0 0.0
    %3271 = vmatpush1.msra.mxu0 0.0
    %3272 = vmatprep.subr.mxu0 0.0
    %3273 = vmatpush1.msra.mxu0 0.0
    %3274 = vmatprep.mubr.f32.mxu0 0.0
    %3275 = vmatmul.mubr.f32.gmra.mrb[0].mxu0 %v3205
    %v3276 = vpop.f32.mrb[0].mxu0
    %v3277 = vadd.f32 %v3202, %v3276
    %v3278 = vpop.f32.mrb[0].mxu0
    %3279 = vmatprep.mubr.f32.mxu0 0.0
    %3280 = vmatmul.mubr.f32.gmra.mrb[0].mxu0 %v3208
    %v3281 = vpop.f32.mrb[0].mxu0
    %v3282 = vadd.f32 %v3202, %v3281
    %v3283 = vpop.f32.mrb[0].mxu0
    %3284 = vdwg.mxu0
    %vm3285 = vcmask 39936
    %3286 = vst.msk [vmem:[%s15] sm:$0xff] %vm3285, %v3277
    %3287 = vst.msk [vmem:[%s15 + $0x8] sm:$0xff] %vm3285, %v3282
    %v3288 = vld [vmem:[%s11] sm:$0x1f]
    %v3289 = vld [vmem:[%s12] sm:$0x1]
    %v3291 = vlaneseq
    %v3292 = vshrl.u32 %v3291, 7
    %v3293 = vsub.s32 0, %v3292
    %v3294 = vrot.slane %v3289, %v3293
    %v3297 = vsel %vm3285, %v3277, 0
    %v3300 = vsel %vm3285, %v3282, 0
    %vm3302 = vcmask 1044480
    %v3304 = vsel %vm3302, %v3288, 0
    %3306 = vmatprep.subr.mxu0 0.0
    %3307 = vmatpush1.msra.mxu0 %v3304
    %3308 = vmatprep.subr.mxu0 0.0
    %3309 = vmatpush1.msra.mxu0 0.0
    %3310 = vmatprep.subr.mxu0 0.0
    %3311 = vmatpush1.msra.mxu0 0.0
    %3312 = vmatprep.subr.mxu0 0.0
    %3313 = vmatpush1.msra.mxu0 0.0
    %3314 = vmatprep.subr.mxu0 0.0
    %3315 = vmatpush1.msra.mxu0 0.0
    %3316 = vmatprep.subr.mxu0 0.0
    %3317 = vmatpush1.msra.mxu0 0.0
    %3318 = vmatprep.subr.mxu0 0.0
    %3319 = vmatpush1.msra.mxu0 0.0
    %3320 = vmatprep.subr.mxu0 0.0
    %3321 = vmatpush1.msra.mxu0 0.0
    %3322 = vmatprep.subr.mxu0 0.0
    %3323 = vmatpush1.msra.mxu0 0.0
    %3324 = vmatprep.subr.mxu0 0.0
    %3325 = vmatpush1.msra.mxu0 0.0
    %3326 = vmatprep.subr.mxu0 0.0
    %3327 = vmatpush1.msra.mxu0 0.0
    %3328 = vmatprep.subr.mxu0 0.0
    %3329 = vmatpush1.msra.mxu0 0.0
    %3330 = vmatprep.subr.mxu0 0.0
    %3331 = vmatpush1.msra.mxu0 0.0
    %3332 = vmatprep.subr.mxu0 0.0
    %3333 = vmatpush1.msra.mxu0 0.0
    %3334 = vmatprep.subr.mxu0 0.0
    %3335 = vmatpush1.msra.mxu0 0.0
    %3336 = vmatprep.subr.mxu0 0.0
    %3337 = vmatpush1.msra.mxu0 0.0
    %3338 = vmatprep.subr.mxu0 0.0
    %3339 = vmatpush1.msra.mxu0 0.0
    %3340 = vmatprep.subr.mxu0 0.0
    %3341 = vmatpush1.msra.mxu0 0.0
    %3342 = vmatprep.subr.mxu0 0.0
    %3343 = vmatpush1.msra.mxu0 0.0
    %3344 = vmatprep.subr.mxu0 0.0
    %3345 = vmatpush1.msra.mxu0 0.0
    %3346 = vmatprep.subr.mxu0 0.0
    %3347 = vmatpush1.msra.mxu0 0.0
    %3348 = vmatprep.subr.mxu0 0.0
    %3349 = vmatpush1.msra.mxu0 0.0
    %3350 = vmatprep.subr.mxu0 0.0
    %3351 = vmatpush1.msra.mxu0 0.0
    %3352 = vmatprep.subr.mxu0 0.0
    %3353 = vmatpush1.msra.mxu0 0.0
    %3354 = vmatprep.subr.mxu0 0.0
    %3355 = vmatpush1.msra.mxu0 0.0
    %3356 = vmatprep.subr.mxu0 0.0
    %3357 = vmatpush1.msra.mxu0 0.0
    %3358 = vmatprep.subr.mxu0 0.0
    %3359 = vmatpush1.msra.mxu0 0.0
    %3360 = vmatprep.subr.mxu0 0.0
    %3361 = vmatpush1.msra.mxu0 0.0
    %3362 = vmatprep.subr.mxu0 0.0
    %3363 = vmatpush1.msra.mxu0 0.0
    %3364 = vmatprep.subr.mxu0 0.0
    %3365 = vmatpush1.msra.mxu0 0.0
    %3366 = vmatprep.subr.mxu0 0.0
    %3367 = vmatpush1.msra.mxu0 0.0
    %3368 = vmatprep.subr.mxu0 0.0
    %3369 = vmatpush1.msra.mxu0 0.0
    %3370 = vmatprep.mubr.f32.mxu0 0.0
    %3371 = vmatmul.mubr.f32.gmra.mrb[0].mxu0 %v3297
    %v3372 = vpop.f32.mrb[0].mxu0
    %v3373 = vadd.f32 %v3294, %v3372
    %v3374 = vpop.f32.mrb[0].mxu0
    %3375 = vmatprep.mubr.f32.mxu0 0.0
    %3376 = vmatmul.mubr.f32.gmra.mrb[0].mxu0 %v3300
    %v3377 = vpop.f32.mrb[0].mxu0
    %v3378 = vadd.f32 %v3294, %v3377
    %v3379 = vpop.f32.mrb[0].mxu0
    %3380 = vdwg.mxu0
    %vm3381 = vcmask 23552
    %v3382 = vsel %vm3381, %v3373, -inf
    %3383 = vmax.xlane.f32.xlu0 %v3382
    %v3384 = vpop.xlane.xlu0 %3383
    %v3385 = vsel %vm3381, %v3378, -inf
    %3386 = vmax.xlane.f32.xlu0 %v3385
    %v3387 = vpop.xlane.xlu0 %3386
    %v3388 = vsub.f32 %v3373, %v3384
    %v3389 = vsub.f32 %v3378, %v3387
    %v3390 = vmul.f32 %v3388, 1.442695
    %v3391 = vpow.pop %v3390
    %v3392 = vmul.f32 %v3389, 1.442695
    %v3393 = vpow.pop %v3392
    %v3394 = vsel %vm3381, %v3391, 0.0
    %3395 = vadd.xlane.f32.xlu0 %v3394
    %v3396 = vpop.xlane.xlu0 %3395
    %v3397 = vsel %vm3381, %v3393, 0.0
    %3398 = vadd.xlane.f32.xlu0 %v3397
    %v3399 = vpop.xlane.xlu0 %3398
    %v3400 = vrcp.pop %v3396
    %v3401 = vrcp.pop %v3399
    %v3402 = vmul.f32 %v3391, %v3400
    %v3403 = vmul.f32 %v3393, %v3401
    %3404 = vst.msk [vmem:[%s13] sm:$0xff] %vm3381, %v3402
    %3405 = vst.msk [vmem:[%s13 + $0x8] sm:$0xff] %vm3381, %v3403
    // Predicated region
    $region74: #{tpu_custom_call.1} parent=1 // pred_check
      _
    $region75: #{tpu_custom_call.1} parent=1 // pred_check_branch
      %3407 = sbr.rel (0) target = $region77
    $region76: #{tpu_custom_call.1} parent=1 // pred_region
      _
    $region77: #{tpu_custom_call.1} parent=1 // pred_fallthru
      _
    // Predicated region
    $region78: #{tpu_custom_call.1} parent=1 // pred_check
      _
    $region79: #{tpu_custom_call.1} parent=1 // pred_check_branch
      %3409 = sbr.rel (0) target = $region81
    $region80: #{tpu_custom_call.1} parent=1 // pred_region
      %s3411 = ssub.s32 512, 512
      %3412 = vsyncadd [#allocation6], %s3411
      %s3413 = sshll.u32 [#allocation13], 4
      %s3414 = int_to_ptr.vmem [resolvable:$true] %s3413
      %3419 = dma.vmem_to_hbm [thread:$0]  %s3414, 512, %s14, [#allocation6], 128, 128, 8
    $region81: #{tpu_custom_call.1} parent=1 // pred_fallthru
      _
    // Predicated region
    $region82: #{tpu_custom_call.1} parent=1 // pred_check
      _
    $region83: #{tpu_custom_call.1} parent=1 // pred_check_branch
      %3421 = sbr.rel (0) target = $region85
    $region84: #{tpu_custom_call.1} parent=1 // pred_region
      _
    $region85: #{tpu_custom_call.1} parent=1 // pred_fallthru
      _
    // Predicated region
    $region86: #{tpu_custom_call.1} parent=1 // pred_check
      _
    $region87: #{tpu_custom_call.1} parent=1 // pred_check_branch
      %3423 = sbr.rel (0) target = $region89
    $region88: #{tpu_custom_call.1} parent=1 // pred_region
      _
    $region89: #{tpu_custom_call.1} parent=1 // pred_fallthru
      _
    // Predicated region
    $region90: #{tpu_custom_call.1} parent=1 // pred_check
      _
    $region91: #{tpu_custom_call.1} parent=1 // pred_check_branch
      %3425 = sbr.rel (0) target = $region93
    $region92: #{tpu_custom_call.1} parent=1 // pred_region
      %3426 = dma.done [#allocation6], 512
    $region93: #{tpu_custom_call.1} parent=1 // pred_fallthru
      _
    // Predicated region
    $region94: #{tpu_custom_call.1} parent=1 // pred_check
      _
    $region95: #{tpu_custom_call.1} parent=1 // pred_check_branch
      %3428 = sbr.rel (0) target = $region97
    $region96: #{tpu_custom_call.1} parent=1 // pred_region
      _
    $region97: #{tpu_custom_call.1} parent=1 // pred_fallthru
      _
    %3429 = vsyncpa [#allocation5], 1
    %3430 = vsyncpa [#allocation8], 1
    %3431 = vsyncpa [#allocation11], 1
    %3432 = vsyncpa [#allocation6], 1

</llo_original>
